<compile_context>
chip_gen: v7x
topology: tpu7x:2x2x1
jax: 0.10.0
libtpu: 0.0.40
codegen_flags: <defaults>
</compile_context>

<pallas_src>
import functools

import jax
import jax.numpy as jnp
from jax.experimental import pallas as pl
from jax.experimental.pallas import tpu as pltpu


def _round_up(x, m):
    return (x + m - 1) // m * m


def _default_vmem_limit_bytes():
    """Explicit scoped-VMEM limit: ~100 MiB on 128-MiB chips (v5e/v6e), ~48 MiB on 64-MiB v7x."""
    cap = None
    try:
        info = pltpu.get_tpu_info()
        cap = int(getattr(info, "vmem_capacity_bytes", 0)) or None
    except Exception:
        cap = None
    if cap is None:
        # Conservative fallback that is safe on every generation (incl. v7x 64 MiB).
        cap = 64 * 1024 * 1024
    return int(min(cap - 16 * 1024 * 1024, 100 * 1024 * 1024))


def _vmem_footprint_bytes(bt, bi, H, act_bytes, w_bytes):
    """Rough per-step VMEM footprint (double-buffered blocks + scratch + temps)."""
    x_buf = 2 * bt * H * act_bytes
    wgu_buf = 2 * H * (2 * bi) * w_bytes
    wdt_buf = 2 * bi * H * w_bytes
    out_buf = 2 * bt * H * act_bytes
    acc = bt * H * 4
    temps = bt * (2 * bi) * 4 + bt * H * 4   # gu + down-proj partial (f32)
    return x_buf + wgu_buf + wdt_buf + out_buf + acc + temps


def _select_token_tile(T, block_t, H, bi, act_bytes, w_bytes, vmem_budget):
    """Pick a sublane-aligned, MXU-friendly token tile minimizing pad waste."""
    cands = [c for c in (128, 256, 384, 512, 640, 768, 1024) if c <= block_t]
    if not cands:
        cands = [_round_up(min(block_t, max(T, 1)), 16)]
    elif T < 128:
        # decode / tiny batch: a small sublane-aligned tile avoids wasted MXU rows.
        cands = [_round_up(max(T, 1), 16)] + cands
    fitting = [c for c in cands
               if _vmem_footprint_bytes(c, bi, H, act_bytes, w_bytes) <= vmem_budget]
    cands = fitting if fitting else [min(cands)]
    # minimize padded length; tie-break toward the larger tile (fewer steps).
    return min(cands, key=lambda c: (_round_up(T, c), -c))


def _qwen2_mlp_kernel(x_ref, wgu_ref, wdt_ref, o_ref, acc_ref, *, n_i_blocks):
    """One grid step: one (token block, intermediate block) pair.

    x_ref   : [bt, H]          token block
    wgu_ref : [H, 2*bi]        fused [gate | up] columns for this block (pre-blocked)
    wdt_ref : [bi, H]          down_proj^T rows for this block
    o_ref   : [bt, H] or [1, bt, H]   output block (written on the last step)
    acc_ref : [bt, H] float32  accumulator scratch (persists across reduction axis)
    """
    ii = pl.program_id(1)
    bi = wdt_ref.shape[0]

    # Fused gate|up projection for this intermediate block: [bt, 2*bi], f32 acc on MXU.
    gu = jnp.dot(x_ref[...], wgu_ref[...], preferred_element_type=jnp.float32)
    gate = gu[:, :bi]
    up = gu[:, bi:]

    # SiLU(gate) * up   (Qwen2 hidden_act == "silu")
    h = (gate * jax.nn.sigmoid(gate)) * up

    # Partial down projection: [bt, bi] @ [bi, H] -> [bt, H] in f32.
    partial = jnp.dot(h.astype(wdt_ref.dtype), wdt_ref[...],
                      preferred_element_type=jnp.float32)

    if n_i_blocks == 1:
        o_ref[...] = partial.reshape(o_ref.shape).astype(o_ref.dtype)
    else:
        @pl.when(ii == 0)
        def _():
            # Write-through on the first step: no zero-fill pass over the accumulator.
            acc_ref[...] = partial

        @pl.when(jnp.logical_and(ii > 0, ii < n_i_blocks - 1))
        def _():
            acc_ref[...] += partial

        @pl.when(ii == n_i_blocks - 1)
        def _():
            # Fuse the final add with the output cast (no extra acc store+reload).
            o_ref[...] = (acc_ref[...] + partial).reshape(o_ref.shape).astype(o_ref.dtype)


def prepare_qwen2_mlp_weights(w_gate, w_up, w_down, block_i=512):
    """One-time (load-time) repack of PyTorch-layout weights into kernel layout.

    w_gate, w_up : [I, H]  (PyTorch [out_features, in_features])
    w_down       : [H, I]

    Returns:
      w_gu_blk : [n_i, H, 2*block_i]  block n = [gate rows n*bi.. | up rows n*bi..],
                 contiguous per intermediate block (single sequential DMA per step).
      w_dn_t   : [I, H]               down_proj transposed (contiguous row blocks).
    """
    I, H = w_gate.shape
    assert w_up.shape == (I, H)
    assert w_down.shape == (H, I)
    # TODO(synk): ragged intermediate blocks (I % block_i != 0) not supported.
    assert I % block_i == 0, "intermediate size must be divisible by block_i"

    n_i = I // block_i
    gate_blk = jnp.transpose(w_gate.reshape(n_i, block_i, H), (0, 2, 1))  # [n_i, H, bi]
    up_blk = jnp.transpose(w_up.reshape(n_i, block_i, H), (0, 2, 1))      # [n_i, H, bi]
    w_gu_blk = jnp.concatenate([gate_blk, up_blk], axis=2)                 # [n_i, H, 2*bi]
    w_dn_t = jnp.transpose(w_down)                                         # [I, H]
    return w_gu_blk, w_dn_t


@functools.partial(
    jax.jit, static_argnames=("block_t", "vmem_limit_bytes", "decode_core_split")
)
def qwen2_mlp(hidden_states, w_gu_blk, w_dn_t, *, block_t=512,
              vmem_limit_bytes=None, decode_core_split=False):
    """hidden_states: [T, H]; w_gu_blk: [n_i, H, 2*bi] (pre-blocked); w_dn_t: [I, H]."""
    T, H = hidden_states.shape
    n_i, H_w, two_bi = w_gu_blk.shape
    assert H_w == H
    bi = two_bi // 2
    I = n_i * bi
    assert w_dn_t.shape == (I, H)

    if vmem_limit_bytes is None:
        vmem_limit_bytes = _default_vmem_limit_bytes()
    vmem_limit_bytes = int(vmem_limit_bytes)

    act_bytes = jnp.dtype(hidden_states.dtype).itemsize
    w_bytes = jnp.dtype(w_gu_blk.dtype).itemsize
    bt = _select_token_tile(T, block_t, H, bi, act_bytes, w_bytes,
                            int(0.9 * vmem_limit_bytes))
    t_pad = _round_up(T, bt)
    x = hidden_states
    if t_pad != T:
        x = jnp.pad(x, ((0, t_pad - T), (0, 0)))
    n_t = t_pad // bt

    compiler_params = pltpu.CompilerParams(
        dimension_semantics=("parallel", "arbitrary"),
        vmem_limit_bytes=vmem_limit_bytes,
    )

    use_split = bool(decode_core_split) and n_t == 1 and n_i >= 2 and n_i % 2 == 0

    if not use_split:
        kernel = functools.partial(_qwen2_mlp_kernel, n_i_blocks=n_i)
        out = pl.pallas_call(
            kernel,
            out_shape=jax.ShapeDtypeStruct((t_pad, H), hidden_states.dtype),
            grid_spec=pltpu.PrefetchScalarGridSpec(
                num_scalar_prefetch=0,
                grid=(n_t, n_i),
                in_specs=[
                    pl.BlockSpec((bt, H), lambda t, i: (t, 0)),                     # x tokens
                    pl.BlockSpec((pl.Squeezed(), H, two_bi), lambda t, i: (i, 0, 0)),  # gate|up blk
                    pl.BlockSpec((bi, H), lambda t, i: (i, 0)),                     # down^T rows
                ],
                out_specs=pl.BlockSpec((bt, H), lambda t, i: (t, 0)),
                scratch_shapes=[pltpu.VMEM((bt, H), jnp.float32)],
            ),
            compiler_params=compiler_params,
        )(x, w_gu_blk, w_dn_t)
    else:
        # Decode / single-token-tile: split the reduction over I across a size-2
        # "parallel" leading axis so both v7x TensorCores do useful work.
        half = n_i // 2
        kernel = functools.partial(_qwen2_mlp_kernel, n_i_blocks=half)
        partials = pl.pallas_call(
            kernel,
            out_shape=jax.ShapeDtypeStruct((2, t_pad, H), jnp.float32),
            grid_spec=pltpu.PrefetchScalarGridSpec(
                num_scalar_prefetch=0,
                grid=(2, half),
                in_specs=[
                    pl.BlockSpec((bt, H), lambda c, i: (0, 0)),
                    pl.BlockSpec((pl.Squeezed(), H, two_bi),
                                 lambda c, i: (c * half + i, 0, 0)),
                    pl.BlockSpec((bi, H), lambda c, i: (c * half + i, 0)),
                ],
                out_specs=pl.BlockSpec((1, bt, H), lambda c, i: (c, 0, 0)),
                scratch_shapes=[pltpu.VMEM((bt, H), jnp.float32)],
            ),
            compiler_params=compiler_params,
        )(x, w_gu_blk, w_dn_t)
        out = (partials[0] + partials[1]).astype(hidden_states.dtype)

    if t_pad != T:
        out = out[:T]
    return out


def qwen2_mlp_reference(x, w_gate, w_up, w_down):
    gate = x @ w_gate.T
    up = x @ w_up.T
    return (jax.nn.silu(gate) * up) @ w_down.T


if __name__ == "__main__":
    # Small Qwen2-like shapes (intermediate > hidden). T values exercise
    # padding, multiple token tiles, and the decode core-split path.
    H, I = 256, 1024
    block_i = 512

    key = jax.random.PRNGKey(0)
    k_x, k_g, k_u, k_d = jax.random.split(key, 4)

    dtype = jnp.bfloat16
    w_gate = (jax.random.normal(k_g, (I, H), dtype=jnp.float32) * 0.05).astype(dtype)
    w_up = (jax.random.normal(k_u, (I, H), dtype=jnp.float32) * 0.05).astype(dtype)
    w_down = (jax.random.normal(k_d, (H, I), dtype=jnp.float32) * 0.05).astype(dtype)

    # One-time weight repack (load time) — kept off the per-call jit path.
    w_gu_blk, w_dn_t = prepare_qwen2_mlp_weights(w_gate, w_up, w_down, block_i)
    w_gu_blk = jax.block_until_ready(w_gu_blk)
    w_dn_t = jax.block_until_ready(w_dn_t)

    w_gate_f = w_gate.astype(jnp.float32)
    w_up_f = w_up.astype(jnp.float32)
    w_down_f = w_down.astype(jnp.float32)

    def check(T, **kwargs):
        x = jax.random.normal(jax.random.fold_in(k_x, T), (T, H),
                              dtype=jnp.float32).astype(dtype)
        out = jax.block_until_ready(qwen2_mlp(x, w_gu_blk, w_dn_t, **kwargs))
        ref = qwen2_mlp_reference(x.astype(jnp.float32), w_gate_f, w_up_f, w_down_f)
        assert out.shape == (T, H)
        err = jnp.max(jnp.abs(out.astype(jnp.float32) - ref))
        assert jnp.allclose(out.astype(jnp.float32), ref, atol=5e-2, rtol=5e-2), (
            f"T={T} kwargs={kwargs}: max abs err {err}")

    # Prefill-style: padding + f32-accumulated reduction over 2 intermediate blocks.
    check(200)
    # Multi token-tile prefill: exercises the "parallel" token axis.
    check(300, block_t=128)
    # Decode-style: single token tile with the 2-way reduction split
    # (uses both TensorCores on v7x; correct everywhere).
    check(4, decode_core_split=True)

    print("KERNEL_OK")
</pallas_src>

<mosaic_0001>
module attributes {stable_mosaic.version = 11 : i64} {
  func.func @_qwen2_mlp_kernel(%arg0: i32, %arg1: i32, %arg2: memref<256x256xbf16, #tpu.memory_space<vmem>>, %arg3: memref<1x256x1024xbf16, #tpu.memory_space<vmem>>, %arg4: memref<512x256xbf16, #tpu.memory_space<vmem>>, %arg5: memref<256x256xbf16, #tpu.memory_space<vmem>>, %arg6: memref<256x256xf32, #tpu.memory_space<vmem>>) attributes {dimension_semantics = [#tpu.dimension_semantics<parallel>, #tpu.dimension_semantics<arbitrary>], iteration_bounds = array<i64: 1, 2>, scalar_prefetch = 0 : i64, scratch_operands = 1 : i64, tpu.core_type = #tpu.core_type<tc>, window_params = [{transform_indices = @transform_0, window_bounds = array<i64: 256, 256>}, {transform_indices = @transform_1, window_bounds = array<i64: 1, 256, 1024>}, {transform_indices = @transform_2, window_bounds = array<i64: 512, 256>}, {transform_indices = @transform_3, window_bounds = array<i64: 256, 256>}]} {
    %c0 = arith.constant 0 : index
    %c0_0 = arith.constant 0 : index
    %0 = vector.load %arg2[%c0, %c0_0] : memref<256x256xbf16, #tpu.memory_space<vmem>>, vector<256x256xbf16>
    %c0_1 = arith.constant 0 : index
    %c0_2 = arith.constant 0 : index
    %c0_3 = arith.constant 0 : index
    %1 = vector.load %arg3[%c0_1, %c0_2, %c0_3] : memref<1x256x1024xbf16, #tpu.memory_space<vmem>>, vector<1x256x1024xbf16>
    %2 = vector.shape_cast %1 : vector<1x256x1024xbf16> to vector<256x1024xbf16>
    %cst = arith.constant dense<0.000000e+00> : vector<256x1024xf32>
    %3 = tpu.matmul %0, %2, %cst {dimension_numbers = #tpu.dot_dimension_numbers<[1], [0], [0], [1], [0, 0, 1, 1], [], []>} : vector<256x256xbf16>, vector<256x1024xbf16>, vector<256x1024xf32> -> vector<256x1024xf32>
    %4 = vector.extract_strided_slice %3 {offsets = [0, 0], sizes = [256, 512], strides = [1, 1]} : vector<256x1024xf32> to vector<256x512xf32>
    %5 = vector.extract_strided_slice %3 {offsets = [0, 512], sizes = [256, 512], strides = [1, 1]} : vector<256x1024xf32> to vector<256x512xf32>
    %6 = arith.negf %4 : vector<256x512xf32>
    %7 = math.exp %6 : vector<256x512xf32>
    %cst_4 = arith.constant 1.000000e+00 : f32
    %8 = vector.broadcast %cst_4 : f32 to vector<256x512xf32>
    %9 = arith.addf %8, %7 : vector<256x512xf32>
    %10 = arith.divf %8, %9 : vector<256x512xf32>
    %11 = arith.mulf %4, %10 : vector<256x512xf32>
    %12 = arith.mulf %11, %5 : vector<256x512xf32>
    %13 = arith.truncf %12 : vector<256x512xf32> to vector<256x512xbf16>
    %c0_5 = arith.constant 0 : index
    %c0_6 = arith.constant 0 : index
    %14 = vector.load %arg4[%c0_5, %c0_6] : memref<512x256xbf16, #tpu.memory_space<vmem>>, vector<512x256xbf16>
    %cst_7 = arith.constant dense<0.000000e+00> : vector<256x256xf32>
    %15 = tpu.matmul %13, %14, %cst_7 {dimension_numbers = #tpu.dot_dimension_numbers<[1], [0], [0], [1], [0, 0, 1, 1], [], []>} : vector<256x512xbf16>, vector<512x256xbf16>, vector<256x256xf32> -> vector<256x256xf32>
    %c0_i32 = arith.constant 0 : i32
    %16 = arith.cmpi eq, %arg1, %c0_i32 : i32
    %17 = arith.extui %16 : i1 to i32
    %c0_i32_8 = arith.constant 0 : i32
    %18 = arith.cmpi ne, %17, %c0_i32_8 : i32
    scf.if %18 {
      %c0_13 = arith.constant 0 : index
      %c0_14 = arith.constant 0 : index
      %27 = vector.load %arg6[%c0_13, %c0_14] : memref<256x256xf32, #tpu.memory_space<vmem>>, vector<256x256xf32>
      tpu.vector_store %arg6[%c0_13, %c0_14], %15 {strides = array<i32>} : memref<256x256xf32, #tpu.memory_space<vmem>>, vector<256x256xf32>,
    } else {
    }
    %c0_i32_9 = arith.constant 0 : i32
    %19 = arith.cmpi sgt, %arg1, %c0_i32_9 : i32
    %c1_i32 = arith.constant 1 : i32
    %20 = arith.cmpi slt, %arg1, %c1_i32 : i32
    %21 = arith.andi %19, %20 : i1
    %22 = arith.extui %21 : i1 to i32
    %c0_i32_10 = arith.constant 0 : i32
    %23 = arith.cmpi ne, %22, %c0_i32_10 : i32
    scf.if %23 {
      %c0_13 = arith.constant 0 : index
      %c0_14 = arith.constant 0 : index
      %27 = vector.load %arg6[%c0_13, %c0_14] : memref<256x256xf32, #tpu.memory_space<vmem>>, vector<256x256xf32>
      %28 = arith.addf %27, %15 : vector<256x256xf32>
      %c0_15 = arith.constant 0 : index
      %c0_16 = arith.constant 0 : index
      %29 = vector.load %arg6[%c0_15, %c0_16] : memref<256x256xf32, #tpu.memory_space<vmem>>, vector<256x256xf32>
      tpu.vector_store %arg6[%c0_15, %c0_16], %28 {strides = array<i32>} : memref<256x256xf32, #tpu.memory_space<vmem>>, vector<256x256xf32>,
    } else {
    }
    %c1_i32_11 = arith.constant 1 : i32
    %24 = arith.cmpi eq, %arg1, %c1_i32_11 : i32
    %25 = arith.extui %24 : i1 to i32
    %c0_i32_12 = arith.constant 0 : i32
    %26 = arith.cmpi ne, %25, %c0_i32_12 : i32
    scf.if %26 {
      %c0_13 = arith.constant 0 : index
      %c0_14 = arith.constant 0 : index
      %27 = vector.load %arg6[%c0_13, %c0_14] : memref<256x256xf32, #tpu.memory_space<vmem>>, vector<256x256xf32>
      %28 = arith.addf %27, %15 : vector<256x256xf32>
      %29 = arith.truncf %28 : vector<256x256xf32> to vector<256x256xbf16>
      %c0_15 = arith.constant 0 : index
      %c0_16 = arith.constant 0 : index
      %30 = vector.load %arg5[%c0_15, %c0_16] : memref<256x256xbf16, #tpu.memory_space<vmem>>, vector<256x256xbf16>
      tpu.vector_store %arg5[%c0_15, %c0_16], %29 {strides = array<i32>} : memref<256x256xbf16, #tpu.memory_space<vmem>>, vector<256x256xbf16>,
    } else {
    }
    return
  }
  func.func @transform_0(%arg0: i32, %arg1: i32) -> (i32, i32) {
    %c0_i32 = arith.constant 0 : i32
    %c0_i32_0 = arith.constant 0 : i32
    return %arg0, %c0_i32 : i32, i32
  }
  func.func @transform_1(%arg0: i32, %arg1: i32) -> (i32, i32, i32) {
    %c0_i32 = arith.constant 0 : i32
    %c0_i32_0 = arith.constant 0 : i32
    %c0_i32_1 = arith.constant 0 : i32
    return %arg1, %c0_i32, %c0_i32_0 : i32, i32, i32
  }
  func.func @transform_2(%arg0: i32, %arg1: i32) -> (i32, i32) {
    %c0_i32 = arith.constant 0 : i32
    %c0_i32_0 = arith.constant 0 : i32
    return %arg1, %c0_i32 : i32, i32
  }
  func.func @transform_3(%arg0: i32, %arg1: i32) -> (i32, i32) {
    %c0_i32 = arith.constant 0 : i32
    %c0_i32_0 = arith.constant 0 : i32
    return %arg0, %c0_i32 : i32, i32
  }
}

</mosaic_0001>

<llo_original>
// kernel: qwen2_mlp.1
$region0: #{qwen2_mlp.1}
  #allocation0 [shape = 'u32[]', space=smem, size = 0x4, offset = 0x4, fixed_abs, tag = 'smem constant byte address 0x4 - core index']
  #allocation1 [shape = 'u32[144,128]{1,0:T(1,128)}', space=vmem, size = 0x12000, scoped, tag = 'internal scratch']
  #allocation2 [shape = 'f32[256,256]{1,0:T(8,128)}', space=vmem, size = 0x40000, scoped, tag = 'scratch operand']
  %s0 = inlined_call_operand.vmem [shape: bf16[256,256], index: 0, kind: input, shape index: {}]
  %s1 = inlined_call_operand.hbm [shape: bf16[2,256,1024], index: 1, kind: input, shape index: {}]
  %s2 = inlined_call_operand.hbm [shape: bf16[1024,256], index: 2, kind: input, shape index: {}]
  %s3 = inlined_call_operand.vmem [shape: bf16[256,256], index: 3, kind: output, shape index: {}]
  %s4 = sld [smem:[#allocation0]]
  $region65: #{qwen2_mlp.1} parent=0
    _
  %s6 = ssub.s32 1, %s4
  %s7 = scalar_select 0, %s6, %s4
  $region1: #{qwen2_mlp.1} parent=0
    #allocation3 [shape = 'u8[1048576]{0}', space=vmem, size = 0x100000, scoped, tag = 'input window, operand 1']
    #allocation4 [shape = 's32[2]{0}', space=sflag, size = 0x8, scoped, tag = 'scoped memory for qwen2_mlp.1']
    #allocation5 [shape = 'u8[524288]{0}', space=vmem, size = 0x80000, scoped, tag = 'input window, operand 2']
    #allocation6 [shape = 's32[2]{0}', space=sflag, size = 0x8, scoped, tag = 'scoped memory for qwen2_mlp.1']
    %8 = vsyncpa [#allocation4], 0
    %s9 = scalar_lea.sflag [#allocation4], 1
    %10 = vsyncpa %s9, 0
    %11 = vsyncpa [#allocation6], 0
    %s12 = scalar_lea.sflag [#allocation6], 1
    %13 = vsyncpa %s12, 0
    loop: start=0, step=1, limit=4
    $region2: #{qwen2_mlp.1} parent=1 // loop_pre_header
      _
    $region3: #{qwen2_mlp.1} parent=1 // loop_header
      %s15 = sphi 0, %s19
      %p16 = scmp.ge.s32.totalorder %s15, 4
      %s22 = sphi 0, %s34
      %s23 = sphi 0, %s30
      %s24 = sphi 0, %s22
      %s25 = sphi 0, %s23
      %s26 = sphi 0, %s24
      %s27 = sphi 0, %s25
      %s37 = sphi 0, %s39
      %s40 = sphi 0, %s37
      %s41 = sphi 0, %s40
      %s57 = sphi 0, %s41
      %s63 = sphi 0, %s65
      %s66 = sphi 0, %s63
      %s67 = sphi 0, %s66
      %s83 = sphi 0, %s67
      %s89 = sphi 0, %s91
      %s92 = sphi 0, %s89
      %s93 = sphi 0, %s92
      %s109 = sphi 0, %s93
      %s115 = sphi 0, %s117
      %s118 = sphi 0, %s115
      %s119 = sphi 0, %s118
      %s135 = sphi 0, %s119
    $region4: #{qwen2_mlp.1} parent=1 // loop_header_branch
      %18 = sbr.rel (%p16) target = $region8
    $region5: #{qwen2_mlp.1} parent=1 // loop_body
      %s20 = ssub.s32 %s15, 1
      %s21 = ssub.s32 %s15, 2
      %s28 = sadd.s32 1, %s23
      %p29 = scmp.ge.s32.totalorder %s28, 2
      %s30 = scalar_select %p29, 0, %s28
      %s31 = sadd.s32 1, %s22
      %s32 = scalar_select %p29, %s31, %s22
      %p33 = scmp.ge.s32.totalorder %s32, 1
      %s34 = scalar_select %p33, 0, %s32
      %s35 = ssub.s32 %s22, %s34
      %p36 = scmp.eq.s32.totalorder %s35, 0
      %s38 = sadd.s32 %s37, 1
      %s39 = scalar_select %p36, %s37, %s38
      %p42 = pneg %p36
      %p43 = scmp.eq.s32.totalorder %s15, 1
      %p44 = por %p42, %p43
      %p45 = scmp.ne.s32.totalorder %s37, %s40
      %p46 = scmp.eq.s32.totalorder %s15, 0
      %p47 = por %p45, %p46
      %p48 = scmp.ne.s32.totalorder %s37, %s40
      %p49 = scmp.eq.s32.totalorder %s20, 1
      %p50 = por %p48, %p49
      %p51 = scmp.ne.s32.totalorder %s40, %s41
      %p52 = scmp.eq.s32.totalorder %s20, 0
      %p53 = por %p51, %p52
      %p54 = scmp.ne.s32.totalorder %s40, %s41
      %p55 = scmp.eq.s32.totalorder %s21, 1
      %p56 = por %p54, %p55
      %p58 = scmp.ne.s32.totalorder %s41, %s57
      %p59 = scmp.eq.s32.totalorder %s21, 0
      %p60 = por %p58, %p59
      %s61 = ssub.s32 %s23, %s30
      %p62 = scmp.eq.s32.totalorder %s61, 0
      %s64 = sadd.s32 %s63, 1
      %s65 = scalar_select %p62, %s63, %s64
      %p68 = pneg %p62
      %p69 = scmp.eq.s32.totalorder %s15, 1
      %p70 = por %p68, %p69
      %p71 = scmp.ne.s32.totalorder %s63, %s66
      %p72 = scmp.eq.s32.totalorder %s15, 0
      %p73 = por %p71, %p72
      %p74 = scmp.ne.s32.totalorder %s63, %s66
      %p75 = scmp.eq.s32.totalorder %s20, 1
      %p76 = por %p74, %p75
      %p77 = scmp.ne.s32.totalorder %s66, %s67
      %p78 = scmp.eq.s32.totalorder %s20, 0
      %p79 = por %p77, %p78
      %p80 = scmp.ne.s32.totalorder %s66, %s67
      %p81 = scmp.eq.s32.totalorder %s21, 1
      %p82 = por %p80, %p81
      %p84 = scmp.ne.s32.totalorder %s67, %s83
      %p85 = scmp.eq.s32.totalorder %s21, 0
      %p86 = por %p84, %p85
      %s87 = ssub.s32 %s23, %s30
      %p88 = scmp.eq.s32.totalorder %s87, 0
      %s90 = sadd.s32 %s89, 1
      %s91 = scalar_select %p88, %s89, %s90
      %p94 = pneg %p88
      %p95 = scmp.eq.s32.totalorder %s15, 1
      %p96 = por %p94, %p95
      %p97 = scmp.ne.s32.totalorder %s89, %s92
      %p98 = scmp.eq.s32.totalorder %s15, 0
      %p99 = por %p97, %p98
      %p100 = scmp.ne.s32.totalorder %s89, %s92
      %p101 = scmp.eq.s32.totalorder %s20, 1
      %p102 = por %p100, %p101
      %p103 = scmp.ne.s32.totalorder %s92, %s93
      %p104 = scmp.eq.s32.totalorder %s20, 0
      %p105 = por %p103, %p104
      %p106 = scmp.ne.s32.totalorder %s92, %s93
      %p107 = scmp.eq.s32.totalorder %s21, 1
      %p108 = por %p106, %p107
      %p110 = scmp.ne.s32.totalorder %s93, %s109
      %p111 = scmp.eq.s32.totalorder %s21, 0
      %p112 = por %p110, %p111
      %s113 = ssub.s32 %s22, %s34
      %p114 = scmp.eq.s32.totalorder %s113, 0
      %s116 = sadd.s32 %s115, 1
      %s117 = scalar_select %p114, %s115, %s116
      %p120 = pneg %p114
      %p121 = scmp.eq.s32.totalorder %s15, 1
      %p122 = por %p120, %p121
      %p123 = scmp.ne.s32.totalorder %s115, %s118
      %p124 = scmp.eq.s32.totalorder %s15, 0
      %p125 = por %p123, %p124
      %p126 = scmp.ne.s32.totalorder %s115, %s118
      %p127 = scmp.eq.s32.totalorder %s20, 1
      %p128 = por %p126, %p127
      %p129 = scmp.ne.s32.totalorder %s118, %s119
      %p130 = scmp.eq.s32.totalorder %s20, 0
      %p131 = por %p129, %p130
      %p132 = scmp.ne.s32.totalorder %s118, %s119
      %p133 = scmp.eq.s32.totalorder %s21, 1
      %p134 = por %p132, %p133
      %p136 = scmp.ne.s32.totalorder %s119, %s135
      %p137 = scmp.eq.s32.totalorder %s21, 0
      %p138 = por %p136, %p137
      %p139 = scmp.le.s32.totalorder 1, %s15
      %p140 = scmp.lt.s32.totalorder %s15, 3
      %p141 = pnand %p139, %p140
      %p142 = pneg %p141
      // Predicated region
      $region9: #{qwen2_mlp.1} parent=5 // pred_check
        _
      $region10: #{qwen2_mlp.1} parent=5 // pred_check_branch
        %144 = sbr.rel (%p141) target = $region12
      $region11: #{qwen2_mlp.1} parent=5 // pred_region
        %s145 = ssub.s32 %s15, 1
        // Predicated region
        $region13: #{qwen2_mlp.1} parent=11 // pred_check
          %p146 = pneg %p53
        $region14: #{qwen2_mlp.1} parent=11 // pred_check_branch
          %148 = sbr.rel (%p146) target = $region16
        $region15: #{qwen2_mlp.1} parent=11 // pred_region
          %s149 = smul.u32 32, %s24
          %p150 = scmp.lt.s32.totalorder %s149, 31
          %s151 = scalar_select %p150, %s149, 31
          %s152 = smul.addr %s151, 2
          %s153 = smul.addr %s152, 4
          %s154 = scalar_lea.vmem %s0, %s153
          %s155 = smul.u32 32, %s24
        $region16: #{qwen2_mlp.1} parent=11 // pred_fallthru
          _
      $region12: #{qwen2_mlp.1} parent=5 // pred_fallthru
        _
      %p156 = scmp.lt.s32.totalorder %s15, 2
      // Predicated region
      $region17: #{qwen2_mlp.1} parent=5 // pred_check
        %p157 = pneg %p156
      $region18: #{qwen2_mlp.1} parent=5 // pred_check_branch
        %159 = sbr.rel (%p157) target = $region20
      $region19: #{qwen2_mlp.1} parent=5 // pred_region
        // Predicated region
        $region21: #{qwen2_mlp.1} parent=19 // pred_check
          %p160 = pneg %p73
        $region22: #{qwen2_mlp.1} parent=19 // pred_check_branch
          %162 = sbr.rel (%p160) target = $region24
        $region23: #{qwen2_mlp.1} parent=19 // pred_region
          %s163 = sand.u32 %s63, 1
          %s164 = scalar_lea.sflag [#allocation4], %s163
          %s165 = sand.u32 %s63, 1
          %s166 = smul.addr %s165, 1024
          %s167 = scalar_lea.vmem [#allocation3], %s166
          %s169 = ssub.s32 16384, 16384
          %170 = vsyncadd %s164, %s169
          %s171 = smul.addr %s23, 256
          %s172 = smul.addr %s171, 64
          %s173 = scalar_lea.hbm %s1, %s172
          %s174 = sshll.u32 %s167, 4
          %s175 = int_to_ptr.vmem [resolvable:$true] %s174
          %180 = dma.hbm_to_vmem [thread:$0]  %s173, 16384, %s175, %s164, 512, 512, 32
        $region24: #{qwen2_mlp.1} parent=19 // pred_fallthru
          _
        // Predicated region
        $region25: #{qwen2_mlp.1} parent=19 // pred_check
          %p181 = pneg %p99
        $region26: #{qwen2_mlp.1} parent=19 // pred_check_branch
          %183 = sbr.rel (%p181) target = $region28
        $region27: #{qwen2_mlp.1} parent=19 // pred_region
          %s184 = sand.u32 %s89, 1
          %s185 = scalar_lea.sflag [#allocation6], %s184
          %s186 = sand.u32 %s89, 1
          %s187 = smul.addr %s186, 512
          %s188 = scalar_lea.vmem [#allocation5], %s187
          %s189 = smul.u32 64, %s23
          %s191 = ssub.s32 8192, 8192
          %192 = vsyncadd %s185, %s191
          %s193 = smul.addr %s189, 2
          %s194 = smul.addr %s193, 64
          %s195 = scalar_lea.hbm %s2, %s194
          %s196 = sshll.u32 %s188, 4
          %s197 = int_to_ptr.vmem [resolvable:$true] %s196
          %202 = dma.hbm_to_vmem [thread:$0]  %s195, 8192, %s197, %s185, 128, 128, 8
        $region28: #{qwen2_mlp.1} parent=19 // pred_fallthru
          _
      $region20: #{qwen2_mlp.1} parent=5 // pred_fallthru
        _
      %p203 = scmp.le.s32.totalorder 1, %s15
      %p204 = scmp.lt.s32.totalorder %s15, 3
      %p205 = pnand %p203, %p204
      %p206 = pneg %p205
      // Predicated region
      $region29: #{qwen2_mlp.1} parent=5 // pred_check
        _
      $region30: #{qwen2_mlp.1} parent=5 // pred_check_branch
        %208 = sbr.rel (%p205) target = $region32
      $region31: #{qwen2_mlp.1} parent=5 // pred_region
        %s209 = ssub.s32 %s15, 1
        %s210 = sand.u32 %s66, 1
        %s211 = scalar_lea.sflag [#allocation4], %s210
        %s212 = sand.u32 %s66, 1
        %s213 = smul.addr %s212, 1024
        %s214 = scalar_lea.vmem [#allocation3], %s213
        // Predicated region
        $region33: #{qwen2_mlp.1} parent=31 // pred_check
          %p215 = pneg %p79
        $region34: #{qwen2_mlp.1} parent=31 // pred_check_branch
          %217 = sbr.rel (%p215) target = $region36
        $region35: #{qwen2_mlp.1} parent=31 // pred_region
          %218 = dma.done %s211, 16384
        $region36: #{qwen2_mlp.1} parent=31 // pred_fallthru
          _
        %s219 = sand.u32 %s92, 1
        %s220 = scalar_lea.sflag [#allocation6], %s219
        %s221 = sand.u32 %s92, 1
        %s222 = smul.addr %s221, 512
        %s223 = scalar_lea.vmem [#allocation5], %s222
        // Predicated region
        $region37: #{qwen2_mlp.1} parent=31 // pred_check
          %p224 = pneg %p105
        $region38: #{qwen2_mlp.1} parent=31 // pred_check_branch
          %226 = sbr.rel (%p224) target = $region40
        $region39: #{qwen2_mlp.1} parent=31 // pred_region
          %227 = dma.done %s220, 8192
        $region40: #{qwen2_mlp.1} parent=31 // pred_fallthru
          _
        %s228 = smul.u32 32, %s24
        %p229 = scmp.lt.s32.totalorder %s228, 31
        %s230 = scalar_select %p229, %s228, 31
        %s231 = smul.addr %s230, 2
        %s232 = smul.addr %s231, 4
        %s233 = scalar_lea.vmem %s0, %s232
        %p234 = pneg %p53
        %p235 = pneg %p50
        %s236 = sand.u32 %s66, 1
        %s237 = scalar_lea.sflag [#allocation4], %s236
        %s238 = sand.u32 %s66, 1
        %s239 = smul.addr %s238, 1024
        %s240 = scalar_lea.vmem [#allocation3], %s239
        %p241 = pneg %p79
        %p242 = pneg %p76
        %s243 = sand.u32 %s92, 1
        %s244 = scalar_lea.sflag [#allocation6], %s243
        %s245 = sand.u32 %s92, 1
        %s246 = smul.addr %s245, 512
        %s247 = scalar_lea.vmem [#allocation5], %s246
        %p248 = pneg %p105
        %p249 = pneg %p102
        %p250 = pneg %p131
        %p251 = pneg %p128
        %s252 = smul.u32 32, %s24
        %p253 = scmp.lt.s32.totalorder %s252, 31
        %s254 = scalar_select %p253, %s252, 31
        %s255 = smul.addr %s254, 2
        %s256 = smul.addr %s255, 4
        %s257 = scalar_lea.vmem %s3, %s256
        %s258 = smul.u32 32, %s24
        %p259 = scmp.lt.s32.totalorder %s258, 31
        %s260 = scalar_select %p259, %s258, 31
        %s261 = smul.addr %s260, 2
        %s262 = smul.addr %s261, 4
        %s263 = scalar_lea.vmem %s0, %s262
        %s264 = smul.u32 32, %s24
        %s265 = smul.u32 64, %s25
        %s266 = smul.u32 32, %s24
        %p267 = scmp.lt.s32.totalorder %s266, 31
        %s268 = scalar_select %p267, %s266, 31
        %s269 = smul.addr %s268, 2
        %s270 = smul.addr %s269, 4
        %s271 = scalar_lea.vmem %s3, %s270
        %s272 = smul.u32 32, %s24
        %v273 = vld [vmem:[%s263] sm:$0xff]
        %v274 = vld [vmem:[%s263 + $0x8] sm:$0xff]
        %v275 = vld [vmem:[%s263 + $0x10] sm:$0xff]
        %v276 = vld [vmem:[%s263 + $0x18] sm:$0xff]
        %v277 = vld [vmem:[%s263 + $0x20] sm:$0xff]
        %v278 = vld [vmem:[%s263 + $0x28] sm:$0xff]
        %v279 = vld [vmem:[%s263 + $0x30] sm:$0xff]
        %v280 = vld [vmem:[%s263 + $0x38] sm:$0xff]
        %v281 = vld [vmem:[%s263 + $0x40] sm:$0xff]
        %v282 = vld [vmem:[%s263 + $0x48] sm:$0xff]
        %v283 = vld [vmem:[%s263 + $0x50] sm:$0xff]
        %v284 = vld [vmem:[%s263 + $0x58] sm:$0xff]
        %v285 = vld [vmem:[%s263 + $0x60] sm:$0xff]
        %v286 = vld [vmem:[%s263 + $0x68] sm:$0xff]
        %v287 = vld [vmem:[%s263 + $0x70] sm:$0xff]
        %v288 = vld [vmem:[%s263 + $0x78] sm:$0xff]
        %v289 = vld [vmem:[%s263 + $0x80] sm:$0xff]
        %v290 = vld [vmem:[%s263 + $0x88] sm:$0xff]
        %v291 = vld [vmem:[%s263 + $0x90] sm:$0xff]
        %v292 = vld [vmem:[%s263 + $0x98] sm:$0xff]
        %v293 = vld [vmem:[%s263 + $0xa0] sm:$0xff]
        %v294 = vld [vmem:[%s263 + $0xa8] sm:$0xff]
        %v295 = vld [vmem:[%s263 + $0xb0] sm:$0xff]
        %v296 = vld [vmem:[%s263 + $0xb8] sm:$0xff]
        %v297 = vld [vmem:[%s263 + $0xc0] sm:$0xff]
        %v298 = vld [vmem:[%s263 + $0xc8] sm:$0xff]
        %v299 = vld [vmem:[%s263 + $0xd0] sm:$0xff]
        %v300 = vld [vmem:[%s263 + $0xd8] sm:$0xff]
        %v301 = vld [vmem:[%s263 + $0xe0] sm:$0xff]
        %v302 = vld [vmem:[%s263 + $0xe8] sm:$0xff]
        %v303 = vld [vmem:[%s263 + $0xf0] sm:$0xff]
        %v304 = vld [vmem:[%s263 + $0xf8] sm:$0xff]
        %v305 = vld [vmem:[%s214] sm:$0xff]
        %v306 = vld [vmem:[%s214 + $0x8] sm:$0xff]
        %v307 = vld [vmem:[%s214 + $0x10] sm:$0xff]
        %v308 = vld [vmem:[%s214 + $0x18] sm:$0xff]
        %v309 = vld [vmem:[%s214 + $0x20] sm:$0xff]
        %v310 = vld [vmem:[%s214 + $0x28] sm:$0xff]
        %v311 = vld [vmem:[%s214 + $0x30] sm:$0xff]
        %v312 = vld [vmem:[%s214 + $0x38] sm:$0xff]
        %v313 = vld [vmem:[%s214 + $0x40] sm:$0xff]
        %v314 = vld [vmem:[%s214 + $0x48] sm:$0xff]
        %v315 = vld [vmem:[%s214 + $0x50] sm:$0xff]
        %v316 = vld [vmem:[%s214 + $0x58] sm:$0xff]
        %v317 = vld [vmem:[%s214 + $0x60] sm:$0xff]
        %v318 = vld [vmem:[%s214 + $0x68] sm:$0xff]
        %v319 = vld [vmem:[%s214 + $0x70] sm:$0xff]
        %v320 = vld [vmem:[%s214 + $0x78] sm:$0xff]
        %v321 = vld [vmem:[%s214 + $0x80] sm:$0xff]
        %v322 = vld [vmem:[%s214 + $0x88] sm:$0xff]
        %v323 = vld [vmem:[%s214 + $0x90] sm:$0xff]
        %v324 = vld [vmem:[%s214 + $0x98] sm:$0xff]
        %v325 = vld [vmem:[%s214 + $0xa0] sm:$0xff]
        %v326 = vld [vmem:[%s214 + $0xa8] sm:$0xff]
        %v327 = vld [vmem:[%s214 + $0xb0] sm:$0xff]
        %v328 = vld [vmem:[%s214 + $0xb8] sm:$0xff]
        %v329 = vld [vmem:[%s214 + $0xc0] sm:$0xff]
        %v330 = vld [vmem:[%s214 + $0xc8] sm:$0xff]
        %v331 = vld [vmem:[%s214 + $0xd0] sm:$0xff]
        %v332 = vld [vmem:[%s214 + $0xd8] sm:$0xff]
        %v333 = vld [vmem:[%s214 + $0xe0] sm:$0xff]
        %v334 = vld [vmem:[%s214 + $0xe8] sm:$0xff]
        %v335 = vld [vmem:[%s214 + $0xf0] sm:$0xff]
        %v336 = vld [vmem:[%s214 + $0xf8] sm:$0xff]
        %v337 = vld [vmem:[%s214 + $0x100] sm:$0xff]
        %v338 = vld [vmem:[%s214 + $0x108] sm:$0xff]
        %v339 = vld [vmem:[%s214 + $0x110] sm:$0xff]
        %v340 = vld [vmem:[%s214 + $0x118] sm:$0xff]
        %v341 = vld [vmem:[%s214 + $0x120] sm:$0xff]
        %v342 = vld [vmem:[%s214 + $0x128] sm:$0xff]
        %v343 = vld [vmem:[%s214 + $0x130] sm:$0xff]
        %v344 = vld [vmem:[%s214 + $0x138] sm:$0xff]
        %v345 = vld [vmem:[%s214 + $0x140] sm:$0xff]
        %v346 = vld [vmem:[%s214 + $0x148] sm:$0xff]
        %v347 = vld [vmem:[%s214 + $0x150] sm:$0xff]
        %v348 = vld [vmem:[%s214 + $0x158] sm:$0xff]
        %v349 = vld [vmem:[%s214 + $0x160] sm:$0xff]
        %v350 = vld [vmem:[%s214 + $0x168] sm:$0xff]
        %v351 = vld [vmem:[%s214 + $0x170] sm:$0xff]
        %v352 = vld [vmem:[%s214 + $0x178] sm:$0xff]
        %v353 = vld [vmem:[%s214 + $0x180] sm:$0xff]
        %v354 = vld [vmem:[%s214 + $0x188] sm:$0xff]
        %v355 = vld [vmem:[%s214 + $0x190] sm:$0xff]
        %v356 = vld [vmem:[%s214 + $0x198] sm:$0xff]
        %v357 = vld [vmem:[%s214 + $0x1a0] sm:$0xff]
        %v358 = vld [vmem:[%s214 + $0x1a8] sm:$0xff]
        %v359 = vld [vmem:[%s214 + $0x1b0] sm:$0xff]
        %v360 = vld [vmem:[%s214 + $0x1b8] sm:$0xff]
        %v361 = vld [vmem:[%s214 + $0x1c0] sm:$0xff]
        %v362 = vld [vmem:[%s214 + $0x1c8] sm:$0xff]
        %v363 = vld [vmem:[%s214 + $0x1d0] sm:$0xff]
        %v364 = vld [vmem:[%s214 + $0x1d8] sm:$0xff]
        %v365 = vld [vmem:[%s214 + $0x1e0] sm:$0xff]
        %v366 = vld [vmem:[%s214 + $0x1e8] sm:$0xff]
        %v367 = vld [vmem:[%s214 + $0x1f0] sm:$0xff]
        %v368 = vld [vmem:[%s214 + $0x1f8] sm:$0xff]
        %v369 = vld [vmem:[%s214 + $0x200] sm:$0xff]
        %v370 = vld [vmem:[%s214 + $0x208] sm:$0xff]
        %v371 = vld [vmem:[%s214 + $0x210] sm:$0xff]
        %v372 = vld [vmem:[%s214 + $0x218] sm:$0xff]
        %v373 = vld [vmem:[%s214 + $0x220] sm:$0xff]
        %v374 = vld [vmem:[%s214 + $0x228] sm:$0xff]
        %v375 = vld [vmem:[%s214 + $0x230] sm:$0xff]
        %v376 = vld [vmem:[%s214 + $0x238] sm:$0xff]
        %v377 = vld [vmem:[%s214 + $0x240] sm:$0xff]
        %v378 = vld [vmem:[%s214 + $0x248] sm:$0xff]
        %v379 = vld [vmem:[%s214 + $0x250] sm:$0xff]
        %v380 = vld [vmem:[%s214 + $0x258] sm:$0xff]
        %v381 = vld [vmem:[%s214 + $0x260] sm:$0xff]
        %v382 = vld [vmem:[%s214 + $0x268] sm:$0xff]
        %v383 = vld [vmem:[%s214 + $0x270] sm:$0xff]
        %v384 = vld [vmem:[%s214 + $0x278] sm:$0xff]
        %v385 = vld [vmem:[%s214 + $0x280] sm:$0xff]
        %v386 = vld [vmem:[%s214 + $0x288] sm:$0xff]
        %v387 = vld [vmem:[%s214 + $0x290] sm:$0xff]
        %v388 = vld [vmem:[%s214 + $0x298] sm:$0xff]
        %v389 = vld [vmem:[%s214 + $0x2a0] sm:$0xff]
        %v390 = vld [vmem:[%s214 + $0x2a8] sm:$0xff]
        %v391 = vld [vmem:[%s214 + $0x2b0] sm:$0xff]
        %v392 = vld [vmem:[%s214 + $0x2b8] sm:$0xff]
        %v393 = vld [vmem:[%s214 + $0x2c0] sm:$0xff]
        %v394 = vld [vmem:[%s214 + $0x2c8] sm:$0xff]
        %v395 = vld [vmem:[%s214 + $0x2d0] sm:$0xff]
        %v396 = vld [vmem:[%s214 + $0x2d8] sm:$0xff]
        %v397 = vld [vmem:[%s214 + $0x2e0] sm:$0xff]
        %v398 = vld [vmem:[%s214 + $0x2e8] sm:$0xff]
        %v399 = vld [vmem:[%s214 + $0x2f0] sm:$0xff]
        %v400 = vld [vmem:[%s214 + $0x2f8] sm:$0xff]
        %v401 = vld [vmem:[%s214 + $0x300] sm:$0xff]
        %v402 = vld [vmem:[%s214 + $0x308] sm:$0xff]
        %v403 = vld [vmem:[%s214 + $0x310] sm:$0xff]
        %v404 = vld [vmem:[%s214 + $0x318] sm:$0xff]
        %v405 = vld [vmem:[%s214 + $0x320] sm:$0xff]
        %v406 = vld [vmem:[%s214 + $0x328] sm:$0xff]
        %v407 = vld [vmem:[%s214 + $0x330] sm:$0xff]
        %v408 = vld [vmem:[%s214 + $0x338] sm:$0xff]
        %v409 = vld [vmem:[%s214 + $0x340] sm:$0xff]
        %v410 = vld [vmem:[%s214 + $0x348] sm:$0xff]
        %v411 = vld [vmem:[%s214 + $0x350] sm:$0xff]
        %v412 = vld [vmem:[%s214 + $0x358] sm:$0xff]
        %v413 = vld [vmem:[%s214 + $0x360] sm:$0xff]
        %v414 = vld [vmem:[%s214 + $0x368] sm:$0xff]
        %v415 = vld [vmem:[%s214 + $0x370] sm:$0xff]
        %v416 = vld [vmem:[%s214 + $0x378] sm:$0xff]
        %v417 = vld [vmem:[%s214 + $0x380] sm:$0xff]
        %v418 = vld [vmem:[%s214 + $0x388] sm:$0xff]
        %v419 = vld [vmem:[%s214 + $0x390] sm:$0xff]
        %v420 = vld [vmem:[%s214 + $0x398] sm:$0xff]
        %v421 = vld [vmem:[%s214 + $0x3a0] sm:$0xff]
        %v422 = vld [vmem:[%s214 + $0x3a8] sm:$0xff]
        %v423 = vld [vmem:[%s214 + $0x3b0] sm:$0xff]
        %v424 = vld [vmem:[%s214 + $0x3b8] sm:$0xff]
        %v425 = vld [vmem:[%s214 + $0x3c0] sm:$0xff]
        %v426 = vld [vmem:[%s214 + $0x3c8] sm:$0xff]
        %v427 = vld [vmem:[%s214 + $0x3d0] sm:$0xff]
        %v428 = vld [vmem:[%s214 + $0x3d8] sm:$0xff]
        %v429 = vld [vmem:[%s214 + $0x3e0] sm:$0xff]
        %v430 = vld [vmem:[%s214 + $0x3e8] sm:$0xff]
        %v431 = vld [vmem:[%s214 + $0x3f0] sm:$0xff]
        %v432 = vld [vmem:[%s214 + $0x3f8] sm:$0xff]
        %v465 = vunpack.c.l.b16 %v273
        %v466 = vunpack.c.h.b16 %v273
        %v467 = vunpack.c.l.b16 %v274
        %v468 = vunpack.c.h.b16 %v274
        %v469 = vunpack.c.l.b16 %v275
        %v470 = vunpack.c.h.b16 %v275
        %v471 = vunpack.c.l.b16 %v276
        %v472 = vunpack.c.h.b16 %v276
        %v473 = vunpack.c.l.b16 %v277
        %v474 = vunpack.c.h.b16 %v277
        %v475 = vunpack.c.l.b16 %v278
        %v476 = vunpack.c.h.b16 %v278
        %v477 = vunpack.c.l.b16 %v279
        %v478 = vunpack.c.h.b16 %v279
        %v479 = vunpack.c.l.b16 %v280
        %v480 = vunpack.c.h.b16 %v280
        %v481 = vunpack.c.l.b16 %v281
        %v482 = vunpack.c.h.b16 %v281
        %v483 = vunpack.c.l.b16 %v282
        %v484 = vunpack.c.h.b16 %v282
        %v485 = vunpack.c.l.b16 %v283
        %v486 = vunpack.c.h.b16 %v283
        %v487 = vunpack.c.l.b16 %v284
        %v488 = vunpack.c.h.b16 %v284
        %v489 = vunpack.c.l.b16 %v285
        %v490 = vunpack.c.h.b16 %v285
        %v491 = vunpack.c.l.b16 %v286
        %v492 = vunpack.c.h.b16 %v286
        %v493 = vunpack.c.l.b16 %v287
        %v494 = vunpack.c.h.b16 %v287
        %v495 = vunpack.c.l.b16 %v288
        %v496 = vunpack.c.h.b16 %v288
        %v497 = vunpack.c.l.b16 %v289
        %v498 = vunpack.c.h.b16 %v289
        %v499 = vunpack.c.l.b16 %v290
        %v500 = vunpack.c.h.b16 %v290
        %v501 = vunpack.c.l.b16 %v291
        %v502 = vunpack.c.h.b16 %v291
        %v503 = vunpack.c.l.b16 %v292
        %v504 = vunpack.c.h.b16 %v292
        %v505 = vunpack.c.l.b16 %v293
        %v506 = vunpack.c.h.b16 %v293
        %v507 = vunpack.c.l.b16 %v294
        %v508 = vunpack.c.h.b16 %v294
        %v509 = vunpack.c.l.b16 %v295
        %v510 = vunpack.c.h.b16 %v295
        %v511 = vunpack.c.l.b16 %v296
        %v512 = vunpack.c.h.b16 %v296
        %v513 = vunpack.c.l.b16 %v297
        %v514 = vunpack.c.h.b16 %v297
        %v515 = vunpack.c.l.b16 %v298
        %v516 = vunpack.c.h.b16 %v298
        %v517 = vunpack.c.l.b16 %v299
        %v518 = vunpack.c.h.b16 %v299
        %v519 = vunpack.c.l.b16 %v300
        %v520 = vunpack.c.h.b16 %v300
        %v521 = vunpack.c.l.b16 %v301
        %v522 = vunpack.c.h.b16 %v301
        %v523 = vunpack.c.l.b16 %v302
        %v524 = vunpack.c.h.b16 %v302
        %v525 = vunpack.c.l.b16 %v303
        %v526 = vunpack.c.h.b16 %v303
        %v527 = vunpack.c.l.b16 %v304
        %v528 = vunpack.c.h.b16 %v304
        %v529 = vpack.c.b16 %v467, %v465
        %v530 = vpack.c.b16 %v468, %v466
        %v531 = vpack.c.b16 %v471, %v469
        %v532 = vpack.c.b16 %v472, %v470
        %v533 = vpack.c.b16 %v475, %v473
        %v534 = vpack.c.b16 %v476, %v474
        %v535 = vpack.c.b16 %v479, %v477
        %v536 = vpack.c.b16 %v480, %v478
        %v537 = vpack.c.b16 %v483, %v481
        %v538 = vpack.c.b16 %v484, %v482
        %v539 = vpack.c.b16 %v487, %v485
        %v540 = vpack.c.b16 %v488, %v486
        %v541 = vpack.c.b16 %v491, %v489
        %v542 = vpack.c.b16 %v492, %v490
        %v543 = vpack.c.b16 %v495, %v493
        %v544 = vpack.c.b16 %v496, %v494
        %v545 = vpack.c.b16 %v499, %v497
        %v546 = vpack.c.b16 %v500, %v498
        %v547 = vpack.c.b16 %v503, %v501
        %v548 = vpack.c.b16 %v504, %v502
        %v549 = vpack.c.b16 %v507, %v505
        %v550 = vpack.c.b16 %v508, %v506
        %v551 = vpack.c.b16 %v511, %v509
        %v552 = vpack.c.b16 %v512, %v510
        %v553 = vpack.c.b16 %v515, %v513
        %v554 = vpack.c.b16 %v516, %v514
        %v555 = vpack.c.b16 %v519, %v517
        %v556 = vpack.c.b16 %v520, %v518
        %v557 = vpack.c.b16 %v523, %v521
        %v558 = vpack.c.b16 %v524, %v522
        %v559 = vpack.c.b16 %v527, %v525
        %v560 = vpack.c.b16 %v528, %v526
        %v721 = vunpack.c.l.b16 %v305
        %v722 = vunpack.c.h.b16 %v305
        %v723 = vunpack.c.l.b16 %v306
        %v724 = vunpack.c.h.b16 %v306
        %v725 = vunpack.c.l.b16 %v307
        %v726 = vunpack.c.h.b16 %v307
        %v727 = vunpack.c.l.b16 %v308
        %v728 = vunpack.c.h.b16 %v308
        %v729 = vunpack.c.l.b16 %v309
        %v730 = vunpack.c.h.b16 %v309
        %v731 = vunpack.c.l.b16 %v310
        %v732 = vunpack.c.h.b16 %v310
        %v733 = vunpack.c.l.b16 %v311
        %v734 = vunpack.c.h.b16 %v311
        %v735 = vunpack.c.l.b16 %v312
        %v736 = vunpack.c.h.b16 %v312
        %v737 = vunpack.c.l.b16 %v313
        %v738 = vunpack.c.h.b16 %v313
        %v739 = vunpack.c.l.b16 %v314
        %v740 = vunpack.c.h.b16 %v314
        %v741 = vunpack.c.l.b16 %v315
        %v742 = vunpack.c.h.b16 %v315
        %v743 = vunpack.c.l.b16 %v316
        %v744 = vunpack.c.h.b16 %v316
        %v745 = vunpack.c.l.b16 %v317
        %v746 = vunpack.c.h.b16 %v317
        %v747 = vunpack.c.l.b16 %v318
        %v748 = vunpack.c.h.b16 %v318
        %v749 = vunpack.c.l.b16 %v319
        %v750 = vunpack.c.h.b16 %v319
        %v751 = vunpack.c.l.b16 %v320
        %v752 = vunpack.c.h.b16 %v320
        %v753 = vunpack.c.l.b16 %v321
        %v754 = vunpack.c.h.b16 %v321
        %v755 = vunpack.c.l.b16 %v322
        %v756 = vunpack.c.h.b16 %v322
        %v757 = vunpack.c.l.b16 %v323
        %v758 = vunpack.c.h.b16 %v323
        %v759 = vunpack.c.l.b16 %v324
        %v760 = vunpack.c.h.b16 %v324
        %v761 = vunpack.c.l.b16 %v325
        %v762 = vunpack.c.h.b16 %v325
        %v763 = vunpack.c.l.b16 %v326
        %v764 = vunpack.c.h.b16 %v326
        %v765 = vunpack.c.l.b16 %v327
        %v766 = vunpack.c.h.b16 %v327
        %v767 = vunpack.c.l.b16 %v328
        %v768 = vunpack.c.h.b16 %v328
        %v769 = vunpack.c.l.b16 %v329
        %v770 = vunpack.c.h.b16 %v329
        %v771 = vunpack.c.l.b16 %v330
        %v772 = vunpack.c.h.b16 %v330
        %v773 = vunpack.c.l.b16 %v331
        %v774 = vunpack.c.h.b16 %v331
        %v775 = vunpack.c.l.b16 %v332
        %v776 = vunpack.c.h.b16 %v332
        %v777 = vunpack.c.l.b16 %v333
        %v778 = vunpack.c.h.b16 %v333
        %v779 = vunpack.c.l.b16 %v334
        %v780 = vunpack.c.h.b16 %v334
        %v781 = vunpack.c.l.b16 %v335
        %v782 = vunpack.c.h.b16 %v335
        %v783 = vunpack.c.l.b16 %v336
        %v784 = vunpack.c.h.b16 %v336
        %v785 = vunpack.c.l.b16 %v337
        %v786 = vunpack.c.h.b16 %v337
        %v787 = vunpack.c.l.b16 %v338
        %v788 = vunpack.c.h.b16 %v338
        %v789 = vunpack.c.l.b16 %v339
        %v790 = vunpack.c.h.b16 %v339
        %v791 = vunpack.c.l.b16 %v340
        %v792 = vunpack.c.h.b16 %v340
        %v793 = vunpack.c.l.b16 %v341
        %v794 = vunpack.c.h.b16 %v341
        %v795 = vunpack.c.l.b16 %v342
        %v796 = vunpack.c.h.b16 %v342
        %v797 = vunpack.c.l.b16 %v343
        %v798 = vunpack.c.h.b16 %v343
        %v799 = vunpack.c.l.b16 %v344
        %v800 = vunpack.c.h.b16 %v344
        %v801 = vunpack.c.l.b16 %v345
        %v802 = vunpack.c.h.b16 %v345
        %v803 = vunpack.c.l.b16 %v346
        %v804 = vunpack.c.h.b16 %v346
        %v805 = vunpack.c.l.b16 %v347
        %v806 = vunpack.c.h.b16 %v347
        %v807 = vunpack.c.l.b16 %v348
        %v808 = vunpack.c.h.b16 %v348
        %v809 = vunpack.c.l.b16 %v349
        %v810 = vunpack.c.h.b16 %v349
        %v811 = vunpack.c.l.b16 %v350
        %v812 = vunpack.c.h.b16 %v350
        %v813 = vunpack.c.l.b16 %v351
        %v814 = vunpack.c.h.b16 %v351
        %v815 = vunpack.c.l.b16 %v352
        %v816 = vunpack.c.h.b16 %v352
        %v817 = vunpack.c.l.b16 %v353
        %v818 = vunpack.c.h.b16 %v353
        %v819 = vunpack.c.l.b16 %v354
        %v820 = vunpack.c.h.b16 %v354
        %v821 = vunpack.c.l.b16 %v355
        %v822 = vunpack.c.h.b16 %v355
        %v823 = vunpack.c.l.b16 %v356
        %v824 = vunpack.c.h.b16 %v356
        %v825 = vunpack.c.l.b16 %v357
        %v826 = vunpack.c.h.b16 %v357
        %v827 = vunpack.c.l.b16 %v358
        %v828 = vunpack.c.h.b16 %v358
        %v829 = vunpack.c.l.b16 %v359
        %v830 = vunpack.c.h.b16 %v359
        %v831 = vunpack.c.l.b16 %v360
        %v832 = vunpack.c.h.b16 %v360
        %v833 = vunpack.c.l.b16 %v361
        %v834 = vunpack.c.h.b16 %v361
        %v835 = vunpack.c.l.b16 %v362
        %v836 = vunpack.c.h.b16 %v362
        %v837 = vunpack.c.l.b16 %v363
        %v838 = vunpack.c.h.b16 %v363
        %v839 = vunpack.c.l.b16 %v364
        %v840 = vunpack.c.h.b16 %v364
        %v841 = vunpack.c.l.b16 %v365
        %v842 = vunpack.c.h.b16 %v365
        %v843 = vunpack.c.l.b16 %v366
        %v844 = vunpack.c.h.b16 %v366
        %v845 = vunpack.c.l.b16 %v367
        %v846 = vunpack.c.h.b16 %v367
        %v847 = vunpack.c.l.b16 %v368
        %v848 = vunpack.c.h.b16 %v368
        %v849 = vunpack.c.l.b16 %v369
        %v850 = vunpack.c.h.b16 %v369
        %v851 = vunpack.c.l.b16 %v370
        %v852 = vunpack.c.h.b16 %v370
        %v853 = vunpack.c.l.b16 %v371
        %v854 = vunpack.c.h.b16 %v371
        %v855 = vunpack.c.l.b16 %v372
        %v856 = vunpack.c.h.b16 %v372
        %v857 = vunpack.c.l.b16 %v373
        %v858 = vunpack.c.h.b16 %v373
        %v859 = vunpack.c.l.b16 %v374
        %v860 = vunpack.c.h.b16 %v374
        %v861 = vunpack.c.l.b16 %v375
        %v862 = vunpack.c.h.b16 %v375
        %v863 = vunpack.c.l.b16 %v376
        %v864 = vunpack.c.h.b16 %v376
        %v865 = vunpack.c.l.b16 %v377
        %v866 = vunpack.c.h.b16 %v377
        %v867 = vunpack.c.l.b16 %v378
        %v868 = vunpack.c.h.b16 %v378
        %v869 = vunpack.c.l.b16 %v379
        %v870 = vunpack.c.h.b16 %v379
        %v871 = vunpack.c.l.b16 %v380
        %v872 = vunpack.c.h.b16 %v380
        %v873 = vunpack.c.l.b16 %v381
        %v874 = vunpack.c.h.b16 %v381
        %v875 = vunpack.c.l.b16 %v382
        %v876 = vunpack.c.h.b16 %v382
        %v877 = vunpack.c.l.b16 %v383
        %v878 = vunpack.c.h.b16 %v383
        %v879 = vunpack.c.l.b16 %v384
        %v880 = vunpack.c.h.b16 %v384
        %v881 = vunpack.c.l.b16 %v385
        %v882 = vunpack.c.h.b16 %v385
        %v883 = vunpack.c.l.b16 %v386
        %v884 = vunpack.c.h.b16 %v386
        %v885 = vunpack.c.l.b16 %v387
        %v886 = vunpack.c.h.b16 %v387
        %v887 = vunpack.c.l.b16 %v388
        %v888 = vunpack.c.h.b16 %v388
        %v889 = vunpack.c.l.b16 %v389
        %v890 = vunpack.c.h.b16 %v389
        %v891 = vunpack.c.l.b16 %v390
        %v892 = vunpack.c.h.b16 %v390
        %v893 = vunpack.c.l.b16 %v391
        %v894 = vunpack.c.h.b16 %v391
        %v895 = vunpack.c.l.b16 %v392
        %v896 = vunpack.c.h.b16 %v392
        %v897 = vunpack.c.l.b16 %v393
        %v898 = vunpack.c.h.b16 %v393
        %v899 = vunpack.c.l.b16 %v394
        %v900 = vunpack.c.h.b16 %v394
        %v901 = vunpack.c.l.b16 %v395
        %v902 = vunpack.c.h.b16 %v395
        %v903 = vunpack.c.l.b16 %v396
        %v904 = vunpack.c.h.b16 %v396
        %v905 = vunpack.c.l.b16 %v397
        %v906 = vunpack.c.h.b16 %v397
        %v907 = vunpack.c.l.b16 %v398
        %v908 = vunpack.c.h.b16 %v398
        %v909 = vunpack.c.l.b16 %v399
        %v910 = vunpack.c.h.b16 %v399
        %v911 = vunpack.c.l.b16 %v400
        %v912 = vunpack.c.h.b16 %v400
        %v913 = vunpack.c.l.b16 %v401
        %v914 = vunpack.c.h.b16 %v401
        %v915 = vunpack.c.l.b16 %v402
        %v916 = vunpack.c.h.b16 %v402
        %v917 = vunpack.c.l.b16 %v403
        %v918 = vunpack.c.h.b16 %v403
        %v919 = vunpack.c.l.b16 %v404
        %v920 = vunpack.c.h.b16 %v404
        %v921 = vunpack.c.l.b16 %v405
        %v922 = vunpack.c.h.b16 %v405
        %v923 = vunpack.c.l.b16 %v406
        %v924 = vunpack.c.h.b16 %v406
        %v925 = vunpack.c.l.b16 %v407
        %v926 = vunpack.c.h.b16 %v407
        %v927 = vunpack.c.l.b16 %v408
        %v928 = vunpack.c.h.b16 %v408
        %v929 = vunpack.c.l.b16 %v409
        %v930 = vunpack.c.h.b16 %v409
        %v931 = vunpack.c.l.b16 %v410
        %v932 = vunpack.c.h.b16 %v410
        %v933 = vunpack.c.l.b16 %v411
        %v934 = vunpack.c.h.b16 %v411
        %v935 = vunpack.c.l.b16 %v412
        %v936 = vunpack.c.h.b16 %v412
        %v937 = vunpack.c.l.b16 %v413
        %v938 = vunpack.c.h.b16 %v413
        %v939 = vunpack.c.l.b16 %v414
        %v940 = vunpack.c.h.b16 %v414
        %v941 = vunpack.c.l.b16 %v415
        %v942 = vunpack.c.h.b16 %v415
        %v943 = vunpack.c.l.b16 %v416
        %v944 = vunpack.c.h.b16 %v416
        %v945 = vunpack.c.l.b16 %v417
        %v946 = vunpack.c.h.b16 %v417
        %v947 = vunpack.c.l.b16 %v418
        %v948 = vunpack.c.h.b16 %v418
        %v949 = vunpack.c.l.b16 %v419
        %v950 = vunpack.c.h.b16 %v419
        %v951 = vunpack.c.l.b16 %v420
        %v952 = vunpack.c.h.b16 %v420
        %v953 = vunpack.c.l.b16 %v421
        %v954 = vunpack.c.h.b16 %v421
        %v955 = vunpack.c.l.b16 %v422
        %v956 = vunpack.c.h.b16 %v422
        %v957 = vunpack.c.l.b16 %v423
        %v958 = vunpack.c.h.b16 %v423
        %v959 = vunpack.c.l.b16 %v424
        %v960 = vunpack.c.h.b16 %v424
        %v961 = vunpack.c.l.b16 %v425
        %v962 = vunpack.c.h.b16 %v425
        %v963 = vunpack.c.l.b16 %v426
        %v964 = vunpack.c.h.b16 %v426
        %v965 = vunpack.c.l.b16 %v427
        %v966 = vunpack.c.h.b16 %v427
        %v967 = vunpack.c.l.b16 %v428
        %v968 = vunpack.c.h.b16 %v428
        %v969 = vunpack.c.l.b16 %v429
        %v970 = vunpack.c.h.b16 %v429
        %v971 = vunpack.c.l.b16 %v430
        %v972 = vunpack.c.h.b16 %v430
        %v973 = vunpack.c.l.b16 %v431
        %v974 = vunpack.c.h.b16 %v431
        %v975 = vunpack.c.l.b16 %v432
        %v976 = vunpack.c.h.b16 %v432
        %v977 = vpack.c.b16 %v729, %v721
        %v978 = vpack.c.b16 %v730, %v722
        %v979 = vpack.c.b16 %v731, %v723
        %v980 = vpack.c.b16 %v732, %v724
        %v981 = vpack.c.b16 %v733, %v725
        %v982 = vpack.c.b16 %v734, %v726
        %v983 = vpack.c.b16 %v735, %v727
        %v984 = vpack.c.b16 %v736, %v728
        %v985 = vpack.c.b16 %v745, %v737
        %v986 = vpack.c.b16 %v746, %v738
        %v987 = vpack.c.b16 %v747, %v739
        %v988 = vpack.c.b16 %v748, %v740
        %v989 = vpack.c.b16 %v749, %v741
        %v990 = vpack.c.b16 %v750, %v742
        %v991 = vpack.c.b16 %v751, %v743
        %v992 = vpack.c.b16 %v752, %v744
        %v993 = vpack.c.b16 %v761, %v753
        %v994 = vpack.c.b16 %v762, %v754
        %v995 = vpack.c.b16 %v763, %v755
        %v996 = vpack.c.b16 %v764, %v756
        %v997 = vpack.c.b16 %v765, %v757
        %v998 = vpack.c.b16 %v766, %v758
        %v999 = vpack.c.b16 %v767, %v759
        %v1000 = vpack.c.b16 %v768, %v760
        %v1001 = vpack.c.b16 %v777, %v769
        %v1002 = vpack.c.b16 %v778, %v770
        %v1003 = vpack.c.b16 %v779, %v771
        %v1004 = vpack.c.b16 %v780, %v772
        %v1005 = vpack.c.b16 %v781, %v773
        %v1006 = vpack.c.b16 %v782, %v774
        %v1007 = vpack.c.b16 %v783, %v775
        %v1008 = vpack.c.b16 %v784, %v776
        %v1009 = vpack.c.b16 %v793, %v785
        %v1010 = vpack.c.b16 %v794, %v786
        %v1011 = vpack.c.b16 %v795, %v787
        %v1012 = vpack.c.b16 %v796, %v788
        %v1013 = vpack.c.b16 %v797, %v789
        %v1014 = vpack.c.b16 %v798, %v790
        %v1015 = vpack.c.b16 %v799, %v791
        %v1016 = vpack.c.b16 %v800, %v792
        %v1017 = vpack.c.b16 %v809, %v801
        %v1018 = vpack.c.b16 %v810, %v802
        %v1019 = vpack.c.b16 %v811, %v803
        %v1020 = vpack.c.b16 %v812, %v804
        %v1021 = vpack.c.b16 %v813, %v805
        %v1022 = vpack.c.b16 %v814, %v806
        %v1023 = vpack.c.b16 %v815, %v807
        %v1024 = vpack.c.b16 %v816, %v808
        %v1025 = vpack.c.b16 %v825, %v817
        %v1026 = vpack.c.b16 %v826, %v818
        %v1027 = vpack.c.b16 %v827, %v819
        %v1028 = vpack.c.b16 %v828, %v820
        %v1029 = vpack.c.b16 %v829, %v821
        %v1030 = vpack.c.b16 %v830, %v822
        %v1031 = vpack.c.b16 %v831, %v823
        %v1032 = vpack.c.b16 %v832, %v824
        %v1033 = vpack.c.b16 %v841, %v833
        %v1034 = vpack.c.b16 %v842, %v834
        %v1035 = vpack.c.b16 %v843, %v835
        %v1036 = vpack.c.b16 %v844, %v836
        %v1037 = vpack.c.b16 %v845, %v837
        %v1038 = vpack.c.b16 %v846, %v838
        %v1039 = vpack.c.b16 %v847, %v839
        %v1040 = vpack.c.b16 %v848, %v840
        %v1041 = vpack.c.b16 %v857, %v849
        %v1042 = vpack.c.b16 %v858, %v850
        %v1043 = vpack.c.b16 %v859, %v851
        %v1044 = vpack.c.b16 %v860, %v852
        %v1045 = vpack.c.b16 %v861, %v853
        %v1046 = vpack.c.b16 %v862, %v854
        %v1047 = vpack.c.b16 %v863, %v855
        %v1048 = vpack.c.b16 %v864, %v856
        %v1049 = vpack.c.b16 %v873, %v865
        %v1050 = vpack.c.b16 %v874, %v866
        %v1051 = vpack.c.b16 %v875, %v867
        %v1052 = vpack.c.b16 %v876, %v868
        %v1053 = vpack.c.b16 %v877, %v869
        %v1054 = vpack.c.b16 %v878, %v870
        %v1055 = vpack.c.b16 %v879, %v871
        %v1056 = vpack.c.b16 %v880, %v872
        %v1057 = vpack.c.b16 %v889, %v881
        %v1058 = vpack.c.b16 %v890, %v882
        %v1059 = vpack.c.b16 %v891, %v883
        %v1060 = vpack.c.b16 %v892, %v884
        %v1061 = vpack.c.b16 %v893, %v885
        %v1062 = vpack.c.b16 %v894, %v886
        %v1063 = vpack.c.b16 %v895, %v887
        %v1064 = vpack.c.b16 %v896, %v888
        %v1065 = vpack.c.b16 %v905, %v897
        %v1066 = vpack.c.b16 %v906, %v898
        %v1067 = vpack.c.b16 %v907, %v899
        %v1068 = vpack.c.b16 %v908, %v900
        %v1069 = vpack.c.b16 %v909, %v901
        %v1070 = vpack.c.b16 %v910, %v902
        %v1071 = vpack.c.b16 %v911, %v903
        %v1072 = vpack.c.b16 %v912, %v904
        %v1073 = vpack.c.b16 %v921, %v913
        %v1074 = vpack.c.b16 %v922, %v914
        %v1075 = vpack.c.b16 %v923, %v915
        %v1076 = vpack.c.b16 %v924, %v916
        %v1077 = vpack.c.b16 %v925, %v917
        %v1078 = vpack.c.b16 %v926, %v918
        %v1079 = vpack.c.b16 %v927, %v919
        %v1080 = vpack.c.b16 %v928, %v920
        %v1081 = vpack.c.b16 %v937, %v929
        %v1082 = vpack.c.b16 %v938, %v930
        %v1083 = vpack.c.b16 %v939, %v931
        %v1084 = vpack.c.b16 %v940, %v932
        %v1085 = vpack.c.b16 %v941, %v933
        %v1086 = vpack.c.b16 %v942, %v934
        %v1087 = vpack.c.b16 %v943, %v935
        %v1088 = vpack.c.b16 %v944, %v936
        %v1089 = vpack.c.b16 %v953, %v945
        %v1090 = vpack.c.b16 %v954, %v946
        %v1091 = vpack.c.b16 %v955, %v947
        %v1092 = vpack.c.b16 %v956, %v948
        %v1093 = vpack.c.b16 %v957, %v949
        %v1094 = vpack.c.b16 %v958, %v950
        %v1095 = vpack.c.b16 %v959, %v951
        %v1096 = vpack.c.b16 %v960, %v952
        %v1097 = vpack.c.b16 %v969, %v961
        %v1098 = vpack.c.b16 %v970, %v962
        %v1099 = vpack.c.b16 %v971, %v963
        %v1100 = vpack.c.b16 %v972, %v964
        %v1101 = vpack.c.b16 %v973, %v965
        %v1102 = vpack.c.b16 %v974, %v966
        %v1103 = vpack.c.b16 %v975, %v967
        %v1104 = vpack.c.b16 %v976, %v968
        %1233 = vmatprep.subr.bf16.mxu0 %v978
        %1234 = vmatpush1.bf16.msra.mxu0 %v977
        %1235 = vmatprep.subr.bf16.mxu0 %v986
        %1236 = vmatpush1.bf16.msra.mxu0 %v985
        %1237 = vmatprep.subr.bf16.mxu0 %v994
        %1238 = vmatpush1.bf16.msra.mxu0 %v993
        %1239 = vmatprep.subr.bf16.mxu0 %v1002
        %1240 = vmatpush1.bf16.msra.mxu0 %v1001
        %1241 = vmatprep.subr.bf16.mxu0 %v1010
        %1242 = vmatpush1.bf16.msra.mxu0 %v1009
        %1243 = vmatprep.subr.bf16.mxu0 %v1018
        %1244 = vmatpush1.bf16.msra.mxu0 %v1017
        %1245 = vmatprep.subr.bf16.mxu0 %v1026
        %1246 = vmatpush1.bf16.msra.mxu0 %v1025
        %1247 = vmatprep.subr.bf16.mxu0 %v1034
        %1248 = vmatpush1.bf16.msra.mxu0 %v1033
        %1249 = vmatprep.subr.bf16.mxu0 %v1042
        %1250 = vmatpush1.bf16.msra.mxu0 %v1041
        %1251 = vmatprep.subr.bf16.mxu0 %v1050
        %1252 = vmatpush1.bf16.msra.mxu0 %v1049
        %1253 = vmatprep.subr.bf16.mxu0 %v1058
        %1254 = vmatpush1.bf16.msra.mxu0 %v1057
        %1255 = vmatprep.subr.bf16.mxu0 %v1066
        %1256 = vmatpush1.bf16.msra.mxu0 %v1065
        %1257 = vmatprep.subr.bf16.mxu0 %v1074
        %1258 = vmatpush1.bf16.msra.mxu0 %v1073
        %1259 = vmatprep.subr.bf16.mxu0 %v1082
        %1260 = vmatpush1.bf16.msra.mxu0 %v1081
        %1261 = vmatprep.subr.bf16.mxu0 %v1090
        %1262 = vmatpush1.bf16.msra.mxu0 %v1089
        %1263 = vmatprep.subr.bf16.mxu0 %v1098
        %1264 = vmatpush1.bf16.msra.mxu0 %v1097
        %1265 = vmatprep.mubr.bf16.mxu0 %v530
        %1266 = vmatmul.mubr.bf16.gmra.mrb[0].mxu0 %v529
        %v1267 = vpop.f32.mrb[0].mxu0
        %v1268 = vadd.f32 0.0, %v1267
        %v1269 = vpop.f32.mrb[0].mxu0
        %v1270 = vadd.f32 0.0, %v1269
        %v1271 = vpop.f32.mrb[0].mxu0
        %v1272 = vadd.f32 0.0, %v1271
        %v1273 = vpop.f32.mrb[0].mxu0
        %v1274 = vadd.f32 0.0, %v1273
        %1275 = vmatprep.mubr.bf16.mxu0 %v532
        %1276 = vmatmul.mubr.bf16.gmra.mrb[0].mxu0 %v531
        %v1277 = vpop.f32.mrb[0].mxu0
        %v1278 = vadd.f32 0.0, %v1277
        %v1279 = vpop.f32.mrb[0].mxu0
        %v1280 = vadd.f32 0.0, %v1279
        %v1281 = vpop.f32.mrb[0].mxu0
        %v1282 = vadd.f32 0.0, %v1281
        %v1283 = vpop.f32.mrb[0].mxu0
        %v1284 = vadd.f32 0.0, %v1283
        %1285 = vmatprep.mubr.bf16.mxu0 %v534
        %1286 = vmatmul.mubr.bf16.gmra.mrb[0].mxu0 %v533
        %v1287 = vpop.f32.mrb[0].mxu0
        %v1288 = vadd.f32 0.0, %v1287
        %v1289 = vpop.f32.mrb[0].mxu0
        %v1290 = vadd.f32 0.0, %v1289
        %v1291 = vpop.f32.mrb[0].mxu0
        %v1292 = vadd.f32 0.0, %v1291
        %v1293 = vpop.f32.mrb[0].mxu0
        %v1294 = vadd.f32 0.0, %v1293
        %1295 = vmatprep.mubr.bf16.mxu0 %v536
        %1296 = vmatmul.mubr.bf16.gmra.mrb[0].mxu0 %v535
        %v1297 = vpop.f32.mrb[0].mxu0
        %v1298 = vadd.f32 0.0, %v1297
        %v1299 = vpop.f32.mrb[0].mxu0
        %v1300 = vadd.f32 0.0, %v1299
        %v1301 = vpop.f32.mrb[0].mxu0
        %v1302 = vadd.f32 0.0, %v1301
        %v1303 = vpop.f32.mrb[0].mxu0
        %v1304 = vadd.f32 0.0, %v1303
        %1305 = vmatprep.mubr.bf16.mxu0 %v538
        %1306 = vmatmul.mubr.bf16.gmra.mrb[0].mxu0 %v537
        %v1307 = vpop.f32.mrb[0].mxu0
        %v1308 = vadd.f32 0.0, %v1307
        %v1309 = vpop.f32.mrb[0].mxu0
        %v1310 = vadd.f32 0.0, %v1309
        %v1311 = vpop.f32.mrb[0].mxu0
        %v1312 = vadd.f32 0.0, %v1311
        %v1313 = vpop.f32.mrb[0].mxu0
        %v1314 = vadd.f32 0.0, %v1313
        %1315 = vmatprep.mubr.bf16.mxu0 %v540
        %1316 = vmatmul.mubr.bf16.gmra.mrb[0].mxu0 %v539
        %v1317 = vpop.f32.mrb[0].mxu0
        %v1318 = vadd.f32 0.0, %v1317
        %v1319 = vpop.f32.mrb[0].mxu0
        %v1320 = vadd.f32 0.0, %v1319
        %v1321 = vpop.f32.mrb[0].mxu0
        %v1322 = vadd.f32 0.0, %v1321
        %v1323 = vpop.f32.mrb[0].mxu0
        %v1324 = vadd.f32 0.0, %v1323
        %1325 = vmatprep.mubr.bf16.mxu0 %v542
        %1326 = vmatmul.mubr.bf16.gmra.mrb[0].mxu0 %v541
        %v1327 = vpop.f32.mrb[0].mxu0
        %v1328 = vadd.f32 0.0, %v1327
        %v1329 = vpop.f32.mrb[0].mxu0
        %v1330 = vadd.f32 0.0, %v1329
        %v1331 = vpop.f32.mrb[0].mxu0
        %v1332 = vadd.f32 0.0, %v1331
        %v1333 = vpop.f32.mrb[0].mxu0
        %v1334 = vadd.f32 0.0, %v1333
        %1335 = vmatprep.mubr.bf16.mxu0 %v544
        %1336 = vmatmul.mubr.bf16.gmra.mrb[0].mxu0 %v543
        %v1337 = vpop.f32.mrb[0].mxu0
        %v1338 = vadd.f32 0.0, %v1337
        %v1339 = vpop.f32.mrb[0].mxu0
        %v1340 = vadd.f32 0.0, %v1339
        %v1341 = vpop.f32.mrb[0].mxu0
        %v1342 = vadd.f32 0.0, %v1341
        %v1343 = vpop.f32.mrb[0].mxu0
        %v1344 = vadd.f32 0.0, %v1343
        %1345 = vmatprep.mubr.bf16.mxu0 %v546
        %1346 = vmatmul.mubr.bf16.gmra.mrb[0].mxu0 %v545
        %v1347 = vpop.f32.mrb[0].mxu0
        %v1348 = vadd.f32 0.0, %v1347
        %v1349 = vpop.f32.mrb[0].mxu0
        %v1350 = vadd.f32 0.0, %v1349
        %v1351 = vpop.f32.mrb[0].mxu0
        %v1352 = vadd.f32 0.0, %v1351
        %v1353 = vpop.f32.mrb[0].mxu0
        %v1354 = vadd.f32 0.0, %v1353
        %1355 = vmatprep.mubr.bf16.mxu0 %v548
        %1356 = vmatmul.mubr.bf16.gmra.mrb[0].mxu0 %v547
        %v1357 = vpop.f32.mrb[0].mxu0
        %v1358 = vadd.f32 0.0, %v1357
        %v1359 = vpop.f32.mrb[0].mxu0
        %v1360 = vadd.f32 0.0, %v1359
        %v1361 = vpop.f32.mrb[0].mxu0
        %v1362 = vadd.f32 0.0, %v1361
        %v1363 = vpop.f32.mrb[0].mxu0
        %v1364 = vadd.f32 0.0, %v1363
        %1365 = vmatprep.mubr.bf16.mxu0 %v550
        %1366 = vmatmul.mubr.bf16.gmra.mrb[0].mxu0 %v549
        %v1367 = vpop.f32.mrb[0].mxu0
        %v1368 = vadd.f32 0.0, %v1367
        %v1369 = vpop.f32.mrb[0].mxu0
        %v1370 = vadd.f32 0.0, %v1369
        %v1371 = vpop.f32.mrb[0].mxu0
        %v1372 = vadd.f32 0.0, %v1371
        %v1373 = vpop.f32.mrb[0].mxu0
        %v1374 = vadd.f32 0.0, %v1373
        %1375 = vmatprep.mubr.bf16.mxu0 %v552
        %1376 = vmatmul.mubr.bf16.gmra.mrb[0].mxu0 %v551
        %v1377 = vpop.f32.mrb[0].mxu0
        %v1378 = vadd.f32 0.0, %v1377
        %v1379 = vpop.f32.mrb[0].mxu0
        %v1380 = vadd.f32 0.0, %v1379
        %v1381 = vpop.f32.mrb[0].mxu0
        %v1382 = vadd.f32 0.0, %v1381
        %v1383 = vpop.f32.mrb[0].mxu0
        %v1384 = vadd.f32 0.0, %v1383
        %1385 = vmatprep.mubr.bf16.mxu0 %v554
        %1386 = vmatmul.mubr.bf16.gmra.mrb[0].mxu0 %v553
        %v1387 = vpop.f32.mrb[0].mxu0
        %v1388 = vadd.f32 0.0, %v1387
        %v1389 = vpop.f32.mrb[0].mxu0
        %v1390 = vadd.f32 0.0, %v1389
        %v1391 = vpop.f32.mrb[0].mxu0
        %v1392 = vadd.f32 0.0, %v1391
        %v1393 = vpop.f32.mrb[0].mxu0
        %v1394 = vadd.f32 0.0, %v1393
        %1395 = vmatprep.mubr.bf16.mxu0 %v556
        %1396 = vmatmul.mubr.bf16.gmra.mrb[0].mxu0 %v555
        %v1397 = vpop.f32.mrb[0].mxu0
        %v1398 = vadd.f32 0.0, %v1397
        %v1399 = vpop.f32.mrb[0].mxu0
        %v1400 = vadd.f32 0.0, %v1399
        %v1401 = vpop.f32.mrb[0].mxu0
        %v1402 = vadd.f32 0.0, %v1401
        %v1403 = vpop.f32.mrb[0].mxu0
        %v1404 = vadd.f32 0.0, %v1403
        %1405 = vmatprep.mubr.bf16.mxu0 %v558
        %1406 = vmatmul.mubr.bf16.gmra.mrb[0].mxu0 %v557
        %v1407 = vpop.f32.mrb[0].mxu0
        %v1408 = vadd.f32 0.0, %v1407
        %v1409 = vpop.f32.mrb[0].mxu0
        %v1410 = vadd.f32 0.0, %v1409
        %v1411 = vpop.f32.mrb[0].mxu0
        %v1412 = vadd.f32 0.0, %v1411
        %v1413 = vpop.f32.mrb[0].mxu0
        %v1414 = vadd.f32 0.0, %v1413
        %1415 = vmatprep.mubr.bf16.mxu0 %v560
        %1416 = vmatmul.mubr.bf16.gmra.mrb[0].mxu0 %v559
        %v1417 = vpop.f32.mrb[0].mxu0
        %v1418 = vadd.f32 0.0, %v1417
        %v1419 = vpop.f32.mrb[0].mxu0
        %v1420 = vadd.f32 0.0, %v1419
        %v1421 = vpop.f32.mrb[0].mxu0
        %v1422 = vadd.f32 0.0, %v1421
        %v1423 = vpop.f32.mrb[0].mxu0
        %v1424 = vadd.f32 0.0, %v1423
        %1425 = vdwg.mxu0
        %1426 = vmatprep.subr.bf16.mxu0 %v980
        %1427 = vmatpush1.bf16.msra.mxu0 %v979
        %1428 = vmatprep.subr.bf16.mxu0 %v988
        %1429 = vmatpush1.bf16.msra.mxu0 %v987
        %1430 = vmatprep.subr.bf16.mxu0 %v996
        %1431 = vmatpush1.bf16.msra.mxu0 %v995
        %1432 = vmatprep.subr.bf16.mxu0 %v1004
        %1433 = vmatpush1.bf16.msra.mxu0 %v1003
        %1434 = vmatprep.subr.bf16.mxu0 %v1012
        %1435 = vmatpush1.bf16.msra.mxu0 %v1011
        %1436 = vmatprep.subr.bf16.mxu0 %v1020
        %1437 = vmatpush1.bf16.msra.mxu0 %v1019
        %1438 = vmatprep.subr.bf16.mxu0 %v1028
        %1439 = vmatpush1.bf16.msra.mxu0 %v1027
        %1440 = vmatprep.subr.bf16.mxu0 %v1036
        %1441 = vmatpush1.bf16.msra.mxu0 %v1035
        %1442 = vmatprep.subr.bf16.mxu0 %v1044
        %1443 = vmatpush1.bf16.msra.mxu0 %v1043
        %1444 = vmatprep.subr.bf16.mxu0 %v1052
        %1445 = vmatpush1.bf16.msra.mxu0 %v1051
        %1446 = vmatprep.subr.bf16.mxu0 %v1060
        %1447 = vmatpush1.bf16.msra.mxu0 %v1059
        %1448 = vmatprep.subr.bf16.mxu0 %v1068
        %1449 = vmatpush1.bf16.msra.mxu0 %v1067
        %1450 = vmatprep.subr.bf16.mxu0 %v1076
        %1451 = vmatpush1.bf16.msra.mxu0 %v1075
        %1452 = vmatprep.subr.bf16.mxu0 %v1084
        %1453 = vmatpush1.bf16.msra.mxu0 %v1083
        %1454 = vmatprep.subr.bf16.mxu0 %v1092
        %1455 = vmatpush1.bf16.msra.mxu0 %v1091
        %1456 = vmatprep.subr.bf16.mxu0 %v1100
        %1457 = vmatpush1.bf16.msra.mxu0 %v1099
        %1458 = vmatprep.mubr.bf16.mxu0 %v530
        %1459 = vmatmul.mubr.bf16.gmra.mrb[0].mxu0 %v529
        %v1460 = vpop.f32.mrb[0].mxu0
        %v1461 = vadd.f32 0.0, %v1460
        %v1462 = vpop.f32.mrb[0].mxu0
        %v1463 = vadd.f32 0.0, %v1462
        %v1464 = vpop.f32.mrb[0].mxu0
        %v1465 = vadd.f32 0.0, %v1464
        %v1466 = vpop.f32.mrb[0].mxu0
        %v1467 = vadd.f32 0.0, %v1466
        %1468 = vmatprep.mubr.bf16.mxu0 %v532
        %1469 = vmatmul.mubr.bf16.gmra.mrb[0].mxu0 %v531
        %v1470 = vpop.f32.mrb[0].mxu0
        %v1471 = vadd.f32 0.0, %v1470
        %v1472 = vpop.f32.mrb[0].mxu0
        %v1473 = vadd.f32 0.0, %v1472
        %v1474 = vpop.f32.mrb[0].mxu0
        %v1475 = vadd.f32 0.0, %v1474
        %v1476 = vpop.f32.mrb[0].mxu0
        %v1477 = vadd.f32 0.0, %v1476
        %1478 = vmatprep.mubr.bf16.mxu0 %v534
        %1479 = vmatmul.mubr.bf16.gmra.mrb[0].mxu0 %v533
        %v1480 = vpop.f32.mrb[0].mxu0
        %v1481 = vadd.f32 0.0, %v1480
        %v1482 = vpop.f32.mrb[0].mxu0
        %v1483 = vadd.f32 0.0, %v1482
        %v1484 = vpop.f32.mrb[0].mxu0
        %v1485 = vadd.f32 0.0, %v1484
        %v1486 = vpop.f32.mrb[0].mxu0
        %v1487 = vadd.f32 0.0, %v1486
        %1488 = vmatprep.mubr.bf16.mxu0 %v536
        %1489 = vmatmul.mubr.bf16.gmra.mrb[0].mxu0 %v535
        %v1490 = vpop.f32.mrb[0].mxu0
        %v1491 = vadd.f32 0.0, %v1490
        %v1492 = vpop.f32.mrb[0].mxu0
        %v1493 = vadd.f32 0.0, %v1492
        %v1494 = vpop.f32.mrb[0].mxu0
        %v1495 = vadd.f32 0.0, %v1494
        %v1496 = vpop.f32.mrb[0].mxu0
        %v1497 = vadd.f32 0.0, %v1496
        %1498 = vmatprep.mubr.bf16.mxu0 %v538
        %1499 = vmatmul.mubr.bf16.gmra.mrb[0].mxu0 %v537
        %v1500 = vpop.f32.mrb[0].mxu0
        %v1501 = vadd.f32 0.0, %v1500
        %v1502 = vpop.f32.mrb[0].mxu0
        %v1503 = vadd.f32 0.0, %v1502
        %v1504 = vpop.f32.mrb[0].mxu0
        %v1505 = vadd.f32 0.0, %v1504
        %v1506 = vpop.f32.mrb[0].mxu0
        %v1507 = vadd.f32 0.0, %v1506
        %1508 = vmatprep.mubr.bf16.mxu0 %v540
        %1509 = vmatmul.mubr.bf16.gmra.mrb[0].mxu0 %v539
        %v1510 = vpop.f32.mrb[0].mxu0
        %v1511 = vadd.f32 0.0, %v1510
        %v1512 = vpop.f32.mrb[0].mxu0
        %v1513 = vadd.f32 0.0, %v1512
        %v1514 = vpop.f32.mrb[0].mxu0
        %v1515 = vadd.f32 0.0, %v1514
        %v1516 = vpop.f32.mrb[0].mxu0
        %v1517 = vadd.f32 0.0, %v1516
        %1518 = vmatprep.mubr.bf16.mxu0 %v542
        %1519 = vmatmul.mubr.bf16.gmra.mrb[0].mxu0 %v541
        %v1520 = vpop.f32.mrb[0].mxu0
        %v1521 = vadd.f32 0.0, %v1520
        %v1522 = vpop.f32.mrb[0].mxu0
        %v1523 = vadd.f32 0.0, %v1522
        %v1524 = vpop.f32.mrb[0].mxu0
        %v1525 = vadd.f32 0.0, %v1524
        %v1526 = vpop.f32.mrb[0].mxu0
        %v1527 = vadd.f32 0.0, %v1526
        %1528 = vmatprep.mubr.bf16.mxu0 %v544
        %1529 = vmatmul.mubr.bf16.gmra.mrb[0].mxu0 %v543
        %v1530 = vpop.f32.mrb[0].mxu0
        %v1531 = vadd.f32 0.0, %v1530
        %v1532 = vpop.f32.mrb[0].mxu0
        %v1533 = vadd.f32 0.0, %v1532
        %v1534 = vpop.f32.mrb[0].mxu0
        %v1535 = vadd.f32 0.0, %v1534
        %v1536 = vpop.f32.mrb[0].mxu0
        %v1537 = vadd.f32 0.0, %v1536
        %1538 = vmatprep.mubr.bf16.mxu0 %v546
        %1539 = vmatmul.mubr.bf16.gmra.mrb[0].mxu0 %v545
        %v1540 = vpop.f32.mrb[0].mxu0
        %v1541 = vadd.f32 0.0, %v1540
        %v1542 = vpop.f32.mrb[0].mxu0
        %v1543 = vadd.f32 0.0, %v1542
        %v1544 = vpop.f32.mrb[0].mxu0
        %v1545 = vadd.f32 0.0, %v1544
        %v1546 = vpop.f32.mrb[0].mxu0
        %v1547 = vadd.f32 0.0, %v1546
        %1548 = vmatprep.mubr.bf16.mxu0 %v548
        %1549 = vmatmul.mubr.bf16.gmra.mrb[0].mxu0 %v547
        %v1550 = vpop.f32.mrb[0].mxu0
        %v1551 = vadd.f32 0.0, %v1550
        %v1552 = vpop.f32.mrb[0].mxu0
        %v1553 = vadd.f32 0.0, %v1552
        %v1554 = vpop.f32.mrb[0].mxu0
        %v1555 = vadd.f32 0.0, %v1554
        %v1556 = vpop.f32.mrb[0].mxu0
        %v1557 = vadd.f32 0.0, %v1556
        %1558 = vmatprep.mubr.bf16.mxu0 %v550
        %1559 = vmatmul.mubr.bf16.gmra.mrb[0].mxu0 %v549
        %v1560 = vpop.f32.mrb[0].mxu0
        %v1561 = vadd.f32 0.0, %v1560
        %v1562 = vpop.f32.mrb[0].mxu0
        %v1563 = vadd.f32 0.0, %v1562
        %v1564 = vpop.f32.mrb[0].mxu0
        %v1565 = vadd.f32 0.0, %v1564
        %v1566 = vpop.f32.mrb[0].mxu0
        %v1567 = vadd.f32 0.0, %v1566
        %1568 = vmatprep.mubr.bf16.mxu0 %v552
        %1569 = vmatmul.mubr.bf16.gmra.mrb[0].mxu0 %v551
        %v1570 = vpop.f32.mrb[0].mxu0
        %v1571 = vadd.f32 0.0, %v1570
        %v1572 = vpop.f32.mrb[0].mxu0
        %v1573 = vadd.f32 0.0, %v1572
        %v1574 = vpop.f32.mrb[0].mxu0
        %v1575 = vadd.f32 0.0, %v1574
        %v1576 = vpop.f32.mrb[0].mxu0
        %v1577 = vadd.f32 0.0, %v1576
        %1578 = vmatprep.mubr.bf16.mxu0 %v554
        %1579 = vmatmul.mubr.bf16.gmra.mrb[0].mxu0 %v553
        %v1580 = vpop.f32.mrb[0].mxu0
        %v1581 = vadd.f32 0.0, %v1580
        %v1582 = vpop.f32.mrb[0].mxu0
        %v1583 = vadd.f32 0.0, %v1582
        %v1584 = vpop.f32.mrb[0].mxu0
        %v1585 = vadd.f32 0.0, %v1584
        %v1586 = vpop.f32.mrb[0].mxu0
        %v1587 = vadd.f32 0.0, %v1586
        %1588 = vmatprep.mubr.bf16.mxu0 %v556
        %1589 = vmatmul.mubr.bf16.gmra.mrb[0].mxu0 %v555
        %v1590 = vpop.f32.mrb[0].mxu0
        %v1591 = vadd.f32 0.0, %v1590
        %v1592 = vpop.f32.mrb[0].mxu0
        %v1593 = vadd.f32 0.0, %v1592
        %v1594 = vpop.f32.mrb[0].mxu0
        %v1595 = vadd.f32 0.0, %v1594
        %v1596 = vpop.f32.mrb[0].mxu0
        %v1597 = vadd.f32 0.0, %v1596
        %1598 = vmatprep.mubr.bf16.mxu0 %v558
        %1599 = vmatmul.mubr.bf16.gmra.mrb[0].mxu0 %v557
        %v1600 = vpop.f32.mrb[0].mxu0
        %v1601 = vadd.f32 0.0, %v1600
        %v1602 = vpop.f32.mrb[0].mxu0
        %v1603 = vadd.f32 0.0, %v1602
        %v1604 = vpop.f32.mrb[0].mxu0
        %v1605 = vadd.f32 0.0, %v1604
        %v1606 = vpop.f32.mrb[0].mxu0
        %v1607 = vadd.f32 0.0, %v1606
        %1608 = vmatprep.mubr.bf16.mxu0 %v560
        %1609 = vmatmul.mubr.bf16.gmra.mrb[0].mxu0 %v559
        %v1610 = vpop.f32.mrb[0].mxu0
        %v1611 = vadd.f32 0.0, %v1610
        %v1612 = vpop.f32.mrb[0].mxu0
        %v1613 = vadd.f32 0.0, %v1612
        %v1614 = vpop.f32.mrb[0].mxu0
        %v1615 = vadd.f32 0.0, %v1614
        %v1616 = vpop.f32.mrb[0].mxu0
        %v1617 = vadd.f32 0.0, %v1616
        %1618 = vdwg.mxu0
        %1619 = vmatprep.subr.bf16.mxu0 %v982
        %1620 = vmatpush1.bf16.msra.mxu0 %v981
        %1621 = vmatprep.subr.bf16.mxu0 %v990
        %1622 = vmatpush1.bf16.msra.mxu0 %v989
        %1623 = vmatprep.subr.bf16.mxu0 %v998
        %1624 = vmatpush1.bf16.msra.mxu0 %v997
        %1625 = vmatprep.subr.bf16.mxu0 %v1006
        %1626 = vmatpush1.bf16.msra.mxu0 %v1005
        %1627 = vmatprep.subr.bf16.mxu0 %v1014
        %1628 = vmatpush1.bf16.msra.mxu0 %v1013
        %1629 = vmatprep.subr.bf16.mxu0 %v1022
        %1630 = vmatpush1.bf16.msra.mxu0 %v1021
        %1631 = vmatprep.subr.bf16.mxu0 %v1030
        %1632 = vmatpush1.bf16.msra.mxu0 %v1029
        %1633 = vmatprep.subr.bf16.mxu0 %v1038
        %1634 = vmatpush1.bf16.msra.mxu0 %v1037
        %1635 = vmatprep.subr.bf16.mxu0 %v1046
        %1636 = vmatpush1.bf16.msra.mxu0 %v1045
        %1637 = vmatprep.subr.bf16.mxu0 %v1054
        %1638 = vmatpush1.bf16.msra.mxu0 %v1053
        %1639 = vmatprep.subr.bf16.mxu0 %v1062
        %1640 = vmatpush1.bf16.msra.mxu0 %v1061
        %1641 = vmatprep.subr.bf16.mxu0 %v1070
        %1642 = vmatpush1.bf16.msra.mxu0 %v1069
        %1643 = vmatprep.subr.bf16.mxu0 %v1078
        %1644 = vmatpush1.bf16.msra.mxu0 %v1077
        %1645 = vmatprep.subr.bf16.mxu0 %v1086
        %1646 = vmatpush1.bf16.msra.mxu0 %v1085
        %1647 = vmatprep.subr.bf16.mxu0 %v1094
        %1648 = vmatpush1.bf16.msra.mxu0 %v1093
        %1649 = vmatprep.subr.bf16.mxu0 %v1102
        %1650 = vmatpush1.bf16.msra.mxu0 %v1101
        %1651 = vmatprep.mubr.bf16.mxu0 %v530
        %1652 = vmatmul.mubr.bf16.gmra.mrb[0].mxu0 %v529
        %v1653 = vpop.f32.mrb[0].mxu0
        %v1654 = vadd.f32 0.0, %v1653
        %v1655 = vpop.f32.mrb[0].mxu0
        %v1656 = vadd.f32 0.0, %v1655
        %v1657 = vpop.f32.mrb[0].mxu0
        %v1658 = vadd.f32 0.0, %v1657
        %v1659 = vpop.f32.mrb[0].mxu0
        %v1660 = vadd.f32 0.0, %v1659
        %1661 = vmatprep.mubr.bf16.mxu0 %v532
        %1662 = vmatmul.mubr.bf16.gmra.mrb[0].mxu0 %v531
        %v1663 = vpop.f32.mrb[0].mxu0
        %v1664 = vadd.f32 0.0, %v1663
        %v1665 = vpop.f32.mrb[0].mxu0
        %v1666 = vadd.f32 0.0, %v1665
        %v1667 = vpop.f32.mrb[0].mxu0
        %v1668 = vadd.f32 0.0, %v1667
        %v1669 = vpop.f32.mrb[0].mxu0
        %v1670 = vadd.f32 0.0, %v1669
        %1671 = vmatprep.mubr.bf16.mxu0 %v534
        %1672 = vmatmul.mubr.bf16.gmra.mrb[0].mxu0 %v533
        %v1673 = vpop.f32.mrb[0].mxu0
        %v1674 = vadd.f32 0.0, %v1673
        %v1675 = vpop.f32.mrb[0].mxu0
        %v1676 = vadd.f32 0.0, %v1675
        %v1677 = vpop.f32.mrb[0].mxu0
        %v1678 = vadd.f32 0.0, %v1677
        %v1679 = vpop.f32.mrb[0].mxu0
        %v1680 = vadd.f32 0.0, %v1679
        %1681 = vmatprep.mubr.bf16.mxu0 %v536
        %1682 = vmatmul.mubr.bf16.gmra.mrb[0].mxu0 %v535
        %v1683 = vpop.f32.mrb[0].mxu0
        %v1684 = vadd.f32 0.0, %v1683
        %v1685 = vpop.f32.mrb[0].mxu0
        %v1686 = vadd.f32 0.0, %v1685
        %v1687 = vpop.f32.mrb[0].mxu0
        %v1688 = vadd.f32 0.0, %v1687
        %v1689 = vpop.f32.mrb[0].mxu0
        %v1690 = vadd.f32 0.0, %v1689
        %1691 = vmatprep.mubr.bf16.mxu0 %v538
        %1692 = vmatmul.mubr.bf16.gmra.mrb[0].mxu0 %v537
        %v1693 = vpop.f32.mrb[0].mxu0
        %v1694 = vadd.f32 0.0, %v1693
        %v1695 = vpop.f32.mrb[0].mxu0
        %v1696 = vadd.f32 0.0, %v1695
        %v1697 = vpop.f32.mrb[0].mxu0
        %v1698 = vadd.f32 0.0, %v1697
        %v1699 = vpop.f32.mrb[0].mxu0
        %v1700 = vadd.f32 0.0, %v1699
        %1701 = vmatprep.mubr.bf16.mxu0 %v540
        %1702 = vmatmul.mubr.bf16.gmra.mrb[0].mxu0 %v539
        %v1703 = vpop.f32.mrb[0].mxu0
        %v1704 = vadd.f32 0.0, %v1703
        %v1705 = vpop.f32.mrb[0].mxu0
        %v1706 = vadd.f32 0.0, %v1705
        %v1707 = vpop.f32.mrb[0].mxu0
        %v1708 = vadd.f32 0.0, %v1707
        %v1709 = vpop.f32.mrb[0].mxu0
        %v1710 = vadd.f32 0.0, %v1709
        %1711 = vmatprep.mubr.bf16.mxu0 %v542
        %1712 = vmatmul.mubr.bf16.gmra.mrb[0].mxu0 %v541
        %v1713 = vpop.f32.mrb[0].mxu0
        %v1714 = vadd.f32 0.0, %v1713
        %v1715 = vpop.f32.mrb[0].mxu0
        %v1716 = vadd.f32 0.0, %v1715
        %v1717 = vpop.f32.mrb[0].mxu0
        %v1718 = vadd.f32 0.0, %v1717
        %v1719 = vpop.f32.mrb[0].mxu0
        %v1720 = vadd.f32 0.0, %v1719
        %1721 = vmatprep.mubr.bf16.mxu0 %v544
        %1722 = vmatmul.mubr.bf16.gmra.mrb[0].mxu0 %v543
        %v1723 = vpop.f32.mrb[0].mxu0
        %v1724 = vadd.f32 0.0, %v1723
        %v1725 = vpop.f32.mrb[0].mxu0
        %v1726 = vadd.f32 0.0, %v1725
        %v1727 = vpop.f32.mrb[0].mxu0
        %v1728 = vadd.f32 0.0, %v1727
        %v1729 = vpop.f32.mrb[0].mxu0
        %v1730 = vadd.f32 0.0, %v1729
        %1731 = vmatprep.mubr.bf16.mxu0 %v546
        %1732 = vmatmul.mubr.bf16.gmra.mrb[0].mxu0 %v545
        %v1733 = vpop.f32.mrb[0].mxu0
        %v1734 = vadd.f32 0.0, %v1733
        %v1735 = vpop.f32.mrb[0].mxu0
        %v1736 = vadd.f32 0.0, %v1735
        %v1737 = vpop.f32.mrb[0].mxu0
        %v1738 = vadd.f32 0.0, %v1737
        %v1739 = vpop.f32.mrb[0].mxu0
        %v1740 = vadd.f32 0.0, %v1739
        %1741 = vmatprep.mubr.bf16.mxu0 %v548
        %1742 = vmatmul.mubr.bf16.gmra.mrb[0].mxu0 %v547
        %v1743 = vpop.f32.mrb[0].mxu0
        %v1744 = vadd.f32 0.0, %v1743
        %v1745 = vpop.f32.mrb[0].mxu0
        %v1746 = vadd.f32 0.0, %v1745
        %v1747 = vpop.f32.mrb[0].mxu0
        %v1748 = vadd.f32 0.0, %v1747
        %v1749 = vpop.f32.mrb[0].mxu0
        %v1750 = vadd.f32 0.0, %v1749
        %1751 = vmatprep.mubr.bf16.mxu0 %v550
        %1752 = vmatmul.mubr.bf16.gmra.mrb[0].mxu0 %v549
        %v1753 = vpop.f32.mrb[0].mxu0
        %v1754 = vadd.f32 0.0, %v1753
        %v1755 = vpop.f32.mrb[0].mxu0
        %v1756 = vadd.f32 0.0, %v1755
        %v1757 = vpop.f32.mrb[0].mxu0
        %v1758 = vadd.f32 0.0, %v1757
        %v1759 = vpop.f32.mrb[0].mxu0
        %v1760 = vadd.f32 0.0, %v1759
        %1761 = vmatprep.mubr.bf16.mxu0 %v552
        %1762 = vmatmul.mubr.bf16.gmra.mrb[0].mxu0 %v551
        %v1763 = vpop.f32.mrb[0].mxu0
        %v1764 = vadd.f32 0.0, %v1763
        %v1765 = vpop.f32.mrb[0].mxu0
        %v1766 = vadd.f32 0.0, %v1765
        %v1767 = vpop.f32.mrb[0].mxu0
        %v1768 = vadd.f32 0.0, %v1767
        %v1769 = vpop.f32.mrb[0].mxu0
        %v1770 = vadd.f32 0.0, %v1769
        %1771 = vmatprep.mubr.bf16.mxu0 %v554
        %1772 = vmatmul.mubr.bf16.gmra.mrb[0].mxu0 %v553
        %v1773 = vpop.f32.mrb[0].mxu0
        %v1774 = vadd.f32 0.0, %v1773
        %v1775 = vpop.f32.mrb[0].mxu0
        %v1776 = vadd.f32 0.0, %v1775
        %v1777 = vpop.f32.mrb[0].mxu0
        %v1778 = vadd.f32 0.0, %v1777
        %v1779 = vpop.f32.mrb[0].mxu0
        %v1780 = vadd.f32 0.0, %v1779
        %1781 = vmatprep.mubr.bf16.mxu0 %v556
        %1782 = vmatmul.mubr.bf16.gmra.mrb[0].mxu0 %v555
        %v1783 = vpop.f32.mrb[0].mxu0
        %v1784 = vadd.f32 0.0, %v1783
        %v1785 = vpop.f32.mrb[0].mxu0
        %v1786 = vadd.f32 0.0, %v1785
        %v1787 = vpop.f32.mrb[0].mxu0
        %v1788 = vadd.f32 0.0, %v1787
        %v1789 = vpop.f32.mrb[0].mxu0
        %v1790 = vadd.f32 0.0, %v1789
        %1791 = vmatprep.mubr.bf16.mxu0 %v558
        %1792 = vmatmul.mubr.bf16.gmra.mrb[0].mxu0 %v557
        %v1793 = vpop.f32.mrb[0].mxu0
        %v1794 = vadd.f32 0.0, %v1793
        %v1795 = vpop.f32.mrb[0].mxu0
        %v1796 = vadd.f32 0.0, %v1795
        %v1797 = vpop.f32.mrb[0].mxu0
        %v1798 = vadd.f32 0.0, %v1797
        %v1799 = vpop.f32.mrb[0].mxu0
        %v1800 = vadd.f32 0.0, %v1799
        %1801 = vmatprep.mubr.bf16.mxu0 %v560
        %1802 = vmatmul.mubr.bf16.gmra.mrb[0].mxu0 %v559
        %v1803 = vpop.f32.mrb[0].mxu0
        %v1804 = vadd.f32 0.0, %v1803
        %v1805 = vpop.f32.mrb[0].mxu0
        %v1806 = vadd.f32 0.0, %v1805
        %v1807 = vpop.f32.mrb[0].mxu0
        %v1808 = vadd.f32 0.0, %v1807
        %v1809 = vpop.f32.mrb[0].mxu0
        %v1810 = vadd.f32 0.0, %v1809
        %1811 = vdwg.mxu0
        %1812 = vmatprep.subr.bf16.mxu0 %v984
        %1813 = vmatpush1.bf16.msra.mxu0 %v983
        %1814 = vmatprep.subr.bf16.mxu0 %v992
        %1815 = vmatpush1.bf16.msra.mxu0 %v991
        %1816 = vmatprep.subr.bf16.mxu0 %v1000
        %1817 = vmatpush1.bf16.msra.mxu0 %v999
        %1818 = vmatprep.subr.bf16.mxu0 %v1008
        %1819 = vmatpush1.bf16.msra.mxu0 %v1007
        %1820 = vmatprep.subr.bf16.mxu0 %v1016
        %1821 = vmatpush1.bf16.msra.mxu0 %v1015
        %1822 = vmatprep.subr.bf16.mxu0 %v1024
        %1823 = vmatpush1.bf16.msra.mxu0 %v1023
        %1824 = vmatprep.subr.bf16.mxu0 %v1032
        %1825 = vmatpush1.bf16.msra.mxu0 %v1031
        %1826 = vmatprep.subr.bf16.mxu0 %v1040
        %1827 = vmatpush1.bf16.msra.mxu0 %v1039
        %1828 = vmatprep.subr.bf16.mxu0 %v1048
        %1829 = vmatpush1.bf16.msra.mxu0 %v1047
        %1830 = vmatprep.subr.bf16.mxu0 %v1056
        %1831 = vmatpush1.bf16.msra.mxu0 %v1055
        %1832 = vmatprep.subr.bf16.mxu0 %v1064
        %1833 = vmatpush1.bf16.msra.mxu0 %v1063
        %1834 = vmatprep.subr.bf16.mxu0 %v1072
        %1835 = vmatpush1.bf16.msra.mxu0 %v1071
        %1836 = vmatprep.subr.bf16.mxu0 %v1080
        %1837 = vmatpush1.bf16.msra.mxu0 %v1079
        %1838 = vmatprep.subr.bf16.mxu0 %v1088
        %1839 = vmatpush1.bf16.msra.mxu0 %v1087
        %1840 = vmatprep.subr.bf16.mxu0 %v1096
        %1841 = vmatpush1.bf16.msra.mxu0 %v1095
        %1842 = vmatprep.subr.bf16.mxu0 %v1104
        %1843 = vmatpush1.bf16.msra.mxu0 %v1103
        %1844 = vmatprep.mubr.bf16.mxu0 %v530
        %1845 = vmatmul.mubr.bf16.gmra.mrb[0].mxu0 %v529
        %v1846 = vpop.f32.mrb[0].mxu0
        %v1847 = vadd.f32 0.0, %v1846
        %v1848 = vpop.f32.mrb[0].mxu0
        %v1849 = vadd.f32 0.0, %v1848
        %v1850 = vpop.f32.mrb[0].mxu0
        %v1851 = vadd.f32 0.0, %v1850
        %v1852 = vpop.f32.mrb[0].mxu0
        %v1853 = vadd.f32 0.0, %v1852
        %1854 = vmatprep.mubr.bf16.mxu0 %v532
        %1855 = vmatmul.mubr.bf16.gmra.mrb[0].mxu0 %v531
        %v1856 = vpop.f32.mrb[0].mxu0
        %v1857 = vadd.f32 0.0, %v1856
        %v1858 = vpop.f32.mrb[0].mxu0
        %v1859 = vadd.f32 0.0, %v1858
        %v1860 = vpop.f32.mrb[0].mxu0
        %v1861 = vadd.f32 0.0, %v1860
        %v1862 = vpop.f32.mrb[0].mxu0
        %v1863 = vadd.f32 0.0, %v1862
        %1864 = vmatprep.mubr.bf16.mxu0 %v534
        %1865 = vmatmul.mubr.bf16.gmra.mrb[0].mxu0 %v533
        %v1866 = vpop.f32.mrb[0].mxu0
        %v1867 = vadd.f32 0.0, %v1866
        %v1868 = vpop.f32.mrb[0].mxu0
        %v1869 = vadd.f32 0.0, %v1868
        %v1870 = vpop.f32.mrb[0].mxu0
        %v1871 = vadd.f32 0.0, %v1870
        %v1872 = vpop.f32.mrb[0].mxu0
        %v1873 = vadd.f32 0.0, %v1872
        %1874 = vmatprep.mubr.bf16.mxu0 %v536
        %1875 = vmatmul.mubr.bf16.gmra.mrb[0].mxu0 %v535
        %v1876 = vpop.f32.mrb[0].mxu0
        %v1877 = vadd.f32 0.0, %v1876
        %v1878 = vpop.f32.mrb[0].mxu0
        %v1879 = vadd.f32 0.0, %v1878
        %v1880 = vpop.f32.mrb[0].mxu0
        %v1881 = vadd.f32 0.0, %v1880
        %v1882 = vpop.f32.mrb[0].mxu0
        %v1883 = vadd.f32 0.0, %v1882
        %1884 = vmatprep.mubr.bf16.mxu0 %v538
        %1885 = vmatmul.mubr.bf16.gmra.mrb[0].mxu0 %v537
        %v1886 = vpop.f32.mrb[0].mxu0
        %v1887 = vadd.f32 0.0, %v1886
        %v1888 = vpop.f32.mrb[0].mxu0
        %v1889 = vadd.f32 0.0, %v1888
        %v1890 = vpop.f32.mrb[0].mxu0
        %v1891 = vadd.f32 0.0, %v1890
        %v1892 = vpop.f32.mrb[0].mxu0
        %v1893 = vadd.f32 0.0, %v1892
        %1894 = vmatprep.mubr.bf16.mxu0 %v540
        %1895 = vmatmul.mubr.bf16.gmra.mrb[0].mxu0 %v539
        %v1896 = vpop.f32.mrb[0].mxu0
        %v1897 = vadd.f32 0.0, %v1896
        %v1898 = vpop.f32.mrb[0].mxu0
        %v1899 = vadd.f32 0.0, %v1898
        %v1900 = vpop.f32.mrb[0].mxu0
        %v1901 = vadd.f32 0.0, %v1900
        %v1902 = vpop.f32.mrb[0].mxu0
        %v1903 = vadd.f32 0.0, %v1902
        %1904 = vmatprep.mubr.bf16.mxu0 %v542
        %1905 = vmatmul.mubr.bf16.gmra.mrb[0].mxu0 %v541
        %v1906 = vpop.f32.mrb[0].mxu0
        %v1907 = vadd.f32 0.0, %v1906
        %v1908 = vpop.f32.mrb[0].mxu0
        %v1909 = vadd.f32 0.0, %v1908
        %v1910 = vpop.f32.mrb[0].mxu0
        %v1911 = vadd.f32 0.0, %v1910
        %v1912 = vpop.f32.mrb[0].mxu0
        %v1913 = vadd.f32 0.0, %v1912
        %1914 = vmatprep.mubr.bf16.mxu0 %v544
        %1915 = vmatmul.mubr.bf16.gmra.mrb[0].mxu0 %v543
        %v1916 = vpop.f32.mrb[0].mxu0
        %v1917 = vadd.f32 0.0, %v1916
        %v1918 = vpop.f32.mrb[0].mxu0
        %v1919 = vadd.f32 0.0, %v1918
        %v1920 = vpop.f32.mrb[0].mxu0
        %v1921 = vadd.f32 0.0, %v1920
        %v1922 = vpop.f32.mrb[0].mxu0
        %v1923 = vadd.f32 0.0, %v1922
        %1924 = vmatprep.mubr.bf16.mxu0 %v546
        %1925 = vmatmul.mubr.bf16.gmra.mrb[0].mxu0 %v545
        %v1926 = vpop.f32.mrb[0].mxu0
        %v1927 = vadd.f32 0.0, %v1926
        %v1928 = vpop.f32.mrb[0].mxu0
        %v1929 = vadd.f32 0.0, %v1928
        %v1930 = vpop.f32.mrb[0].mxu0
        %v1931 = vadd.f32 0.0, %v1930
        %v1932 = vpop.f32.mrb[0].mxu0
        %v1933 = vadd.f32 0.0, %v1932
        %1934 = vmatprep.mubr.bf16.mxu0 %v548
        %1935 = vmatmul.mubr.bf16.gmra.mrb[0].mxu0 %v547
        %v1936 = vpop.f32.mrb[0].mxu0
        %v1937 = vadd.f32 0.0, %v1936
        %v1938 = vpop.f32.mrb[0].mxu0
        %v1939 = vadd.f32 0.0, %v1938
        %v1940 = vpop.f32.mrb[0].mxu0
        %v1941 = vadd.f32 0.0, %v1940
        %v1942 = vpop.f32.mrb[0].mxu0
        %v1943 = vadd.f32 0.0, %v1942
        %1944 = vmatprep.mubr.bf16.mxu0 %v550
        %1945 = vmatmul.mubr.bf16.gmra.mrb[0].mxu0 %v549
        %v1946 = vpop.f32.mrb[0].mxu0
        %v1947 = vadd.f32 0.0, %v1946
        %v1948 = vpop.f32.mrb[0].mxu0
        %v1949 = vadd.f32 0.0, %v1948
        %v1950 = vpop.f32.mrb[0].mxu0
        %v1951 = vadd.f32 0.0, %v1950
        %v1952 = vpop.f32.mrb[0].mxu0
        %v1953 = vadd.f32 0.0, %v1952
        %1954 = vmatprep.mubr.bf16.mxu0 %v552
        %1955 = vmatmul.mubr.bf16.gmra.mrb[0].mxu0 %v551
        %v1956 = vpop.f32.mrb[0].mxu0
        %v1957 = vadd.f32 0.0, %v1956
        %v1958 = vpop.f32.mrb[0].mxu0
        %v1959 = vadd.f32 0.0, %v1958
        %v1960 = vpop.f32.mrb[0].mxu0
        %v1961 = vadd.f32 0.0, %v1960
        %v1962 = vpop.f32.mrb[0].mxu0
        %v1963 = vadd.f32 0.0, %v1962
        %1964 = vmatprep.mubr.bf16.mxu0 %v554
        %1965 = vmatmul.mubr.bf16.gmra.mrb[0].mxu0 %v553
        %v1966 = vpop.f32.mrb[0].mxu0
        %v1967 = vadd.f32 0.0, %v1966
        %v1968 = vpop.f32.mrb[0].mxu0
        %v1969 = vadd.f32 0.0, %v1968
        %v1970 = vpop.f32.mrb[0].mxu0
        %v1971 = vadd.f32 0.0, %v1970
        %v1972 = vpop.f32.mrb[0].mxu0
        %v1973 = vadd.f32 0.0, %v1972
        %1974 = vmatprep.mubr.bf16.mxu0 %v556
        %1975 = vmatmul.mubr.bf16.gmra.mrb[0].mxu0 %v555
        %v1976 = vpop.f32.mrb[0].mxu0
        %v1977 = vadd.f32 0.0, %v1976
        %v1978 = vpop.f32.mrb[0].mxu0
        %v1979 = vadd.f32 0.0, %v1978
        %v1980 = vpop.f32.mrb[0].mxu0
        %v1981 = vadd.f32 0.0, %v1980
        %v1982 = vpop.f32.mrb[0].mxu0
        %v1983 = vadd.f32 0.0, %v1982
        %1984 = vmatprep.mubr.bf16.mxu0 %v558
        %1985 = vmatmul.mubr.bf16.gmra.mrb[0].mxu0 %v557
        %v1986 = vpop.f32.mrb[0].mxu0
        %v1987 = vadd.f32 0.0, %v1986
        %v1988 = vpop.f32.mrb[0].mxu0
        %v1989 = vadd.f32 0.0, %v1988
        %v1990 = vpop.f32.mrb[0].mxu0
        %v1991 = vadd.f32 0.0, %v1990
        %v1992 = vpop.f32.mrb[0].mxu0
        %v1993 = vadd.f32 0.0, %v1992
        %1994 = vmatprep.mubr.bf16.mxu0 %v560
        %1995 = vmatmul.mubr.bf16.gmra.mrb[0].mxu0 %v559
        %v1996 = vpop.f32.mrb[0].mxu0
        %v1997 = vadd.f32 0.0, %v1996
        %v1998 = vpop.f32.mrb[0].mxu0
        %v1999 = vadd.f32 0.0, %v1998
        %v2000 = vpop.f32.mrb[0].mxu0
        %v2001 = vadd.f32 0.0, %v2000
        %v2002 = vpop.f32.mrb[0].mxu0
        %v2003 = vadd.f32 0.0, %v2002
        %2004 = vdwg.mxu0
        %v2005 = vxor.u32 %v1268, 2147483648
        %v2006 = vxor.u32 %v1270, 2147483648
        %v2007 = vxor.u32 %v1461, 2147483648
        %v2008 = vxor.u32 %v1463, 2147483648
        %v2009 = vxor.u32 %v1272, 2147483648
        %v2010 = vxor.u32 %v1274, 2147483648
        %v2011 = vxor.u32 %v1465, 2147483648
        %v2012 = vxor.u32 %v1467, 2147483648
        %v2013 = vxor.u32 %v1278, 2147483648
        %v2014 = vxor.u32 %v1280, 2147483648
        %v2015 = vxor.u32 %v1471, 2147483648
        %v2016 = vxor.u32 %v1473, 2147483648
        %v2017 = vxor.u32 %v1282, 2147483648
        %v2018 = vxor.u32 %v1284, 2147483648
        %v2019 = vxor.u32 %v1475, 2147483648
        %v2020 = vxor.u32 %v1477, 2147483648
        %v2021 = vxor.u32 %v1288, 2147483648
        %v2022 = vxor.u32 %v1290, 2147483648
        %v2023 = vxor.u32 %v1481, 2147483648
        %v2024 = vxor.u32 %v1483, 2147483648
        %v2025 = vxor.u32 %v1292, 2147483648
        %v2026 = vxor.u32 %v1294, 2147483648
        %v2027 = vxor.u32 %v1485, 2147483648
        %v2028 = vxor.u32 %v1487, 2147483648
        %v2029 = vxor.u32 %v1298, 2147483648
        %v2030 = vxor.u32 %v1300, 2147483648
        %v2031 = vxor.u32 %v1491, 2147483648
        %v2032 = vxor.u32 %v1493, 2147483648
        %v2033 = vxor.u32 %v1302, 2147483648
        %v2034 = vxor.u32 %v1304, 2147483648
        %v2035 = vxor.u32 %v1495, 2147483648
        %v2036 = vxor.u32 %v1497, 2147483648
        %v2037 = vxor.u32 %v1308, 2147483648
        %v2038 = vxor.u32 %v1310, 2147483648
        %v2039 = vxor.u32 %v1501, 2147483648
        %v2040 = vxor.u32 %v1503, 2147483648
        %v2041 = vxor.u32 %v1312, 2147483648
        %v2042 = vxor.u32 %v1314, 2147483648
        %v2043 = vxor.u32 %v1505, 2147483648
        %v2044 = vxor.u32 %v1507, 2147483648
        %v2045 = vxor.u32 %v1318, 2147483648
        %v2046 = vxor.u32 %v1320, 2147483648
        %v2047 = vxor.u32 %v1511, 2147483648
        %v2048 = vxor.u32 %v1513, 2147483648
        %v2049 = vxor.u32 %v1322, 2147483648
        %v2050 = vxor.u32 %v1324, 2147483648
        %v2051 = vxor.u32 %v1515, 2147483648
        %v2052 = vxor.u32 %v1517, 2147483648
        %v2053 = vxor.u32 %v1328, 2147483648
        %v2054 = vxor.u32 %v1330, 2147483648
        %v2055 = vxor.u32 %v1521, 2147483648
        %v2056 = vxor.u32 %v1523, 2147483648
        %v2057 = vxor.u32 %v1332, 2147483648
        %v2058 = vxor.u32 %v1334, 2147483648
        %v2059 = vxor.u32 %v1525, 2147483648
        %v2060 = vxor.u32 %v1527, 2147483648
        %v2061 = vxor.u32 %v1338, 2147483648
        %v2062 = vxor.u32 %v1340, 2147483648
        %v2063 = vxor.u32 %v1531, 2147483648
        %v2064 = vxor.u32 %v1533, 2147483648
        %v2065 = vxor.u32 %v1342, 2147483648
        %v2066 = vxor.u32 %v1344, 2147483648
        %v2067 = vxor.u32 %v1535, 2147483648
        %v2068 = vxor.u32 %v1537, 2147483648
        %v2069 = vxor.u32 %v1348, 2147483648
        %v2070 = vxor.u32 %v1350, 2147483648
        %v2071 = vxor.u32 %v1541, 2147483648
        %v2072 = vxor.u32 %v1543, 2147483648
        %v2073 = vxor.u32 %v1352, 2147483648
        %v2074 = vxor.u32 %v1354, 2147483648
        %v2075 = vxor.u32 %v1545, 2147483648
        %v2076 = vxor.u32 %v1547, 2147483648
        %v2077 = vxor.u32 %v1358, 2147483648
        %v2078 = vxor.u32 %v1360, 2147483648
        %v2079 = vxor.u32 %v1551, 2147483648
        %v2080 = vxor.u32 %v1553, 2147483648
        %v2081 = vxor.u32 %v1362, 2147483648
        %v2082 = vxor.u32 %v1364, 2147483648
        %v2083 = vxor.u32 %v1555, 2147483648
        %v2084 = vxor.u32 %v1557, 2147483648
        %v2085 = vxor.u32 %v1368, 2147483648
        %v2086 = vxor.u32 %v1370, 2147483648
        %v2087 = vxor.u32 %v1561, 2147483648
        %v2088 = vxor.u32 %v1563, 2147483648
        %v2089 = vxor.u32 %v1372, 2147483648
        %v2090 = vxor.u32 %v1374, 2147483648
        %v2091 = vxor.u32 %v1565, 2147483648
        %v2092 = vxor.u32 %v1567, 2147483648
        %v2093 = vxor.u32 %v1378, 2147483648
        %v2094 = vxor.u32 %v1380, 2147483648
        %v2095 = vxor.u32 %v1571, 2147483648
        %v2096 = vxor.u32 %v1573, 2147483648
        %v2097 = vxor.u32 %v1382, 2147483648
        %v2098 = vxor.u32 %v1384, 2147483648
        %v2099 = vxor.u32 %v1575, 2147483648
        %v2100 = vxor.u32 %v1577, 2147483648
        %v2101 = vxor.u32 %v1388, 2147483648
        %v2102 = vxor.u32 %v1390, 2147483648
        %v2103 = vxor.u32 %v1581, 2147483648
        %v2104 = vxor.u32 %v1583, 2147483648
        %v2105 = vxor.u32 %v1392, 2147483648
        %v2106 = vxor.u32 %v1394, 2147483648
        %v2107 = vxor.u32 %v1585, 2147483648
        %v2108 = vxor.u32 %v1587, 2147483648
        %v2109 = vxor.u32 %v1398, 2147483648
        %v2110 = vxor.u32 %v1400, 2147483648
        %v2111 = vxor.u32 %v1591, 2147483648
        %v2112 = vxor.u32 %v1593, 2147483648
        %v2113 = vxor.u32 %v1402, 2147483648
        %v2114 = vxor.u32 %v1404, 2147483648
        %v2115 = vxor.u32 %v1595, 2147483648
        %v2116 = vxor.u32 %v1597, 2147483648
        %v2117 = vxor.u32 %v1408, 2147483648
        %v2118 = vxor.u32 %v1410, 2147483648
        %v2119 = vxor.u32 %v1601, 2147483648
        %v2120 = vxor.u32 %v1603, 2147483648
        %v2121 = vxor.u32 %v1412, 2147483648
        %v2122 = vxor.u32 %v1414, 2147483648
        %v2123 = vxor.u32 %v1605, 2147483648
        %v2124 = vxor.u32 %v1607, 2147483648
        %v2125 = vxor.u32 %v1418, 2147483648
        %v2126 = vxor.u32 %v1420, 2147483648
        %v2127 = vxor.u32 %v1611, 2147483648
        %v2128 = vxor.u32 %v1613, 2147483648
        %v2129 = vxor.u32 %v1422, 2147483648
        %v2130 = vxor.u32 %v1424, 2147483648
        %v2131 = vxor.u32 %v1615, 2147483648
        %v2132 = vxor.u32 %v1617, 2147483648
        %v2133 = vmul.f32 %v2005, 1.442695
        %v2134 = vpow.pop %v2133
        %v2135 = vmul.f32 %v2006, 1.442695
        %v2136 = vpow.pop %v2135
        %v2137 = vmul.f32 %v2007, 1.442695
        %v2138 = vpow.pop %v2137
        %v2139 = vmul.f32 %v2008, 1.442695
        %v2140 = vpow.pop %v2139
        %v2141 = vmul.f32 %v2009, 1.442695
        %v2142 = vpow.pop %v2141
        %v2143 = vmul.f32 %v2010, 1.442695
        %v2144 = vpow.pop %v2143
        %v2145 = vmul.f32 %v2011, 1.442695
        %v2146 = vpow.pop %v2145
        %v2147 = vmul.f32 %v2012, 1.442695
        %v2148 = vpow.pop %v2147
        %v2149 = vmul.f32 %v2013, 1.442695
        %v2150 = vpow.pop %v2149
        %v2151 = vmul.f32 %v2014, 1.442695
        %v2152 = vpow.pop %v2151
        %v2153 = vmul.f32 %v2015, 1.442695
        %v2154 = vpow.pop %v2153
        %v2155 = vmul.f32 %v2016, 1.442695
        %v2156 = vpow.pop %v2155
        %v2157 = vmul.f32 %v2017, 1.442695
        %v2158 = vpow.pop %v2157
        %v2159 = vmul.f32 %v2018, 1.442695
        %v2160 = vpow.pop %v2159
        %v2161 = vmul.f32 %v2019, 1.442695
        %v2162 = vpow.pop %v2161
        %v2163 = vmul.f32 %v2020, 1.442695
        %v2164 = vpow.pop %v2163
        %v2165 = vmul.f32 %v2021, 1.442695
        %v2166 = vpow.pop %v2165
        %v2167 = vmul.f32 %v2022, 1.442695
        %v2168 = vpow.pop %v2167
        %v2169 = vmul.f32 %v2023, 1.442695
        %v2170 = vpow.pop %v2169
        %v2171 = vmul.f32 %v2024, 1.442695
        %v2172 = vpow.pop %v2171
        %v2173 = vmul.f32 %v2025, 1.442695
        %v2174 = vpow.pop %v2173
        %v2175 = vmul.f32 %v2026, 1.442695
        %v2176 = vpow.pop %v2175
        %v2177 = vmul.f32 %v2027, 1.442695
        %v2178 = vpow.pop %v2177
        %v2179 = vmul.f32 %v2028, 1.442695
        %v2180 = vpow.pop %v2179
        %v2181 = vmul.f32 %v2029, 1.442695
        %v2182 = vpow.pop %v2181
        %v2183 = vmul.f32 %v2030, 1.442695
        %v2184 = vpow.pop %v2183
        %v2185 = vmul.f32 %v2031, 1.442695
        %v2186 = vpow.pop %v2185
        %v2187 = vmul.f32 %v2032, 1.442695
        %v2188 = vpow.pop %v2187
        %v2189 = vmul.f32 %v2033, 1.442695
        %v2190 = vpow.pop %v2189
        %v2191 = vmul.f32 %v2034, 1.442695
        %v2192 = vpow.pop %v2191
        %v2193 = vmul.f32 %v2035, 1.442695
        %v2194 = vpow.pop %v2193
        %v2195 = vmul.f32 %v2036, 1.442695
        %v2196 = vpow.pop %v2195
        %v2197 = vmul.f32 %v2037, 1.442695
        %v2198 = vpow.pop %v2197
        %v2199 = vmul.f32 %v2038, 1.442695
        %v2200 = vpow.pop %v2199
        %v2201 = vmul.f32 %v2039, 1.442695
        %v2202 = vpow.pop %v2201
        %v2203 = vmul.f32 %v2040, 1.442695
        %v2204 = vpow.pop %v2203
        %v2205 = vmul.f32 %v2041, 1.442695
        %v2206 = vpow.pop %v2205
        %v2207 = vmul.f32 %v2042, 1.442695
        %v2208 = vpow.pop %v2207
        %v2209 = vmul.f32 %v2043, 1.442695
        %v2210 = vpow.pop %v2209
        %v2211 = vmul.f32 %v2044, 1.442695
        %v2212 = vpow.pop %v2211
        %v2213 = vmul.f32 %v2045, 1.442695
        %v2214 = vpow.pop %v2213
        %v2215 = vmul.f32 %v2046, 1.442695
        %v2216 = vpow.pop %v2215
        %v2217 = vmul.f32 %v2047, 1.442695
        %v2218 = vpow.pop %v2217
        %v2219 = vmul.f32 %v2048, 1.442695
        %v2220 = vpow.pop %v2219
        %v2221 = vmul.f32 %v2049, 1.442695
        %v2222 = vpow.pop %v2221
        %v2223 = vmul.f32 %v2050, 1.442695
        %v2224 = vpow.pop %v2223
        %v2225 = vmul.f32 %v2051, 1.442695
        %v2226 = vpow.pop %v2225
        %v2227 = vmul.f32 %v2052, 1.442695
        %v2228 = vpow.pop %v2227
        %v2229 = vmul.f32 %v2053, 1.442695
        %v2230 = vpow.pop %v2229
        %v2231 = vmul.f32 %v2054, 1.442695
        %v2232 = vpow.pop %v2231
        %v2233 = vmul.f32 %v2055, 1.442695
        %v2234 = vpow.pop %v2233
        %v2235 = vmul.f32 %v2056, 1.442695
        %v2236 = vpow.pop %v2235
        %v2237 = vmul.f32 %v2057, 1.442695
        %v2238 = vpow.pop %v2237
        %v2239 = vmul.f32 %v2058, 1.442695
        %v2240 = vpow.pop %v2239
        %v2241 = vmul.f32 %v2059, 1.442695
        %v2242 = vpow.pop %v2241
        %v2243 = vmul.f32 %v2060, 1.442695
        %v2244 = vpow.pop %v2243
        %v2245 = vmul.f32 %v2061, 1.442695
        %v2246 = vpow.pop %v2245
        %v2247 = vmul.f32 %v2062, 1.442695
        %v2248 = vpow.pop %v2247
        %v2249 = vmul.f32 %v2063, 1.442695
        %v2250 = vpow.pop %v2249
        %v2251 = vmul.f32 %v2064, 1.442695
        %v2252 = vpow.pop %v2251
        %v2253 = vmul.f32 %v2065, 1.442695
        %v2254 = vpow.pop %v2253
        %v2255 = vmul.f32 %v2066, 1.442695
        %v2256 = vpow.pop %v2255
        %v2257 = vmul.f32 %v2067, 1.442695
        %v2258 = vpow.pop %v2257
        %v2259 = vmul.f32 %v2068, 1.442695
        %v2260 = vpow.pop %v2259
        %v2261 = vmul.f32 %v2069, 1.442695
        %v2262 = vpow.pop %v2261
        %v2263 = vmul.f32 %v2070, 1.442695
        %v2264 = vpow.pop %v2263
        %v2265 = vmul.f32 %v2071, 1.442695
        %v2266 = vpow.pop %v2265
        %v2267 = vmul.f32 %v2072, 1.442695
        %v2268 = vpow.pop %v2267
        %v2269 = vmul.f32 %v2073, 1.442695
        %v2270 = vpow.pop %v2269
        %v2271 = vmul.f32 %v2074, 1.442695
        %v2272 = vpow.pop %v2271
        %v2273 = vmul.f32 %v2075, 1.442695
        %v2274 = vpow.pop %v2273
        %v2275 = vmul.f32 %v2076, 1.442695
        %v2276 = vpow.pop %v2275
        %v2277 = vmul.f32 %v2077, 1.442695
        %v2278 = vpow.pop %v2277
        %v2279 = vmul.f32 %v2078, 1.442695
        %v2280 = vpow.pop %v2279
        %v2281 = vmul.f32 %v2079, 1.442695
        %v2282 = vpow.pop %v2281
        %v2283 = vmul.f32 %v2080, 1.442695
        %v2284 = vpow.pop %v2283
        %v2285 = vmul.f32 %v2081, 1.442695
        %v2286 = vpow.pop %v2285
        %v2287 = vmul.f32 %v2082, 1.442695
        %v2288 = vpow.pop %v2287
        %v2289 = vmul.f32 %v2083, 1.442695
        %v2290 = vpow.pop %v2289
        %v2291 = vmul.f32 %v2084, 1.442695
        %v2292 = vpow.pop %v2291
        %v2293 = vmul.f32 %v2085, 1.442695
        %v2294 = vpow.pop %v2293
        %v2295 = vmul.f32 %v2086, 1.442695
        %v2296 = vpow.pop %v2295
        %v2297 = vmul.f32 %v2087, 1.442695
        %v2298 = vpow.pop %v2297
        %v2299 = vmul.f32 %v2088, 1.442695
        %v2300 = vpow.pop %v2299
        %v2301 = vmul.f32 %v2089, 1.442695
        %v2302 = vpow.pop %v2301
        %v2303 = vmul.f32 %v2090, 1.442695
        %v2304 = vpow.pop %v2303
        %v2305 = vmul.f32 %v2091, 1.442695
        %v2306 = vpow.pop %v2305
        %v2307 = vmul.f32 %v2092, 1.442695
        %v2308 = vpow.pop %v2307
        %v2309 = vmul.f32 %v2093, 1.442695
        %v2310 = vpow.pop %v2309
        %v2311 = vmul.f32 %v2094, 1.442695
        %v2312 = vpow.pop %v2311
        %v2313 = vmul.f32 %v2095, 1.442695
        %v2314 = vpow.pop %v2313
        %v2315 = vmul.f32 %v2096, 1.442695
        %v2316 = vpow.pop %v2315
        %v2317 = vmul.f32 %v2097, 1.442695
        %v2318 = vpow.pop %v2317
        %v2319 = vmul.f32 %v2098, 1.442695
        %v2320 = vpow.pop %v2319
        %v2321 = vmul.f32 %v2099, 1.442695
        %v2322 = vpow.pop %v2321
        %v2323 = vmul.f32 %v2100, 1.442695
        %v2324 = vpow.pop %v2323
        %v2325 = vmul.f32 %v2101, 1.442695
        %v2326 = vpow.pop %v2325
        %v2327 = vmul.f32 %v2102, 1.442695
        %v2328 = vpow.pop %v2327
        %v2329 = vmul.f32 %v2103, 1.442695
        %v2330 = vpow.pop %v2329
        %v2331 = vmul.f32 %v2104, 1.442695
        %v2332 = vpow.pop %v2331
        %v2333 = vmul.f32 %v2105, 1.442695
        %v2334 = vpow.pop %v2333
        %v2335 = vmul.f32 %v2106, 1.442695
        %v2336 = vpow.pop %v2335
        %v2337 = vmul.f32 %v2107, 1.442695
        %v2338 = vpow.pop %v2337
        %v2339 = vmul.f32 %v2108, 1.442695
        %v2340 = vpow.pop %v2339
        %v2341 = vmul.f32 %v2109, 1.442695
        %v2342 = vpow.pop %v2341
        %v2343 = vmul.f32 %v2110, 1.442695
        %v2344 = vpow.pop %v2343
        %v2345 = vmul.f32 %v2111, 1.442695
        %v2346 = vpow.pop %v2345
        %v2347 = vmul.f32 %v2112, 1.442695
        %v2348 = vpow.pop %v2347
        %v2349 = vmul.f32 %v2113, 1.442695
        %v2350 = vpow.pop %v2349
        %v2351 = vmul.f32 %v2114, 1.442695
        %v2352 = vpow.pop %v2351
        %v2353 = vmul.f32 %v2115, 1.442695
        %v2354 = vpow.pop %v2353
        %v2355 = vmul.f32 %v2116, 1.442695
        %v2356 = vpow.pop %v2355
        %v2357 = vmul.f32 %v2117, 1.442695
        %v2358 = vpow.pop %v2357
        %v2359 = vmul.f32 %v2118, 1.442695
        %v2360 = vpow.pop %v2359
        %v2361 = vmul.f32 %v2119, 1.442695
        %v2362 = vpow.pop %v2361
        %v2363 = vmul.f32 %v2120, 1.442695
        %v2364 = vpow.pop %v2363
        %v2365 = vmul.f32 %v2121, 1.442695
        %v2366 = vpow.pop %v2365
        %v2367 = vmul.f32 %v2122, 1.442695
        %v2368 = vpow.pop %v2367
        %v2369 = vmul.f32 %v2123, 1.442695
        %v2370 = vpow.pop %v2369
        %v2371 = vmul.f32 %v2124, 1.442695
        %v2372 = vpow.pop %v2371
        %v2373 = vmul.f32 %v2125, 1.442695
        %v2374 = vpow.pop %v2373
        %v2375 = vmul.f32 %v2126, 1.442695
        %v2376 = vpow.pop %v2375
        %v2377 = vmul.f32 %v2127, 1.442695
        %v2378 = vpow.pop %v2377
        %v2379 = vmul.f32 %v2128, 1.442695
        %v2380 = vpow.pop %v2379
        %v2381 = vmul.f32 %v2129, 1.442695
        %v2382 = vpow.pop %v2381
        %v2383 = vmul.f32 %v2130, 1.442695
        %v2384 = vpow.pop %v2383
        %v2385 = vmul.f32 %v2131, 1.442695
        %v2386 = vpow.pop %v2385
        %v2387 = vmul.f32 %v2132, 1.442695
        %v2388 = vpow.pop %v2387
        %v2389 = vadd.f32 %v2134, 1.0
        %v2390 = vadd.f32 %v2136, 1.0
        %v2391 = vadd.f32 %v2138, 1.0
        %v2392 = vadd.f32 %v2140, 1.0
        %v2393 = vadd.f32 %v2142, 1.0
        %v2394 = vadd.f32 %v2144, 1.0
        %v2395 = vadd.f32 %v2146, 1.0
        %v2396 = vadd.f32 %v2148, 1.0
        %v2397 = vadd.f32 %v2150, 1.0
        %v2398 = vadd.f32 %v2152, 1.0
        %v2399 = vadd.f32 %v2154, 1.0
        %v2400 = vadd.f32 %v2156, 1.0
        %v2401 = vadd.f32 %v2158, 1.0
        %v2402 = vadd.f32 %v2160, 1.0
        %v2403 = vadd.f32 %v2162, 1.0
        %v2404 = vadd.f32 %v2164, 1.0
        %v2405 = vadd.f32 %v2166, 1.0
        %v2406 = vadd.f32 %v2168, 1.0
        %v2407 = vadd.f32 %v2170, 1.0
        %v2408 = vadd.f32 %v2172, 1.0
        %v2409 = vadd.f32 %v2174, 1.0
        %v2410 = vadd.f32 %v2176, 1.0
        %v2411 = vadd.f32 %v2178, 1.0
        %v2412 = vadd.f32 %v2180, 1.0
        %v2413 = vadd.f32 %v2182, 1.0
        %v2414 = vadd.f32 %v2184, 1.0
        %v2415 = vadd.f32 %v2186, 1.0
        %v2416 = vadd.f32 %v2188, 1.0
        %v2417 = vadd.f32 %v2190, 1.0
        %v2418 = vadd.f32 %v2192, 1.0
        %v2419 = vadd.f32 %v2194, 1.0
        %v2420 = vadd.f32 %v2196, 1.0
        %v2421 = vadd.f32 %v2198, 1.0
        %v2422 = vadd.f32 %v2200, 1.0
        %v2423 = vadd.f32 %v2202, 1.0
        %v2424 = vadd.f32 %v2204, 1.0
        %v2425 = vadd.f32 %v2206, 1.0
        %v2426 = vadd.f32 %v2208, 1.0
        %v2427 = vadd.f32 %v2210, 1.0
        %v2428 = vadd.f32 %v2212, 1.0
        %v2429 = vadd.f32 %v2214, 1.0
        %v2430 = vadd.f32 %v2216, 1.0
        %v2431 = vadd.f32 %v2218, 1.0
        %v2432 = vadd.f32 %v2220, 1.0
        %v2433 = vadd.f32 %v2222, 1.0
        %v2434 = vadd.f32 %v2224, 1.0
        %v2435 = vadd.f32 %v2226, 1.0
        %v2436 = vadd.f32 %v2228, 1.0
        %v2437 = vadd.f32 %v2230, 1.0
        %v2438 = vadd.f32 %v2232, 1.0
        %v2439 = vadd.f32 %v2234, 1.0
        %v2440 = vadd.f32 %v2236, 1.0
        %v2441 = vadd.f32 %v2238, 1.0
        %v2442 = vadd.f32 %v2240, 1.0
        %v2443 = vadd.f32 %v2242, 1.0
        %v2444 = vadd.f32 %v2244, 1.0
        %v2445 = vadd.f32 %v2246, 1.0
        %v2446 = vadd.f32 %v2248, 1.0
        %v2447 = vadd.f32 %v2250, 1.0
        %v2448 = vadd.f32 %v2252, 1.0
        %v2449 = vadd.f32 %v2254, 1.0
        %v2450 = vadd.f32 %v2256, 1.0
        %v2451 = vadd.f32 %v2258, 1.0
        %v2452 = vadd.f32 %v2260, 1.0
        %v2453 = vadd.f32 %v2262, 1.0
        %v2454 = vadd.f32 %v2264, 1.0
        %v2455 = vadd.f32 %v2266, 1.0
        %v2456 = vadd.f32 %v2268, 1.0
        %v2457 = vadd.f32 %v2270, 1.0
        %v2458 = vadd.f32 %v2272, 1.0
        %v2459 = vadd.f32 %v2274, 1.0
        %v2460 = vadd.f32 %v2276, 1.0
        %v2461 = vadd.f32 %v2278, 1.0
        %v2462 = vadd.f32 %v2280, 1.0
        %v2463 = vadd.f32 %v2282, 1.0
        %v2464 = vadd.f32 %v2284, 1.0
        %v2465 = vadd.f32 %v2286, 1.0
        %v2466 = vadd.f32 %v2288, 1.0
        %v2467 = vadd.f32 %v2290, 1.0
        %v2468 = vadd.f32 %v2292, 1.0
        %v2469 = vadd.f32 %v2294, 1.0
        %v2470 = vadd.f32 %v2296, 1.0
        %v2471 = vadd.f32 %v2298, 1.0
        %v2472 = vadd.f32 %v2300, 1.0
        %v2473 = vadd.f32 %v2302, 1.0
        %v2474 = vadd.f32 %v2304, 1.0
        %v2475 = vadd.f32 %v2306, 1.0
        %v2476 = vadd.f32 %v2308, 1.0
        %v2477 = vadd.f32 %v2310, 1.0
        %v2478 = vadd.f32 %v2312, 1.0
        %v2479 = vadd.f32 %v2314, 1.0
        %v2480 = vadd.f32 %v2316, 1.0
        %v2481 = vadd.f32 %v2318, 1.0
        %v2482 = vadd.f32 %v2320, 1.0
        %v2483 = vadd.f32 %v2322, 1.0
        %v2484 = vadd.f32 %v2324, 1.0
        %v2485 = vadd.f32 %v2326, 1.0
        %v2486 = vadd.f32 %v2328, 1.0
        %v2487 = vadd.f32 %v2330, 1.0
        %v2488 = vadd.f32 %v2332, 1.0
        %v2489 = vadd.f32 %v2334, 1.0
        %v2490 = vadd.f32 %v2336, 1.0
        %v2491 = vadd.f32 %v2338, 1.0
        %v2492 = vadd.f32 %v2340, 1.0
        %v2493 = vadd.f32 %v2342, 1.0
        %v2494 = vadd.f32 %v2344, 1.0
        %v2495 = vadd.f32 %v2346, 1.0
        %v2496 = vadd.f32 %v2348, 1.0
        %v2497 = vadd.f32 %v2350, 1.0
        %v2498 = vadd.f32 %v2352, 1.0
        %v2499 = vadd.f32 %v2354, 1.0
        %v2500 = vadd.f32 %v2356, 1.0
        %v2501 = vadd.f32 %v2358, 1.0
        %v2502 = vadd.f32 %v2360, 1.0
        %v2503 = vadd.f32 %v2362, 1.0
        %v2504 = vadd.f32 %v2364, 1.0
        %v2505 = vadd.f32 %v2366, 1.0
        %v2506 = vadd.f32 %v2368, 1.0
        %v2507 = vadd.f32 %v2370, 1.0
        %v2508 = vadd.f32 %v2372, 1.0
        %v2509 = vadd.f32 %v2374, 1.0
        %v2510 = vadd.f32 %v2376, 1.0
        %v2511 = vadd.f32 %v2378, 1.0
        %v2512 = vadd.f32 %v2380, 1.0
        %v2513 = vadd.f32 %v2382, 1.0
        %v2514 = vadd.f32 %v2384, 1.0
        %v2515 = vadd.f32 %v2386, 1.0
        %v2516 = vadd.f32 %v2388, 1.0
        %v2517 = vrcp.pop %v2389
        %v2518 = vmul.f32 1.0, %v2517
        %v2519 = vrcp.pop %v2390
        %v2520 = vmul.f32 1.0, %v2519
        %v2521 = vrcp.pop %v2391
        %v2522 = vmul.f32 1.0, %v2521
        %v2523 = vrcp.pop %v2392
        %v2524 = vmul.f32 1.0, %v2523
        %v2525 = vrcp.pop %v2393
        %v2526 = vmul.f32 1.0, %v2525
        %v2527 = vrcp.pop %v2394
        %v2528 = vmul.f32 1.0, %v2527
        %v2529 = vrcp.pop %v2395
        %v2530 = vmul.f32 1.0, %v2529
        %v2531 = vrcp.pop %v2396
        %v2532 = vmul.f32 1.0, %v2531
        %v2533 = vrcp.pop %v2397
        %v2534 = vmul.f32 1.0, %v2533
        %v2535 = vrcp.pop %v2398
        %v2536 = vmul.f32 1.0, %v2535
        %v2537 = vrcp.pop %v2399
        %v2538 = vmul.f32 1.0, %v2537
        %v2539 = vrcp.pop %v2400
        %v2540 = vmul.f32 1.0, %v2539
        %v2541 = vrcp.pop %v2401
        %v2542 = vmul.f32 1.0, %v2541
        %v2543 = vrcp.pop %v2402
        %v2544 = vmul.f32 1.0, %v2543
        %v2545 = vrcp.pop %v2403
        %v2546 = vmul.f32 1.0, %v2545
        %v2547 = vrcp.pop %v2404
        %v2548 = vmul.f32 1.0, %v2547
        %v2549 = vrcp.pop %v2405
        %v2550 = vmul.f32 1.0, %v2549
        %v2551 = vrcp.pop %v2406
        %v2552 = vmul.f32 1.0, %v2551
        %v2553 = vrcp.pop %v2407
        %v2554 = vmul.f32 1.0, %v2553
        %v2555 = vrcp.pop %v2408
        %v2556 = vmul.f32 1.0, %v2555
        %v2557 = vrcp.pop %v2409
        %v2558 = vmul.f32 1.0, %v2557
        %v2559 = vrcp.pop %v2410
        %v2560 = vmul.f32 1.0, %v2559
        %v2561 = vrcp.pop %v2411
        %v2562 = vmul.f32 1.0, %v2561
        %v2563 = vrcp.pop %v2412
        %v2564 = vmul.f32 1.0, %v2563
        %v2565 = vrcp.pop %v2413
        %v2566 = vmul.f32 1.0, %v2565
        %v2567 = vrcp.pop %v2414
        %v2568 = vmul.f32 1.0, %v2567
        %v2569 = vrcp.pop %v2415
        %v2570 = vmul.f32 1.0, %v2569
        %v2571 = vrcp.pop %v2416
        %v2572 = vmul.f32 1.0, %v2571
        %v2573 = vrcp.pop %v2417
        %v2574 = vmul.f32 1.0, %v2573
        %v2575 = vrcp.pop %v2418
        %v2576 = vmul.f32 1.0, %v2575
        %v2577 = vrcp.pop %v2419
        %v2578 = vmul.f32 1.0, %v2577
        %v2579 = vrcp.pop %v2420
        %v2580 = vmul.f32 1.0, %v2579
        %v2581 = vrcp.pop %v2421
        %v2582 = vmul.f32 1.0, %v2581
        %v2583 = vrcp.pop %v2422
        %v2584 = vmul.f32 1.0, %v2583
        %v2585 = vrcp.pop %v2423
        %v2586 = vmul.f32 1.0, %v2585
        %v2587 = vrcp.pop %v2424
        %v2588 = vmul.f32 1.0, %v2587
        %v2589 = vrcp.pop %v2425
        %v2590 = vmul.f32 1.0, %v2589
        %v2591 = vrcp.pop %v2426
        %v2592 = vmul.f32 1.0, %v2591
        %v2593 = vrcp.pop %v2427
        %v2594 = vmul.f32 1.0, %v2593
        %v2595 = vrcp.pop %v2428
        %v2596 = vmul.f32 1.0, %v2595
        %v2597 = vrcp.pop %v2429
        %v2598 = vmul.f32 1.0, %v2597
        %v2599 = vrcp.pop %v2430
        %v2600 = vmul.f32 1.0, %v2599
        %v2601 = vrcp.pop %v2431
        %v2602 = vmul.f32 1.0, %v2601
        %v2603 = vrcp.pop %v2432
        %v2604 = vmul.f32 1.0, %v2603
        %v2605 = vrcp.pop %v2433
        %v2606 = vmul.f32 1.0, %v2605
        %v2607 = vrcp.pop %v2434
        %v2608 = vmul.f32 1.0, %v2607
        %v2609 = vrcp.pop %v2435
        %v2610 = vmul.f32 1.0, %v2609
        %v2611 = vrcp.pop %v2436
        %v2612 = vmul.f32 1.0, %v2611
        %v2613 = vrcp.pop %v2437
        %v2614 = vmul.f32 1.0, %v2613
        %v2615 = vrcp.pop %v2438
        %v2616 = vmul.f32 1.0, %v2615
        %v2617 = vrcp.pop %v2439
        %v2618 = vmul.f32 1.0, %v2617
        %v2619 = vrcp.pop %v2440
        %v2620 = vmul.f32 1.0, %v2619
        %v2621 = vrcp.pop %v2441
        %v2622 = vmul.f32 1.0, %v2621
        %v2623 = vrcp.pop %v2442
        %v2624 = vmul.f32 1.0, %v2623
        %v2625 = vrcp.pop %v2443
        %v2626 = vmul.f32 1.0, %v2625
        %v2627 = vrcp.pop %v2444
        %v2628 = vmul.f32 1.0, %v2627
        %v2629 = vrcp.pop %v2445
        %v2630 = vmul.f32 1.0, %v2629
        %v2631 = vrcp.pop %v2446
        %v2632 = vmul.f32 1.0, %v2631
        %v2633 = vrcp.pop %v2447
        %v2634 = vmul.f32 1.0, %v2633
        %v2635 = vrcp.pop %v2448
        %v2636 = vmul.f32 1.0, %v2635
        %v2637 = vrcp.pop %v2449
        %v2638 = vmul.f32 1.0, %v2637
        %v2639 = vrcp.pop %v2450
        %v2640 = vmul.f32 1.0, %v2639
        %v2641 = vrcp.pop %v2451
        %v2642 = vmul.f32 1.0, %v2641
        %v2643 = vrcp.pop %v2452
        %v2644 = vmul.f32 1.0, %v2643
        %v2645 = vrcp.pop %v2453
        %v2646 = vmul.f32 1.0, %v2645
        %v2647 = vrcp.pop %v2454
        %v2648 = vmul.f32 1.0, %v2647
        %v2649 = vrcp.pop %v2455
        %v2650 = vmul.f32 1.0, %v2649
        %v2651 = vrcp.pop %v2456
        %v2652 = vmul.f32 1.0, %v2651
        %v2653 = vrcp.pop %v2457
        %v2654 = vmul.f32 1.0, %v2653
        %v2655 = vrcp.pop %v2458
        %v2656 = vmul.f32 1.0, %v2655
        %v2657 = vrcp.pop %v2459
        %v2658 = vmul.f32 1.0, %v2657
        %v2659 = vrcp.pop %v2460
        %v2660 = vmul.f32 1.0, %v2659
        %v2661 = vrcp.pop %v2461
        %v2662 = vmul.f32 1.0, %v2661
        %v2663 = vrcp.pop %v2462
        %v2664 = vmul.f32 1.0, %v2663
        %v2665 = vrcp.pop %v2463
        %v2666 = vmul.f32 1.0, %v2665
        %v2667 = vrcp.pop %v2464
        %v2668 = vmul.f32 1.0, %v2667
        %v2669 = vrcp.pop %v2465
        %v2670 = vmul.f32 1.0, %v2669
        %v2671 = vrcp.pop %v2466
        %v2672 = vmul.f32 1.0, %v2671
        %v2673 = vrcp.pop %v2467
        %v2674 = vmul.f32 1.0, %v2673
        %v2675 = vrcp.pop %v2468
        %v2676 = vmul.f32 1.0, %v2675
        %v2677 = vrcp.pop %v2469
        %v2678 = vmul.f32 1.0, %v2677
        %v2679 = vrcp.pop %v2470
        %v2680 = vmul.f32 1.0, %v2679
        %v2681 = vrcp.pop %v2471
        %v2682 = vmul.f32 1.0, %v2681
        %v2683 = vrcp.pop %v2472
        %v2684 = vmul.f32 1.0, %v2683
        %v2685 = vrcp.pop %v2473
        %v2686 = vmul.f32 1.0, %v2685
        %v2687 = vrcp.pop %v2474
        %v2688 = vmul.f32 1.0, %v2687
        %v2689 = vrcp.pop %v2475
        %v2690 = vmul.f32 1.0, %v2689
        %v2691 = vrcp.pop %v2476
        %v2692 = vmul.f32 1.0, %v2691
        %v2693 = vrcp.pop %v2477
        %v2694 = vmul.f32 1.0, %v2693
        %v2695 = vrcp.pop %v2478
        %v2696 = vmul.f32 1.0, %v2695
        %v2697 = vrcp.pop %v2479
        %v2698 = vmul.f32 1.0, %v2697
        %v2699 = vrcp.pop %v2480
        %v2700 = vmul.f32 1.0, %v2699
        %v2701 = vrcp.pop %v2481
        %v2702 = vmul.f32 1.0, %v2701
        %v2703 = vrcp.pop %v2482
        %v2704 = vmul.f32 1.0, %v2703
        %v2705 = vrcp.pop %v2483
        %v2706 = vmul.f32 1.0, %v2705
        %v2707 = vrcp.pop %v2484
        %v2708 = vmul.f32 1.0, %v2707
        %v2709 = vrcp.pop %v2485
        %v2710 = vmul.f32 1.0, %v2709
        %v2711 = vrcp.pop %v2486
        %v2712 = vmul.f32 1.0, %v2711
        %v2713 = vrcp.pop %v2487
        %v2714 = vmul.f32 1.0, %v2713
        %v2715 = vrcp.pop %v2488
        %v2716 = vmul.f32 1.0, %v2715
        %v2717 = vrcp.pop %v2489
        %v2718 = vmul.f32 1.0, %v2717
        %v2719 = vrcp.pop %v2490
        %v2720 = vmul.f32 1.0, %v2719
        %v2721 = vrcp.pop %v2491
        %v2722 = vmul.f32 1.0, %v2721
        %v2723 = vrcp.pop %v2492
        %v2724 = vmul.f32 1.0, %v2723
        %v2725 = vrcp.pop %v2493
        %v2726 = vmul.f32 1.0, %v2725
        %v2727 = vrcp.pop %v2494
        %v2728 = vmul.f32 1.0, %v2727
        %v2729 = vrcp.pop %v2495
        %v2730 = vmul.f32 1.0, %v2729
        %v2731 = vrcp.pop %v2496
        %v2732 = vmul.f32 1.0, %v2731
        %v2733 = vrcp.pop %v2497
        %v2734 = vmul.f32 1.0, %v2733
        %v2735 = vrcp.pop %v2498
        %v2736 = vmul.f32 1.0, %v2735
        %v2737 = vrcp.pop %v2499
        %v2738 = vmul.f32 1.0, %v2737
        %v2739 = vrcp.pop %v2500
        %v2740 = vmul.f32 1.0, %v2739
        %v2741 = vrcp.pop %v2501
        %v2742 = vmul.f32 1.0, %v2741
        %v2743 = vrcp.pop %v2502
        %v2744 = vmul.f32 1.0, %v2743
        %v2745 = vrcp.pop %v2503
        %v2746 = vmul.f32 1.0, %v2745
        %v2747 = vrcp.pop %v2504
        %v2748 = vmul.f32 1.0, %v2747
        %v2749 = vrcp.pop %v2505
        %v2750 = vmul.f32 1.0, %v2749
        %v2751 = vrcp.pop %v2506
        %v2752 = vmul.f32 1.0, %v2751
        %v2753 = vrcp.pop %v2507
        %v2754 = vmul.f32 1.0, %v2753
        %v2755 = vrcp.pop %v2508
        %v2756 = vmul.f32 1.0, %v2755
        %v2757 = vrcp.pop %v2509
        %v2758 = vmul.f32 1.0, %v2757
        %v2759 = vrcp.pop %v2510
        %v2760 = vmul.f32 1.0, %v2759
        %v2761 = vrcp.pop %v2511
        %v2762 = vmul.f32 1.0, %v2761
        %v2763 = vrcp.pop %v2512
        %v2764 = vmul.f32 1.0, %v2763
        %v2765 = vrcp.pop %v2513
        %v2766 = vmul.f32 1.0, %v2765
        %v2767 = vrcp.pop %v2514
        %v2768 = vmul.f32 1.0, %v2767
        %v2769 = vrcp.pop %v2515
        %v2770 = vmul.f32 1.0, %v2769
        %v2771 = vrcp.pop %v2516
        %v2772 = vmul.f32 1.0, %v2771
        %v2773 = vmul.f32 %v1268, %v2518
        %v2774 = vmul.f32 %v1270, %v2520
        %v2775 = vmul.f32 %v1461, %v2522
        %v2776 = vmul.f32 %v1463, %v2524
        %v2777 = vmul.f32 %v1272, %v2526
        %v2778 = vmul.f32 %v1274, %v2528
        %v2779 = vmul.f32 %v1465, %v2530
        %v2780 = vmul.f32 %v1467, %v2532
        %v2781 = vmul.f32 %v1278, %v2534
        %v2782 = vmul.f32 %v1280, %v2536
        %v2783 = vmul.f32 %v1471, %v2538
        %v2784 = vmul.f32 %v1473, %v2540
        %v2785 = vmul.f32 %v1282, %v2542
        %v2786 = vmul.f32 %v1284, %v2544
        %v2787 = vmul.f32 %v1475, %v2546
        %v2788 = vmul.f32 %v1477, %v2548
        %v2789 = vmul.f32 %v1288, %v2550
        %v2790 = vmul.f32 %v1290, %v2552
        %v2791 = vmul.f32 %v1481, %v2554
        %v2792 = vmul.f32 %v1483, %v2556
        %v2793 = vmul.f32 %v1292, %v2558
        %v2794 = vmul.f32 %v1294, %v2560
        %v2795 = vmul.f32 %v1485, %v2562
        %v2796 = vmul.f32 %v1487, %v2564
        %v2797 = vmul.f32 %v1298, %v2566
        %v2798 = vmul.f32 %v1300, %v2568
        %v2799 = vmul.f32 %v1491, %v2570
        %v2800 = vmul.f32 %v1493, %v2572
        %v2801 = vmul.f32 %v1302, %v2574
        %v2802 = vmul.f32 %v1304, %v2576
        %v2803 = vmul.f32 %v1495, %v2578
        %v2804 = vmul.f32 %v1497, %v2580
        %v2805 = vmul.f32 %v1308, %v2582
        %v2806 = vmul.f32 %v1310, %v2584
        %v2807 = vmul.f32 %v1501, %v2586
        %v2808 = vmul.f32 %v1503, %v2588
        %v2809 = vmul.f32 %v1312, %v2590
        %v2810 = vmul.f32 %v1314, %v2592
        %v2811 = vmul.f32 %v1505, %v2594
        %v2812 = vmul.f32 %v1507, %v2596
        %v2813 = vmul.f32 %v1318, %v2598
        %v2814 = vmul.f32 %v1320, %v2600
        %v2815 = vmul.f32 %v1511, %v2602
        %v2816 = vmul.f32 %v1513, %v2604
        %v2817 = vmul.f32 %v1322, %v2606
        %v2818 = vmul.f32 %v1324, %v2608
        %v2819 = vmul.f32 %v1515, %v2610
        %v2820 = vmul.f32 %v1517, %v2612
        %v2821 = vmul.f32 %v1328, %v2614
        %v2822 = vmul.f32 %v1330, %v2616
        %v2823 = vmul.f32 %v1521, %v2618
        %v2824 = vmul.f32 %v1523, %v2620
        %v2825 = vmul.f32 %v1332, %v2622
        %v2826 = vmul.f32 %v1334, %v2624
        %v2827 = vmul.f32 %v1525, %v2626
        %v2828 = vmul.f32 %v1527, %v2628
        %v2829 = vmul.f32 %v1338, %v2630
        %v2830 = vmul.f32 %v1340, %v2632
        %v2831 = vmul.f32 %v1531, %v2634
        %v2832 = vmul.f32 %v1533, %v2636
        %v2833 = vmul.f32 %v1342, %v2638
        %v2834 = vmul.f32 %v1344, %v2640
        %v2835 = vmul.f32 %v1535, %v2642
        %v2836 = vmul.f32 %v1537, %v2644
        %v2837 = vmul.f32 %v1348, %v2646
        %v2838 = vmul.f32 %v1350, %v2648
        %v2839 = vmul.f32 %v1541, %v2650
        %v2840 = vmul.f32 %v1543, %v2652
        %v2841 = vmul.f32 %v1352, %v2654
        %v2842 = vmul.f32 %v1354, %v2656
        %v2843 = vmul.f32 %v1545, %v2658
        %v2844 = vmul.f32 %v1547, %v2660
        %v2845 = vmul.f32 %v1358, %v2662
        %v2846 = vmul.f32 %v1360, %v2664
        %v2847 = vmul.f32 %v1551, %v2666
        %v2848 = vmul.f32 %v1553, %v2668
        %v2849 = vmul.f32 %v1362, %v2670
        %v2850 = vmul.f32 %v1364, %v2672
        %v2851 = vmul.f32 %v1555, %v2674
        %v2852 = vmul.f32 %v1557, %v2676
        %v2853 = vmul.f32 %v1368, %v2678
        %v2854 = vmul.f32 %v1370, %v2680
        %v2855 = vmul.f32 %v1561, %v2682
        %v2856 = vmul.f32 %v1563, %v2684
        %v2857 = vmul.f32 %v1372, %v2686
        %v2858 = vmul.f32 %v1374, %v2688
        %v2859 = vmul.f32 %v1565, %v2690
        %v2860 = vmul.f32 %v1567, %v2692
        %v2861 = vmul.f32 %v1378, %v2694
        %v2862 = vmul.f32 %v1380, %v2696
        %v2863 = vmul.f32 %v1571, %v2698
        %v2864 = vmul.f32 %v1573, %v2700
        %v2865 = vmul.f32 %v1382, %v2702
        %v2866 = vmul.f32 %v1384, %v2704
        %v2867 = vmul.f32 %v1575, %v2706
        %v2868 = vmul.f32 %v1577, %v2708
        %v2869 = vmul.f32 %v1388, %v2710
        %v2870 = vmul.f32 %v1390, %v2712
        %v2871 = vmul.f32 %v1581, %v2714
        %v2872 = vmul.f32 %v1583, %v2716
        %v2873 = vmul.f32 %v1392, %v2718
        %v2874 = vmul.f32 %v1394, %v2720
        %v2875 = vmul.f32 %v1585, %v2722
        %v2876 = vmul.f32 %v1587, %v2724
        %v2877 = vmul.f32 %v1398, %v2726
        %v2878 = vmul.f32 %v1400, %v2728
        %v2879 = vmul.f32 %v1591, %v2730
        %v2880 = vmul.f32 %v1593, %v2732
        %v2881 = vmul.f32 %v1402, %v2734
        %v2882 = vmul.f32 %v1404, %v2736
        %v2883 = vmul.f32 %v1595, %v2738
        %v2884 = vmul.f32 %v1597, %v2740
        %v2885 = vmul.f32 %v1408, %v2742
        %v2886 = vmul.f32 %v1410, %v2744
        %v2887 = vmul.f32 %v1601, %v2746
        %v2888 = vmul.f32 %v1603, %v2748
        %v2889 = vmul.f32 %v1412, %v2750
        %v2890 = vmul.f32 %v1414, %v2752
        %v2891 = vmul.f32 %v1605, %v2754
        %v2892 = vmul.f32 %v1607, %v2756
        %v2893 = vmul.f32 %v1418, %v2758
        %v2894 = vmul.f32 %v1420, %v2760
        %v2895 = vmul.f32 %v1611, %v2762
        %v2896 = vmul.f32 %v1613, %v2764
        %v2897 = vmul.f32 %v1422, %v2766
        %v2898 = vmul.f32 %v1424, %v2768
        %v2899 = vmul.f32 %v1615, %v2770
        %v2900 = vmul.f32 %v1617, %v2772
        %v2901 = vmul.f32 %v2773, %v1654
        %v2902 = vmul.f32 %v2774, %v1656
        %v2903 = vmul.f32 %v2775, %v1847
        %v2904 = vmul.f32 %v2776, %v1849
        %v2905 = vmul.f32 %v2777, %v1658
        %v2906 = vmul.f32 %v2778, %v1660
        %v2907 = vmul.f32 %v2779, %v1851
        %v2908 = vmul.f32 %v2780, %v1853
        %v2909 = vmul.f32 %v2781, %v1664
        %v2910 = vmul.f32 %v2782, %v1666
        %v2911 = vmul.f32 %v2783, %v1857
        %v2912 = vmul.f32 %v2784, %v1859
        %v2913 = vmul.f32 %v2785, %v1668
        %v2914 = vmul.f32 %v2786, %v1670
        %v2915 = vmul.f32 %v2787, %v1861
        %v2916 = vmul.f32 %v2788, %v1863
        %v2917 = vmul.f32 %v2789, %v1674
        %v2918 = vmul.f32 %v2790, %v1676
        %v2919 = vmul.f32 %v2791, %v1867
        %v2920 = vmul.f32 %v2792, %v1869
        %v2921 = vmul.f32 %v2793, %v1678
        %v2922 = vmul.f32 %v2794, %v1680
        %v2923 = vmul.f32 %v2795, %v1871
        %v2924 = vmul.f32 %v2796, %v1873
        %v2925 = vmul.f32 %v2797, %v1684
        %v2926 = vmul.f32 %v2798, %v1686
        %v2927 = vmul.f32 %v2799, %v1877
        %v2928 = vmul.f32 %v2800, %v1879
        %v2929 = vmul.f32 %v2801, %v1688
        %v2930 = vmul.f32 %v2802, %v1690
        %v2931 = vmul.f32 %v2803, %v1881
        %v2932 = vmul.f32 %v2804, %v1883
        %v2933 = vmul.f32 %v2805, %v1694
        %v2934 = vmul.f32 %v2806, %v1696
        %v2935 = vmul.f32 %v2807, %v1887
        %v2936 = vmul.f32 %v2808, %v1889
        %v2937 = vmul.f32 %v2809, %v1698
        %v2938 = vmul.f32 %v2810, %v1700
        %v2939 = vmul.f32 %v2811, %v1891
        %v2940 = vmul.f32 %v2812, %v1893
        %v2941 = vmul.f32 %v2813, %v1704
        %v2942 = vmul.f32 %v2814, %v1706
        %v2943 = vmul.f32 %v2815, %v1897
        %v2944 = vmul.f32 %v2816, %v1899
        %v2945 = vmul.f32 %v2817, %v1708
        %v2946 = vmul.f32 %v2818, %v1710
        %v2947 = vmul.f32 %v2819, %v1901
        %v2948 = vmul.f32 %v2820, %v1903
        %v2949 = vmul.f32 %v2821, %v1714
        %v2950 = vmul.f32 %v2822, %v1716
        %v2951 = vmul.f32 %v2823, %v1907
        %v2952 = vmul.f32 %v2824, %v1909
        %v2953 = vmul.f32 %v2825, %v1718
        %v2954 = vmul.f32 %v2826, %v1720
        %v2955 = vmul.f32 %v2827, %v1911
        %v2956 = vmul.f32 %v2828, %v1913
        %v2957 = vmul.f32 %v2829, %v1724
        %v2958 = vmul.f32 %v2830, %v1726
        %v2959 = vmul.f32 %v2831, %v1917
        %v2960 = vmul.f32 %v2832, %v1919
        %v2961 = vmul.f32 %v2833, %v1728
        %v2962 = vmul.f32 %v2834, %v1730
        %v2963 = vmul.f32 %v2835, %v1921
        %v2964 = vmul.f32 %v2836, %v1923
        %v2965 = vmul.f32 %v2837, %v1734
        %v2966 = vmul.f32 %v2838, %v1736
        %v2967 = vmul.f32 %v2839, %v1927
        %v2968 = vmul.f32 %v2840, %v1929
        %v2969 = vmul.f32 %v2841, %v1738
        %v2970 = vmul.f32 %v2842, %v1740
        %v2971 = vmul.f32 %v2843, %v1931
        %v2972 = vmul.f32 %v2844, %v1933
        %v2973 = vmul.f32 %v2845, %v1744
        %v2974 = vmul.f32 %v2846, %v1746
        %v2975 = vmul.f32 %v2847, %v1937
        %v2976 = vmul.f32 %v2848, %v1939
        %v2977 = vmul.f32 %v2849, %v1748
        %v2978 = vmul.f32 %v2850, %v1750
        %v2979 = vmul.f32 %v2851, %v1941
        %v2980 = vmul.f32 %v2852, %v1943
        %v2981 = vmul.f32 %v2853, %v1754
        %v2982 = vmul.f32 %v2854, %v1756
        %v2983 = vmul.f32 %v2855, %v1947
        %v2984 = vmul.f32 %v2856, %v1949
        %v2985 = vmul.f32 %v2857, %v1758
        %v2986 = vmul.f32 %v2858, %v1760
        %v2987 = vmul.f32 %v2859, %v1951
        %v2988 = vmul.f32 %v2860, %v1953
        %v2989 = vmul.f32 %v2861, %v1764
        %v2990 = vmul.f32 %v2862, %v1766
        %v2991 = vmul.f32 %v2863, %v1957
        %v2992 = vmul.f32 %v2864, %v1959
        %v2993 = vmul.f32 %v2865, %v1768
        %v2994 = vmul.f32 %v2866, %v1770
        %v2995 = vmul.f32 %v2867, %v1961
        %v2996 = vmul.f32 %v2868, %v1963
        %v2997 = vmul.f32 %v2869, %v1774
        %v2998 = vmul.f32 %v2870, %v1776
        %v2999 = vmul.f32 %v2871, %v1967
        %v3000 = vmul.f32 %v2872, %v1969
        %v3001 = vmul.f32 %v2873, %v1778
        %v3002 = vmul.f32 %v2874, %v1780
        %v3003 = vmul.f32 %v2875, %v1971
        %v3004 = vmul.f32 %v2876, %v1973
        %v3005 = vmul.f32 %v2877, %v1784
        %v3006 = vmul.f32 %v2878, %v1786
        %v3007 = vmul.f32 %v2879, %v1977
        %v3008 = vmul.f32 %v2880, %v1979
        %v3009 = vmul.f32 %v2881, %v1788
        %v3010 = vmul.f32 %v2882, %v1790
        %v3011 = vmul.f32 %v2883, %v1981
        %v3012 = vmul.f32 %v2884, %v1983
        %v3013 = vmul.f32 %v2885, %v1794
        %v3014 = vmul.f32 %v2886, %v1796
        %v3015 = vmul.f32 %v2887, %v1987
        %v3016 = vmul.f32 %v2888, %v1989
        %v3017 = vmul.f32 %v2889, %v1798
        %v3018 = vmul.f32 %v2890, %v1800
        %v3019 = vmul.f32 %v2891, %v1991
        %v3020 = vmul.f32 %v2892, %v1993
        %v3021 = vmul.f32 %v2893, %v1804
        %v3022 = vmul.f32 %v2894, %v1806
        %v3023 = vmul.f32 %v2895, %v1997
        %v3024 = vmul.f32 %v2896, %v1999
        %v3025 = vmul.f32 %v2897, %v1808
        %v3026 = vmul.f32 %v2898, %v1810
        %v3027 = vmul.f32 %v2899, %v2001
        %v3028 = vmul.f32 %v2900, %v2003
        %v3029 = vpack.c.bf16 %v2905, %v2901
        %v3030 = vpack.c.bf16 %v2906, %v2902
        %v3031 = vpack.c.bf16 %v2907, %v2903
        %v3032 = vpack.c.bf16 %v2908, %v2904
        %v3033 = vpack.c.bf16 %v2913, %v2909
        %v3034 = vpack.c.bf16 %v2914, %v2910
        %v3035 = vpack.c.bf16 %v2915, %v2911
        %v3036 = vpack.c.bf16 %v2916, %v2912
        %v3037 = vpack.c.bf16 %v2921, %v2917
        %v3038 = vpack.c.bf16 %v2922, %v2918
        %v3039 = vpack.c.bf16 %v2923, %v2919
        %v3040 = vpack.c.bf16 %v2924, %v2920
        %v3041 = vpack.c.bf16 %v2929, %v2925
        %v3042 = vpack.c.bf16 %v2930, %v2926
        %v3043 = vpack.c.bf16 %v2931, %v2927
        %v3044 = vpack.c.bf16 %v2932, %v2928
        %v3045 = vpack.c.bf16 %v2937, %v2933
        %v3046 = vpack.c.bf16 %v2938, %v2934
        %v3047 = vpack.c.bf16 %v2939, %v2935
        %v3048 = vpack.c.bf16 %v2940, %v2936
        %v3049 = vpack.c.bf16 %v2945, %v2941
        %v3050 = vpack.c.bf16 %v2946, %v2942
        %v3051 = vpack.c.bf16 %v2947, %v2943
        %v3052 = vpack.c.bf16 %v2948, %v2944
        %v3053 = vpack.c.bf16 %v2953, %v2949
        %v3054 = vpack.c.bf16 %v2954, %v2950
        %v3055 = vpack.c.bf16 %v2955, %v2951
        %v3056 = vpack.c.bf16 %v2956, %v2952
        %v3057 = vpack.c.bf16 %v2961, %v2957
        %v3058 = vpack.c.bf16 %v2962, %v2958
        %v3059 = vpack.c.bf16 %v2963, %v2959
        %v3060 = vpack.c.bf16 %v2964, %v2960
        %v3061 = vpack.c.bf16 %v2969, %v2965
        %v3062 = vpack.c.bf16 %v2970, %v2966
        %v3063 = vpack.c.bf16 %v2971, %v2967
        %v3064 = vpack.c.bf16 %v2972, %v2968
        %v3065 = vpack.c.bf16 %v2977, %v2973
        %v3066 = vpack.c.bf16 %v2978, %v2974
        %v3067 = vpack.c.bf16 %v2979, %v2975
        %v3068 = vpack.c.bf16 %v2980, %v2976
        %v3069 = vpack.c.bf16 %v2985, %v2981
        %v3070 = vpack.c.bf16 %v2986, %v2982
        %v3071 = vpack.c.bf16 %v2987, %v2983
        %v3072 = vpack.c.bf16 %v2988, %v2984
        %v3073 = vpack.c.bf16 %v2993, %v2989
        %v3074 = vpack.c.bf16 %v2994, %v2990
        %v3075 = vpack.c.bf16 %v2995, %v2991
        %v3076 = vpack.c.bf16 %v2996, %v2992
        %v3077 = vpack.c.bf16 %v3001, %v2997
        %v3078 = vpack.c.bf16 %v3002, %v2998
        %v3079 = vpack.c.bf16 %v3003, %v2999
        %v3080 = vpack.c.bf16 %v3004, %v3000
        %v3081 = vpack.c.bf16 %v3009, %v3005
        %v3082 = vpack.c.bf16 %v3010, %v3006
        %v3083 = vpack.c.bf16 %v3011, %v3007
        %v3084 = vpack.c.bf16 %v3012, %v3008
        %v3085 = vpack.c.bf16 %v3017, %v3013
        %v3086 = vpack.c.bf16 %v3018, %v3014
        %v3087 = vpack.c.bf16 %v3019, %v3015
        %v3088 = vpack.c.bf16 %v3020, %v3016
        %v3089 = vpack.c.bf16 %v3025, %v3021
        %v3090 = vpack.c.bf16 %v3026, %v3022
        %v3091 = vpack.c.bf16 %v3027, %v3023
        %v3092 = vpack.c.bf16 %v3028, %v3024
        %v3093 = vld [vmem:[%s223] sm:$0xff]
        %v3094 = vld [vmem:[%s223 + $0x8] sm:$0xff]
        %v3095 = vld [vmem:[%s223 + $0x10] sm:$0xff]
        %v3096 = vld [vmem:[%s223 + $0x18] sm:$0xff]
        %v3097 = vld [vmem:[%s223 + $0x20] sm:$0xff]
        %v3098 = vld [vmem:[%s223 + $0x28] sm:$0xff]
        %v3099 = vld [vmem:[%s223 + $0x30] sm:$0xff]
        %v3100 = vld [vmem:[%s223 + $0x38] sm:$0xff]
        %v3101 = vld [vmem:[%s223 + $0x40] sm:$0xff]
        %v3102 = vld [vmem:[%s223 + $0x48] sm:$0xff]
        %v3103 = vld [vmem:[%s223 + $0x50] sm:$0xff]
        %v3104 = vld [vmem:[%s223 + $0x58] sm:$0xff]
        %v3105 = vld [vmem:[%s223 + $0x60] sm:$0xff]
        %v3106 = vld [vmem:[%s223 + $0x68] sm:$0xff]
        %v3107 = vld [vmem:[%s223 + $0x70] sm:$0xff]
        %v3108 = vld [vmem:[%s223 + $0x78] sm:$0xff]
        %v3109 = vld [vmem:[%s223 + $0x80] sm:$0xff]
        %v3110 = vld [vmem:[%s223 + $0x88] sm:$0xff]
        %v3111 = vld [vmem:[%s223 + $0x90] sm:$0xff]
        %v3112 = vld [vmem:[%s223 + $0x98] sm:$0xff]
        %v3113 = vld [vmem:[%s223 + $0xa0] sm:$0xff]
        %v3114 = vld [vmem:[%s223 + $0xa8] sm:$0xff]
        %v3115 = vld [vmem:[%s223 + $0xb0] sm:$0xff]
        %v3116 = vld [vmem:[%s223 + $0xb8] sm:$0xff]
        %v3117 = vld [vmem:[%s223 + $0xc0] sm:$0xff]
        %v3118 = vld [vmem:[%s223 + $0xc8] sm:$0xff]
        %v3119 = vld [vmem:[%s223 + $0xd0] sm:$0xff]
        %v3120 = vld [vmem:[%s223 + $0xd8] sm:$0xff]
        %v3121 = vld [vmem:[%s223 + $0xe0] sm:$0xff]
        %v3122 = vld [vmem:[%s223 + $0xe8] sm:$0xff]
        %v3123 = vld [vmem:[%s223 + $0xf0] sm:$0xff]
        %v3124 = vld [vmem:[%s223 + $0xf8] sm:$0xff]
        %v3125 = vld [vmem:[%s223 + $0x100] sm:$0xff]
        %v3126 = vld [vmem:[%s223 + $0x108] sm:$0xff]
        %v3127 = vld [vmem:[%s223 + $0x110] sm:$0xff]
        %v3128 = vld [vmem:[%s223 + $0x118] sm:$0xff]
        %v3129 = vld [vmem:[%s223 + $0x120] sm:$0xff]
        %v3130 = vld [vmem:[%s223 + $0x128] sm:$0xff]
        %v3131 = vld [vmem:[%s223 + $0x130] sm:$0xff]
        %v3132 = vld [vmem:[%s223 + $0x138] sm:$0xff]
        %v3133 = vld [vmem:[%s223 + $0x140] sm:$0xff]
        %v3134 = vld [vmem:[%s223 + $0x148] sm:$0xff]
        %v3135 = vld [vmem:[%s223 + $0x150] sm:$0xff]
        %v3136 = vld [vmem:[%s223 + $0x158] sm:$0xff]
        %v3137 = vld [vmem:[%s223 + $0x160] sm:$0xff]
        %v3138 = vld [vmem:[%s223 + $0x168] sm:$0xff]
        %v3139 = vld [vmem:[%s223 + $0x170] sm:$0xff]
        %v3140 = vld [vmem:[%s223 + $0x178] sm:$0xff]
        %v3141 = vld [vmem:[%s223 + $0x180] sm:$0xff]
        %v3142 = vld [vmem:[%s223 + $0x188] sm:$0xff]
        %v3143 = vld [vmem:[%s223 + $0x190] sm:$0xff]
        %v3144 = vld [vmem:[%s223 + $0x198] sm:$0xff]
        %v3145 = vld [vmem:[%s223 + $0x1a0] sm:$0xff]
        %v3146 = vld [vmem:[%s223 + $0x1a8] sm:$0xff]
        %v3147 = vld [vmem:[%s223 + $0x1b0] sm:$0xff]
        %v3148 = vld [vmem:[%s223 + $0x1b8] sm:$0xff]
        %v3149 = vld [vmem:[%s223 + $0x1c0] sm:$0xff]
        %v3150 = vld [vmem:[%s223 + $0x1c8] sm:$0xff]
        %v3151 = vld [vmem:[%s223 + $0x1d0] sm:$0xff]
        %v3152 = vld [vmem:[%s223 + $0x1d8] sm:$0xff]
        %v3153 = vld [vmem:[%s223 + $0x1e0] sm:$0xff]
        %v3154 = vld [vmem:[%s223 + $0x1e8] sm:$0xff]
        %v3155 = vld [vmem:[%s223 + $0x1f0] sm:$0xff]
        %v3156 = vld [vmem:[%s223 + $0x1f8] sm:$0xff]
        %v3221 = vunpack.c.l.b16 %v3093
        %v3222 = vunpack.c.h.b16 %v3093
        %v3223 = vunpack.c.l.b16 %v3094
        %v3224 = vunpack.c.h.b16 %v3094
        %v3225 = vunpack.c.l.b16 %v3095
        %v3226 = vunpack.c.h.b16 %v3095
        %v3227 = vunpack.c.l.b16 %v3096
        %v3228 = vunpack.c.h.b16 %v3096
        %v3229 = vunpack.c.l.b16 %v3097
        %v3230 = vunpack.c.h.b16 %v3097
        %v3231 = vunpack.c.l.b16 %v3098
        %v3232 = vunpack.c.h.b16 %v3098
        %v3233 = vunpack.c.l.b16 %v3099
        %v3234 = vunpack.c.h.b16 %v3099
        %v3235 = vunpack.c.l.b16 %v3100
        %v3236 = vunpack.c.h.b16 %v3100
        %v3237 = vunpack.c.l.b16 %v3101
        %v3238 = vunpack.c.h.b16 %v3101
        %v3239 = vunpack.c.l.b16 %v3102
        %v3240 = vunpack.c.h.b16 %v3102
        %v3241 = vunpack.c.l.b16 %v3103
        %v3242 = vunpack.c.h.b16 %v3103
        %v3243 = vunpack.c.l.b16 %v3104
        %v3244 = vunpack.c.h.b16 %v3104
        %v3245 = vunpack.c.l.b16 %v3105
        %v3246 = vunpack.c.h.b16 %v3105
        %v3247 = vunpack.c.l.b16 %v3106
        %v3248 = vunpack.c.h.b16 %v3106
        %v3249 = vunpack.c.l.b16 %v3107
        %v3250 = vunpack.c.h.b16 %v3107
        %v3251 = vunpack.c.l.b16 %v3108
        %v3252 = vunpack.c.h.b16 %v3108
        %v3253 = vunpack.c.l.b16 %v3109
        %v3254 = vunpack.c.h.b16 %v3109
        %v3255 = vunpack.c.l.b16 %v3110
        %v3256 = vunpack.c.h.b16 %v3110
        %v3257 = vunpack.c.l.b16 %v3111
        %v3258 = vunpack.c.h.b16 %v3111
        %v3259 = vunpack.c.l.b16 %v3112
        %v3260 = vunpack.c.h.b16 %v3112
        %v3261 = vunpack.c.l.b16 %v3113
        %v3262 = vunpack.c.h.b16 %v3113
        %v3263 = vunpack.c.l.b16 %v3114
        %v3264 = vunpack.c.h.b16 %v3114
        %v3265 = vunpack.c.l.b16 %v3115
        %v3266 = vunpack.c.h.b16 %v3115
        %v3267 = vunpack.c.l.b16 %v3116
        %v3268 = vunpack.c.h.b16 %v3116
        %v3269 = vunpack.c.l.b16 %v3117
        %v3270 = vunpack.c.h.b16 %v3117
        %v3271 = vunpack.c.l.b16 %v3118
        %v3272 = vunpack.c.h.b16 %v3118
        %v3273 = vunpack.c.l.b16 %v3119
        %v3274 = vunpack.c.h.b16 %v3119
        %v3275 = vunpack.c.l.b16 %v3120
        %v3276 = vunpack.c.h.b16 %v3120
        %v3277 = vunpack.c.l.b16 %v3121
        %v3278 = vunpack.c.h.b16 %v3121
        %v3279 = vunpack.c.l.b16 %v3122
        %v3280 = vunpack.c.h.b16 %v3122
        %v3281 = vunpack.c.l.b16 %v3123
        %v3282 = vunpack.c.h.b16 %v3123
        %v3283 = vunpack.c.l.b16 %v3124
        %v3284 = vunpack.c.h.b16 %v3124
        %v3285 = vunpack.c.l.b16 %v3125
        %v3286 = vunpack.c.h.b16 %v3125
        %v3287 = vunpack.c.l.b16 %v3126
        %v3288 = vunpack.c.h.b16 %v3126
        %v3289 = vunpack.c.l.b16 %v3127
        %v3290 = vunpack.c.h.b16 %v3127
        %v3291 = vunpack.c.l.b16 %v3128
        %v3292 = vunpack.c.h.b16 %v3128
        %v3293 = vunpack.c.l.b16 %v3129
        %v3294 = vunpack.c.h.b16 %v3129
        %v3295 = vunpack.c.l.b16 %v3130
        %v3296 = vunpack.c.h.b16 %v3130
        %v3297 = vunpack.c.l.b16 %v3131
        %v3298 = vunpack.c.h.b16 %v3131
        %v3299 = vunpack.c.l.b16 %v3132
        %v3300 = vunpack.c.h.b16 %v3132
        %v3301 = vunpack.c.l.b16 %v3133
        %v3302 = vunpack.c.h.b16 %v3133
        %v3303 = vunpack.c.l.b16 %v3134
        %v3304 = vunpack.c.h.b16 %v3134
        %v3305 = vunpack.c.l.b16 %v3135
        %v3306 = vunpack.c.h.b16 %v3135
        %v3307 = vunpack.c.l.b16 %v3136
        %v3308 = vunpack.c.h.b16 %v3136
        %v3309 = vunpack.c.l.b16 %v3137
        %v3310 = vunpack.c.h.b16 %v3137
        %v3311 = vunpack.c.l.b16 %v3138
        %v3312 = vunpack.c.h.b16 %v3138
        %v3313 = vunpack.c.l.b16 %v3139
        %v3314 = vunpack.c.h.b16 %v3139
        %v3315 = vunpack.c.l.b16 %v3140
        %v3316 = vunpack.c.h.b16 %v3140
        %v3317 = vunpack.c.l.b16 %v3141
        %v3318 = vunpack.c.h.b16 %v3141
        %v3319 = vunpack.c.l.b16 %v3142
        %v3320 = vunpack.c.h.b16 %v3142
        %v3321 = vunpack.c.l.b16 %v3143
        %v3322 = vunpack.c.h.b16 %v3143
        %v3323 = vunpack.c.l.b16 %v3144
        %v3324 = vunpack.c.h.b16 %v3144
        %v3325 = vunpack.c.l.b16 %v3145
        %v3326 = vunpack.c.h.b16 %v3145
        %v3327 = vunpack.c.l.b16 %v3146
        %v3328 = vunpack.c.h.b16 %v3146
        %v3329 = vunpack.c.l.b16 %v3147
        %v3330 = vunpack.c.h.b16 %v3147
        %v3331 = vunpack.c.l.b16 %v3148
        %v3332 = vunpack.c.h.b16 %v3148
        %v3333 = vunpack.c.l.b16 %v3149
        %v3334 = vunpack.c.h.b16 %v3149
        %v3335 = vunpack.c.l.b16 %v3150
        %v3336 = vunpack.c.h.b16 %v3150
        %v3337 = vunpack.c.l.b16 %v3151
        %v3338 = vunpack.c.h.b16 %v3151
        %v3339 = vunpack.c.l.b16 %v3152
        %v3340 = vunpack.c.h.b16 %v3152
        %v3341 = vunpack.c.l.b16 %v3153
        %v3342 = vunpack.c.h.b16 %v3153
        %v3343 = vunpack.c.l.b16 %v3154
        %v3344 = vunpack.c.h.b16 %v3154
        %v3345 = vunpack.c.l.b16 %v3155
        %v3346 = vunpack.c.h.b16 %v3155
        %v3347 = vunpack.c.l.b16 %v3156
        %v3348 = vunpack.c.h.b16 %v3156
        %v3349 = vpack.c.b16 %v3223, %v3221
        %v3350 = vpack.c.b16 %v3224, %v3222
        %v3351 = vpack.c.b16 %v3227, %v3225
        %v3352 = vpack.c.b16 %v3228, %v3226
        %v3353 = vpack.c.b16 %v3231, %v3229
        %v3354 = vpack.c.b16 %v3232, %v3230
        %v3355 = vpack.c.b16 %v3235, %v3233
        %v3356 = vpack.c.b16 %v3236, %v3234
        %v3357 = vpack.c.b16 %v3239, %v3237
        %v3358 = vpack.c.b16 %v3240, %v3238
        %v3359 = vpack.c.b16 %v3243, %v3241
        %v3360 = vpack.c.b16 %v3244, %v3242
        %v3361 = vpack.c.b16 %v3247, %v3245
        %v3362 = vpack.c.b16 %v3248, %v3246
        %v3363 = vpack.c.b16 %v3251, %v3249
        %v3364 = vpack.c.b16 %v3252, %v3250
        %v3365 = vpack.c.b16 %v3255, %v3253
        %v3366 = vpack.c.b16 %v3256, %v3254
        %v3367 = vpack.c.b16 %v3259, %v3257
        %v3368 = vpack.c.b16 %v3260, %v3258
        %v3369 = vpack.c.b16 %v3263, %v3261
        %v3370 = vpack.c.b16 %v3264, %v3262
        %v3371 = vpack.c.b16 %v3267, %v3265
        %v3372 = vpack.c.b16 %v3268, %v3266
        %v3373 = vpack.c.b16 %v3271, %v3269
        %v3374 = vpack.c.b16 %v3272, %v3270
        %v3375 = vpack.c.b16 %v3275, %v3273
        %v3376 = vpack.c.b16 %v3276, %v3274
        %v3377 = vpack.c.b16 %v3279, %v3277
        %v3378 = vpack.c.b16 %v3280, %v3278
        %v3379 = vpack.c.b16 %v3283, %v3281
        %v3380 = vpack.c.b16 %v3284, %v3282
        %v3381 = vpack.c.b16 %v3287, %v3285
        %v3382 = vpack.c.b16 %v3288, %v3286
        %v3383 = vpack.c.b16 %v3291, %v3289
        %v3384 = vpack.c.b16 %v3292, %v3290
        %v3385 = vpack.c.b16 %v3295, %v3293
        %v3386 = vpack.c.b16 %v3296, %v3294
        %v3387 = vpack.c.b16 %v3299, %v3297
        %v3388 = vpack.c.b16 %v3300, %v3298
        %v3389 = vpack.c.b16 %v3303, %v3301
        %v3390 = vpack.c.b16 %v3304, %v3302
        %v3391 = vpack.c.b16 %v3307, %v3305
        %v3392 = vpack.c.b16 %v3308, %v3306
        %v3393 = vpack.c.b16 %v3311, %v3309
        %v3394 = vpack.c.b16 %v3312, %v3310
        %v3395 = vpack.c.b16 %v3315, %v3313
        %v3396 = vpack.c.b16 %v3316, %v3314
        %v3397 = vpack.c.b16 %v3319, %v3317
        %v3398 = vpack.c.b16 %v3320, %v3318
        %v3399 = vpack.c.b16 %v3323, %v3321
        %v3400 = vpack.c.b16 %v3324, %v3322
        %v3401 = vpack.c.b16 %v3327, %v3325
        %v3402 = vpack.c.b16 %v3328, %v3326
        %v3403 = vpack.c.b16 %v3331, %v3329
        %v3404 = vpack.c.b16 %v3332, %v3330
        %v3405 = vpack.c.b16 %v3335, %v3333
        %v3406 = vpack.c.b16 %v3336, %v3334
        %v3407 = vpack.c.b16 %v3339, %v3337
        %v3408 = vpack.c.b16 %v3340, %v3338
        %v3409 = vpack.c.b16 %v3343, %v3341
        %v3410 = vpack.c.b16 %v3344, %v3342
        %v3411 = vpack.c.b16 %v3347, %v3345
        %v3412 = vpack.c.b16 %v3348, %v3346
        %3477 = vmatprep.subr.bf16.mxu0 %v3350
        %3478 = vmatpush1.bf16.msra.mxu0 %v3349
        %3479 = vmatprep.subr.bf16.mxu0 %v3352
        %3480 = vmatpush1.bf16.msra.mxu0 %v3351
        %3481 = vmatprep.subr.bf16.mxu0 %v3354
        %3482 = vmatpush1.bf16.msra.mxu0 %v3353
        %3483 = vmatprep.subr.bf16.mxu0 %v3356
        %3484 = vmatpush1.bf16.msra.mxu0 %v3355
        %3485 = vmatprep.subr.bf16.mxu0 %v3358
        %3486 = vmatpush1.bf16.msra.mxu0 %v3357
        %3487 = vmatprep.subr.bf16.mxu0 %v3360
        %3488 = vmatpush1.bf16.msra.mxu0 %v3359
        %3489 = vmatprep.subr.bf16.mxu0 %v3362
        %3490 = vmatpush1.bf16.msra.mxu0 %v3361
        %3491 = vmatprep.subr.bf16.mxu0 %v3364
        %3492 = vmatpush1.bf16.msra.mxu0 %v3363
        %3493 = vmatprep.subr.bf16.mxu0 %v3366
        %3494 = vmatpush1.bf16.msra.mxu0 %v3365
        %3495 = vmatprep.subr.bf16.mxu0 %v3368
        %3496 = vmatpush1.bf16.msra.mxu0 %v3367
        %3497 = vmatprep.subr.bf16.mxu0 %v3370
        %3498 = vmatpush1.bf16.msra.mxu0 %v3369
        %3499 = vmatprep.subr.bf16.mxu0 %v3372
        %3500 = vmatpush1.bf16.msra.mxu0 %v3371
        %3501 = vmatprep.subr.bf16.mxu0 %v3374
        %3502 = vmatpush1.bf16.msra.mxu0 %v3373
        %3503 = vmatprep.subr.bf16.mxu0 %v3376
        %3504 = vmatpush1.bf16.msra.mxu0 %v3375
        %3505 = vmatprep.subr.bf16.mxu0 %v3378
        %3506 = vmatpush1.bf16.msra.mxu0 %v3377
        %3507 = vmatprep.subr.bf16.mxu0 %v3380
        %3508 = vmatpush1.bf16.msra.mxu0 %v3379
        %3509 = vmatprep.mubr.bf16.mxu0 %v3030
        %3510 = vmatmul.mubr.bf16.gmra.mrb[0].mxu0 %v3029
        %v3511 = vpop.f32.mrb[0].mxu0
        %v3512 = vadd.f32 0.0, %v3511
        %v3513 = vpop.f32.mrb[0].mxu0
        %v3514 = vadd.f32 0.0, %v3513
        %v3515 = vpop.f32.mrb[0].mxu0
        %v3516 = vadd.f32 0.0, %v3515
        %v3517 = vpop.f32.mrb[0].mxu0
        %v3518 = vadd.f32 0.0, %v3517
        %3519 = vmatprep.mubr.bf16.mxu0 %v3034
        %3520 = vmatmul.mubr.bf16.gmra.mrb[0].mxu0 %v3033
        %v3521 = vpop.f32.mrb[0].mxu0
        %v3522 = vadd.f32 0.0, %v3521
        %v3523 = vpop.f32.mrb[0].mxu0
        %v3524 = vadd.f32 0.0, %v3523
        %v3525 = vpop.f32.mrb[0].mxu0
        %v3526 = vadd.f32 0.0, %v3525
        %v3527 = vpop.f32.mrb[0].mxu0
        %v3528 = vadd.f32 0.0, %v3527
        %3529 = vmatprep.mubr.bf16.mxu0 %v3038
        %3530 = vmatmul.mubr.bf16.gmra.mrb[0].mxu0 %v3037
        %v3531 = vpop.f32.mrb[0].mxu0
        %v3532 = vadd.f32 0.0, %v3531
        %v3533 = vpop.f32.mrb[0].mxu0
        %v3534 = vadd.f32 0.0, %v3533
        %v3535 = vpop.f32.mrb[0].mxu0
        %v3536 = vadd.f32 0.0, %v3535
        %v3537 = vpop.f32.mrb[0].mxu0
        %v3538 = vadd.f32 0.0, %v3537
        %3539 = vmatprep.mubr.bf16.mxu0 %v3042
        %3540 = vmatmul.mubr.bf16.gmra.mrb[0].mxu0 %v3041
        %v3541 = vpop.f32.mrb[0].mxu0
        %v3542 = vadd.f32 0.0, %v3541
        %v3543 = vpop.f32.mrb[0].mxu0
        %v3544 = vadd.f32 0.0, %v3543
        %v3545 = vpop.f32.mrb[0].mxu0
        %v3546 = vadd.f32 0.0, %v3545
        %v3547 = vpop.f32.mrb[0].mxu0
        %v3548 = vadd.f32 0.0, %v3547
        %3549 = vmatprep.mubr.bf16.mxu0 %v3046
        %3550 = vmatmul.mubr.bf16.gmra.mrb[0].mxu0 %v3045
        %v3551 = vpop.f32.mrb[0].mxu0
        %v3552 = vadd.f32 0.0, %v3551
        %v3553 = vpop.f32.mrb[0].mxu0
        %v3554 = vadd.f32 0.0, %v3553
        %v3555 = vpop.f32.mrb[0].mxu0
        %v3556 = vadd.f32 0.0, %v3555
        %v3557 = vpop.f32.mrb[0].mxu0
        %v3558 = vadd.f32 0.0, %v3557
        %3559 = vmatprep.mubr.bf16.mxu0 %v3050
        %3560 = vmatmul.mubr.bf16.gmra.mrb[0].mxu0 %v3049
        %v3561 = vpop.f32.mrb[0].mxu0
        %v3562 = vadd.f32 0.0, %v3561
        %v3563 = vpop.f32.mrb[0].mxu0
        %v3564 = vadd.f32 0.0, %v3563
        %v3565 = vpop.f32.mrb[0].mxu0
        %v3566 = vadd.f32 0.0, %v3565
        %v3567 = vpop.f32.mrb[0].mxu0
        %v3568 = vadd.f32 0.0, %v3567
        %3569 = vmatprep.mubr.bf16.mxu0 %v3054
        %3570 = vmatmul.mubr.bf16.gmra.mrb[0].mxu0 %v3053
        %v3571 = vpop.f32.mrb[0].mxu0
        %v3572 = vadd.f32 0.0, %v3571
        %v3573 = vpop.f32.mrb[0].mxu0
        %v3574 = vadd.f32 0.0, %v3573
        %v3575 = vpop.f32.mrb[0].mxu0
        %v3576 = vadd.f32 0.0, %v3575
        %v3577 = vpop.f32.mrb[0].mxu0
        %v3578 = vadd.f32 0.0, %v3577
        %3579 = vmatprep.mubr.bf16.mxu0 %v3058
        %3580 = vmatmul.mubr.bf16.gmra.mrb[0].mxu0 %v3057
        %v3581 = vpop.f32.mrb[0].mxu0
        %v3582 = vadd.f32 0.0, %v3581
        %v3583 = vpop.f32.mrb[0].mxu0
        %v3584 = vadd.f32 0.0, %v3583
        %v3585 = vpop.f32.mrb[0].mxu0
        %v3586 = vadd.f32 0.0, %v3585
        %v3587 = vpop.f32.mrb[0].mxu0
        %v3588 = vadd.f32 0.0, %v3587
        %3589 = vmatprep.mubr.bf16.mxu0 %v3062
        %3590 = vmatmul.mubr.bf16.gmra.mrb[0].mxu0 %v3061
        %v3591 = vpop.f32.mrb[0].mxu0
        %v3592 = vadd.f32 0.0, %v3591
        %v3593 = vpop.f32.mrb[0].mxu0
        %v3594 = vadd.f32 0.0, %v3593
        %v3595 = vpop.f32.mrb[0].mxu0
        %v3596 = vadd.f32 0.0, %v3595
        %v3597 = vpop.f32.mrb[0].mxu0
        %v3598 = vadd.f32 0.0, %v3597
        %3599 = vmatprep.mubr.bf16.mxu0 %v3066
        %3600 = vmatmul.mubr.bf16.gmra.mrb[0].mxu0 %v3065
        %v3601 = vpop.f32.mrb[0].mxu0
        %v3602 = vadd.f32 0.0, %v3601
        %v3603 = vpop.f32.mrb[0].mxu0
        %v3604 = vadd.f32 0.0, %v3603
        %v3605 = vpop.f32.mrb[0].mxu0
        %v3606 = vadd.f32 0.0, %v3605
        %v3607 = vpop.f32.mrb[0].mxu0
        %v3608 = vadd.f32 0.0, %v3607
        %3609 = vmatprep.mubr.bf16.mxu0 %v3070
        %3610 = vmatmul.mubr.bf16.gmra.mrb[0].mxu0 %v3069
        %v3611 = vpop.f32.mrb[0].mxu0
        %v3612 = vadd.f32 0.0, %v3611
        %v3613 = vpop.f32.mrb[0].mxu0
        %v3614 = vadd.f32 0.0, %v3613
        %v3615 = vpop.f32.mrb[0].mxu0
        %v3616 = vadd.f32 0.0, %v3615
        %v3617 = vpop.f32.mrb[0].mxu0
        %v3618 = vadd.f32 0.0, %v3617
        %3619 = vmatprep.mubr.bf16.mxu0 %v3074
        %3620 = vmatmul.mubr.bf16.gmra.mrb[0].mxu0 %v3073
        %v3621 = vpop.f32.mrb[0].mxu0
        %v3622 = vadd.f32 0.0, %v3621
        %v3623 = vpop.f32.mrb[0].mxu0
        %v3624 = vadd.f32 0.0, %v3623
        %v3625 = vpop.f32.mrb[0].mxu0
        %v3626 = vadd.f32 0.0, %v3625
        %v3627 = vpop.f32.mrb[0].mxu0
        %v3628 = vadd.f32 0.0, %v3627
        %3629 = vmatprep.mubr.bf16.mxu0 %v3078
        %3630 = vmatmul.mubr.bf16.gmra.mrb[0].mxu0 %v3077
        %v3631 = vpop.f32.mrb[0].mxu0
        %v3632 = vadd.f32 0.0, %v3631
        %v3633 = vpop.f32.mrb[0].mxu0
        %v3634 = vadd.f32 0.0, %v3633
        %v3635 = vpop.f32.mrb[0].mxu0
        %v3636 = vadd.f32 0.0, %v3635
        %v3637 = vpop.f32.mrb[0].mxu0
        %v3638 = vadd.f32 0.0, %v3637
        %3639 = vmatprep.mubr.bf16.mxu0 %v3082
        %3640 = vmatmul.mubr.bf16.gmra.mrb[0].mxu0 %v3081
        %v3641 = vpop.f32.mrb[0].mxu0
        %v3642 = vadd.f32 0.0, %v3641
        %v3643 = vpop.f32.mrb[0].mxu0
        %v3644 = vadd.f32 0.0, %v3643
        %v3645 = vpop.f32.mrb[0].mxu0
        %v3646 = vadd.f32 0.0, %v3645
        %v3647 = vpop.f32.mrb[0].mxu0
        %v3648 = vadd.f32 0.0, %v3647
        %3649 = vmatprep.mubr.bf16.mxu0 %v3086
        %3650 = vmatmul.mubr.bf16.gmra.mrb[0].mxu0 %v3085
        %v3651 = vpop.f32.mrb[0].mxu0
        %v3652 = vadd.f32 0.0, %v3651
        %v3653 = vpop.f32.mrb[0].mxu0
        %v3654 = vadd.f32 0.0, %v3653
        %v3655 = vpop.f32.mrb[0].mxu0
        %v3656 = vadd.f32 0.0, %v3655
        %v3657 = vpop.f32.mrb[0].mxu0
        %v3658 = vadd.f32 0.0, %v3657
        %3659 = vmatprep.mubr.bf16.mxu0 %v3090
        %3660 = vmatmul.mubr.bf16.gmra.mrb[0].mxu0 %v3089
        %v3661 = vpop.f32.mrb[0].mxu0
        %v3662 = vadd.f32 0.0, %v3661
        %v3663 = vpop.f32.mrb[0].mxu0
        %v3664 = vadd.f32 0.0, %v3663
        %v3665 = vpop.f32.mrb[0].mxu0
        %v3666 = vadd.f32 0.0, %v3665
        %v3667 = vpop.f32.mrb[0].mxu0
        %v3668 = vadd.f32 0.0, %v3667
        %3669 = vdwg.mxu0
        %3670 = vmatprep.subr.bf16.mxu0 %v3382
        %3671 = vmatpush1.bf16.msra.mxu0 %v3381
        %3672 = vmatprep.subr.bf16.mxu0 %v3384
        %3673 = vmatpush1.bf16.msra.mxu0 %v3383
        %3674 = vmatprep.subr.bf16.mxu0 %v3386
        %3675 = vmatpush1.bf16.msra.mxu0 %v3385
        %3676 = vmatprep.subr.bf16.mxu0 %v3388
        %3677 = vmatpush1.bf16.msra.mxu0 %v3387
        %3678 = vmatprep.subr.bf16.mxu0 %v3390
        %3679 = vmatpush1.bf16.msra.mxu0 %v3389
        %3680 = vmatprep.subr.bf16.mxu0 %v3392
        %3681 = vmatpush1.bf16.msra.mxu0 %v3391
        %3682 = vmatprep.subr.bf16.mxu0 %v3394
        %3683 = vmatpush1.bf16.msra.mxu0 %v3393
        %3684 = vmatprep.subr.bf16.mxu0 %v3396
        %3685 = vmatpush1.bf16.msra.mxu0 %v3395
        %3686 = vmatprep.subr.bf16.mxu0 %v3398
        %3687 = vmatpush1.bf16.msra.mxu0 %v3397
        %3688 = vmatprep.subr.bf16.mxu0 %v3400
        %3689 = vmatpush1.bf16.msra.mxu0 %v3399
        %3690 = vmatprep.subr.bf16.mxu0 %v3402
        %3691 = vmatpush1.bf16.msra.mxu0 %v3401
        %3692 = vmatprep.subr.bf16.mxu0 %v3404
        %3693 = vmatpush1.bf16.msra.mxu0 %v3403
        %3694 = vmatprep.subr.bf16.mxu0 %v3406
        %3695 = vmatpush1.bf16.msra.mxu0 %v3405
        %3696 = vmatprep.subr.bf16.mxu0 %v3408
        %3697 = vmatpush1.bf16.msra.mxu0 %v3407
        %3698 = vmatprep.subr.bf16.mxu0 %v3410
        %3699 = vmatpush1.bf16.msra.mxu0 %v3409
        %3700 = vmatprep.subr.bf16.mxu0 %v3412
        %3701 = vmatpush1.bf16.msra.mxu0 %v3411
        %3702 = vmatprep.mubr.bf16.mxu0 %v3032
        %3703 = vmatmul.mubr.bf16.gmra.mrb[0].mxu0 %v3031
        %v3704 = vpop.f32.mrb[0].mxu0
        %v3705 = vadd.f32 %v3512, %v3704
        %v3706 = vpop.f32.mrb[0].mxu0
        %v3707 = vadd.f32 %v3514, %v3706
        %v3708 = vpop.f32.mrb[0].mxu0
        %v3709 = vadd.f32 %v3516, %v3708
        %v3710 = vpop.f32.mrb[0].mxu0
        %v3711 = vadd.f32 %v3518, %v3710
        %3712 = vmatprep.mubr.bf16.mxu0 %v3036
        %3713 = vmatmul.mubr.bf16.gmra.mrb[0].mxu0 %v3035
        %v3714 = vpop.f32.mrb[0].mxu0
        %v3715 = vadd.f32 %v3522, %v3714
        %v3716 = vpop.f32.mrb[0].mxu0
        %v3717 = vadd.f32 %v3524, %v3716
        %v3718 = vpop.f32.mrb[0].mxu0
        %v3719 = vadd.f32 %v3526, %v3718
        %v3720 = vpop.f32.mrb[0].mxu0
        %v3721 = vadd.f32 %v3528, %v3720
        %3722 = vmatprep.mubr.bf16.mxu0 %v3040
        %3723 = vmatmul.mubr.bf16.gmra.mrb[0].mxu0 %v3039
        %v3724 = vpop.f32.mrb[0].mxu0
        %v3725 = vadd.f32 %v3532, %v3724
        %v3726 = vpop.f32.mrb[0].mxu0
        %v3727 = vadd.f32 %v3534, %v3726
        %v3728 = vpop.f32.mrb[0].mxu0
        %v3729 = vadd.f32 %v3536, %v3728
        %v3730 = vpop.f32.mrb[0].mxu0
        %v3731 = vadd.f32 %v3538, %v3730
        %3732 = vmatprep.mubr.bf16.mxu0 %v3044
        %3733 = vmatmul.mubr.bf16.gmra.mrb[0].mxu0 %v3043
        %v3734 = vpop.f32.mrb[0].mxu0
        %v3735 = vadd.f32 %v3542, %v3734
        %v3736 = vpop.f32.mrb[0].mxu0
        %v3737 = vadd.f32 %v3544, %v3736
        %v3738 = vpop.f32.mrb[0].mxu0
        %v3739 = vadd.f32 %v3546, %v3738
        %v3740 = vpop.f32.mrb[0].mxu0
        %v3741 = vadd.f32 %v3548, %v3740
        %3742 = vmatprep.mubr.bf16.mxu0 %v3048
        %3743 = vmatmul.mubr.bf16.gmra.mrb[0].mxu0 %v3047
        %v3744 = vpop.f32.mrb[0].mxu0
        %v3745 = vadd.f32 %v3552, %v3744
        %v3746 = vpop.f32.mrb[0].mxu0
        %v3747 = vadd.f32 %v3554, %v3746
        %v3748 = vpop.f32.mrb[0].mxu0
        %v3749 = vadd.f32 %v3556, %v3748
        %v3750 = vpop.f32.mrb[0].mxu0
        %v3751 = vadd.f32 %v3558, %v3750
        %3752 = vmatprep.mubr.bf16.mxu0 %v3052
        %3753 = vmatmul.mubr.bf16.gmra.mrb[0].mxu0 %v3051
        %v3754 = vpop.f32.mrb[0].mxu0
        %v3755 = vadd.f32 %v3562, %v3754
        %v3756 = vpop.f32.mrb[0].mxu0
        %v3757 = vadd.f32 %v3564, %v3756
        %v3758 = vpop.f32.mrb[0].mxu0
        %v3759 = vadd.f32 %v3566, %v3758
        %v3760 = vpop.f32.mrb[0].mxu0
        %v3761 = vadd.f32 %v3568, %v3760
        %3762 = vmatprep.mubr.bf16.mxu0 %v3056
        %3763 = vmatmul.mubr.bf16.gmra.mrb[0].mxu0 %v3055
        %v3764 = vpop.f32.mrb[0].mxu0
        %v3765 = vadd.f32 %v3572, %v3764
        %v3766 = vpop.f32.mrb[0].mxu0
        %v3767 = vadd.f32 %v3574, %v3766
        %v3768 = vpop.f32.mrb[0].mxu0
        %v3769 = vadd.f32 %v3576, %v3768
        %v3770 = vpop.f32.mrb[0].mxu0
        %v3771 = vadd.f32 %v3578, %v3770
        %3772 = vmatprep.mubr.bf16.mxu0 %v3060
        %3773 = vmatmul.mubr.bf16.gmra.mrb[0].mxu0 %v3059
        %v3774 = vpop.f32.mrb[0].mxu0
        %v3775 = vadd.f32 %v3582, %v3774
        %v3776 = vpop.f32.mrb[0].mxu0
        %v3777 = vadd.f32 %v3584, %v3776
        %v3778 = vpop.f32.mrb[0].mxu0
        %v3779 = vadd.f32 %v3586, %v3778
        %v3780 = vpop.f32.mrb[0].mxu0
        %v3781 = vadd.f32 %v3588, %v3780
        %3782 = vmatprep.mubr.bf16.mxu0 %v3064
        %3783 = vmatmul.mubr.bf16.gmra.mrb[0].mxu0 %v3063
        %v3784 = vpop.f32.mrb[0].mxu0
        %v3785 = vadd.f32 %v3592, %v3784
        %v3786 = vpop.f32.mrb[0].mxu0
        %v3787 = vadd.f32 %v3594, %v3786
        %v3788 = vpop.f32.mrb[0].mxu0
        %v3789 = vadd.f32 %v3596, %v3788
        %v3790 = vpop.f32.mrb[0].mxu0
        %v3791 = vadd.f32 %v3598, %v3790
        %3792 = vmatprep.mubr.bf16.mxu0 %v3068
        %3793 = vmatmul.mubr.bf16.gmra.mrb[0].mxu0 %v3067
        %v3794 = vpop.f32.mrb[0].mxu0
        %v3795 = vadd.f32 %v3602, %v3794
        %v3796 = vpop.f32.mrb[0].mxu0
        %v3797 = vadd.f32 %v3604, %v3796
        %v3798 = vpop.f32.mrb[0].mxu0
        %v3799 = vadd.f32 %v3606, %v3798
        %v3800 = vpop.f32.mrb[0].mxu0
        %v3801 = vadd.f32 %v3608, %v3800
        %3802 = vmatprep.mubr.bf16.mxu0 %v3072
        %3803 = vmatmul.mubr.bf16.gmra.mrb[0].mxu0 %v3071
        %v3804 = vpop.f32.mrb[0].mxu0
        %v3805 = vadd.f32 %v3612, %v3804
        %v3806 = vpop.f32.mrb[0].mxu0
        %v3807 = vadd.f32 %v3614, %v3806
        %v3808 = vpop.f32.mrb[0].mxu0
        %v3809 = vadd.f32 %v3616, %v3808
        %v3810 = vpop.f32.mrb[0].mxu0
        %v3811 = vadd.f32 %v3618, %v3810
        %3812 = vmatprep.mubr.bf16.mxu0 %v3076
        %3813 = vmatmul.mubr.bf16.gmra.mrb[0].mxu0 %v3075
        %v3814 = vpop.f32.mrb[0].mxu0
        %v3815 = vadd.f32 %v3622, %v3814
        %v3816 = vpop.f32.mrb[0].mxu0
        %v3817 = vadd.f32 %v3624, %v3816
        %v3818 = vpop.f32.mrb[0].mxu0
        %v3819 = vadd.f32 %v3626, %v3818
        %v3820 = vpop.f32.mrb[0].mxu0
        %v3821 = vadd.f32 %v3628, %v3820
        %3822 = vmatprep.mubr.bf16.mxu0 %v3080
        %3823 = vmatmul.mubr.bf16.gmra.mrb[0].mxu0 %v3079
        %v3824 = vpop.f32.mrb[0].mxu0
        %v3825 = vadd.f32 %v3632, %v3824
        %v3826 = vpop.f32.mrb[0].mxu0
        %v3827 = vadd.f32 %v3634, %v3826
        %v3828 = vpop.f32.mrb[0].mxu0
        %v3829 = vadd.f32 %v3636, %v3828
        %v3830 = vpop.f32.mrb[0].mxu0
        %v3831 = vadd.f32 %v3638, %v3830
        %3832 = vmatprep.mubr.bf16.mxu0 %v3084
        %3833 = vmatmul.mubr.bf16.gmra.mrb[0].mxu0 %v3083
        %v3834 = vpop.f32.mrb[0].mxu0
        %v3835 = vadd.f32 %v3642, %v3834
        %v3836 = vpop.f32.mrb[0].mxu0
        %v3837 = vadd.f32 %v3644, %v3836
        %v3838 = vpop.f32.mrb[0].mxu0
        %v3839 = vadd.f32 %v3646, %v3838
        %v3840 = vpop.f32.mrb[0].mxu0
        %v3841 = vadd.f32 %v3648, %v3840
        %3842 = vmatprep.mubr.bf16.mxu0 %v3088
        %3843 = vmatmul.mubr.bf16.gmra.mrb[0].mxu0 %v3087
        %v3844 = vpop.f32.mrb[0].mxu0
        %v3845 = vadd.f32 %v3652, %v3844
        %v3846 = vpop.f32.mrb[0].mxu0
        %v3847 = vadd.f32 %v3654, %v3846
        %v3848 = vpop.f32.mrb[0].mxu0
        %v3849 = vadd.f32 %v3656, %v3848
        %v3850 = vpop.f32.mrb[0].mxu0
        %v3851 = vadd.f32 %v3658, %v3850
        %3852 = vmatprep.mubr.bf16.mxu0 %v3092
        %3853 = vmatmul.mubr.bf16.gmra.mrb[0].mxu0 %v3091
        %v3854 = vpop.f32.mrb[0].mxu0
        %v3855 = vadd.f32 %v3662, %v3854
        %v3856 = vpop.f32.mrb[0].mxu0
        %v3857 = vadd.f32 %v3664, %v3856
        %v3858 = vpop.f32.mrb[0].mxu0
        %v3859 = vadd.f32 %v3666, %v3858
        %v3860 = vpop.f32.mrb[0].mxu0
        %v3861 = vadd.f32 %v3668, %v3860
        %3862 = vdwg.mxu0
        %p3863 = scmp.eq.s32.totalorder %s25, 0
        // Predicated region
        $region41: #{qwen2_mlp.1} parent=31 // pred_check
          %p3864 = pneg %p3863
        $region42: #{qwen2_mlp.1} parent=31 // pred_check_branch
          %3866 = sbr.rel (%p3864) target = $region44
        $region43: #{qwen2_mlp.1} parent=31 // pred_region
          %3867 = vst [vmem:[#allocation2] sm:$0xff] %v3705
          %3868 = vst [vmem:[#allocation2 + $0x8] sm:$0xff] %v3707
          %3869 = vst [vmem:[#allocation2 + $0x10] sm:$0xff] %v3709
          %3870 = vst [vmem:[#allocation2 + $0x18] sm:$0xff] %v3711
          %3871 = vst [vmem:[#allocation2 + $0x20] sm:$0xff] %v3715
          %3872 = vst [vmem:[#allocation2 + $0x28] sm:$0xff] %v3717
          %3873 = vst [vmem:[#allocation2 + $0x30] sm:$0xff] %v3719
          %3874 = vst [vmem:[#allocation2 + $0x38] sm:$0xff] %v3721
          %3875 = vst [vmem:[#allocation2 + $0x40] sm:$0xff] %v3725
          %3876 = vst [vmem:[#allocation2 + $0x48] sm:$0xff] %v3727
          %3877 = vst [vmem:[#allocation2 + $0x50] sm:$0xff] %v3729
          %3878 = vst [vmem:[#allocation2 + $0x58] sm:$0xff] %v3731
          %3879 = vst [vmem:[#allocation2 + $0x60] sm:$0xff] %v3735
          %3880 = vst [vmem:[#allocation2 + $0x68] sm:$0xff] %v3737
          %3881 = vst [vmem:[#allocation2 + $0x70] sm:$0xff] %v3739
          %3882 = vst [vmem:[#allocation2 + $0x78] sm:$0xff] %v3741
          %3883 = vst [vmem:[#allocation2 + $0x80] sm:$0xff] %v3745
          %3884 = vst [vmem:[#allocation2 + $0x88] sm:$0xff] %v3747
          %3885 = vst [vmem:[#allocation2 + $0x90] sm:$0xff] %v3749
          %3886 = vst [vmem:[#allocation2 + $0x98] sm:$0xff] %v3751
          %3887 = vst [vmem:[#allocation2 + $0xa0] sm:$0xff] %v3755
          %3888 = vst [vmem:[#allocation2 + $0xa8] sm:$0xff] %v3757
          %3889 = vst [vmem:[#allocation2 + $0xb0] sm:$0xff] %v3759
          %3890 = vst [vmem:[#allocation2 + $0xb8] sm:$0xff] %v3761
          %3891 = vst [vmem:[#allocation2 + $0xc0] sm:$0xff] %v3765
          %3892 = vst [vmem:[#allocation2 + $0xc8] sm:$0xff] %v3767
          %3893 = vst [vmem:[#allocation2 + $0xd0] sm:$0xff] %v3769
          %3894 = vst [vmem:[#allocation2 + $0xd8] sm:$0xff] %v3771
          %3895 = vst [vmem:[#allocation2 + $0xe0] sm:$0xff] %v3775
          %3896 = vst [vmem:[#allocation2 + $0xe8] sm:$0xff] %v3777
          %3897 = vst [vmem:[#allocation2 + $0xf0] sm:$0xff] %v3779
          %3898 = vst [vmem:[#allocation2 + $0xf8] sm:$0xff] %v3781
          %3899 = vst [vmem:[#allocation2 + $0x100] sm:$0xff] %v3785
          %3900 = vst [vmem:[#allocation2 + $0x108] sm:$0xff] %v3787
          %3901 = vst [vmem:[#allocation2 + $0x110] sm:$0xff] %v3789
          %3902 = vst [vmem:[#allocation2 + $0x118] sm:$0xff] %v3791
          %3903 = vst [vmem:[#allocation2 + $0x120] sm:$0xff] %v3795
          %3904 = vst [vmem:[#allocation2 + $0x128] sm:$0xff] %v3797
          %3905 = vst [vmem:[#allocation2 + $0x130] sm:$0xff] %v3799
          %3906 = vst [vmem:[#allocation2 + $0x138] sm:$0xff] %v3801
          %3907 = vst [vmem:[#allocation2 + $0x140] sm:$0xff] %v3805
          %3908 = vst [vmem:[#allocation2 + $0x148] sm:$0xff] %v3807
          %3909 = vst [vmem:[#allocation2 + $0x150] sm:$0xff] %v3809
          %3910 = vst [vmem:[#allocation2 + $0x158] sm:$0xff] %v3811
          %3911 = vst [vmem:[#allocation2 + $0x160] sm:$0xff] %v3815
          %3912 = vst [vmem:[#allocation2 + $0x168] sm:$0xff] %v3817
          %3913 = vst [vmem:[#allocation2 + $0x170] sm:$0xff] %v3819
          %3914 = vst [vmem:[#allocation2 + $0x178] sm:$0xff] %v3821
          %3915 = vst [vmem:[#allocation2 + $0x180] sm:$0xff] %v3825
          %3916 = vst [vmem:[#allocation2 + $0x188] sm:$0xff] %v3827
          %3917 = vst [vmem:[#allocation2 + $0x190] sm:$0xff] %v3829
          %3918 = vst [vmem:[#allocation2 + $0x198] sm:$0xff] %v3831
          %3919 = vst [vmem:[#allocation2 + $0x1a0] sm:$0xff] %v3835
          %3920 = vst [vmem:[#allocation2 + $0x1a8] sm:$0xff] %v3837
          %3921 = vst [vmem:[#allocation2 + $0x1b0] sm:$0xff] %v3839
          %3922 = vst [vmem:[#allocation2 + $0x1b8] sm:$0xff] %v3841
          %3923 = vst [vmem:[#allocation2 + $0x1c0] sm:$0xff] %v3845
          %3924 = vst [vmem:[#allocation2 + $0x1c8] sm:$0xff] %v3847
          %3925 = vst [vmem:[#allocation2 + $0x1d0] sm:$0xff] %v3849
          %3926 = vst [vmem:[#allocation2 + $0x1d8] sm:$0xff] %v3851
          %3927 = vst [vmem:[#allocation2 + $0x1e0] sm:$0xff] %v3855
          %3928 = vst [vmem:[#allocation2 + $0x1e8] sm:$0xff] %v3857
          %3929 = vst [vmem:[#allocation2 + $0x1f0] sm:$0xff] %v3859
          %3930 = vst [vmem:[#allocation2 + $0x1f8] sm:$0xff] %v3861
        $region44: #{qwen2_mlp.1} parent=31 // pred_fallthru
          _
        %p3931 = scmp.gt.s32.totalorder %s25, 0
        %p3932 = scmp.lt.s32.totalorder %s25, 1
        %p3933 = pnand %p3931, %p3932
        %p3934 = pneg %p3933
        // Predicated region
        $region45: #{qwen2_mlp.1} parent=31 // pred_check
          _
        $region46: #{qwen2_mlp.1} parent=31 // pred_check_branch
          %3936 = sbr.rel (%p3933) target = $region48
        $region47: #{qwen2_mlp.1} parent=31 // pred_region
          %v3937 = vld [vmem:[#allocation2] sm:$0xff]
          %v3938 = vld [vmem:[#allocation2 + $0x8] sm:$0xff]
          %v3939 = vld [vmem:[#allocation2 + $0x10] sm:$0xff]
          %v3940 = vld [vmem:[#allocation2 + $0x18] sm:$0xff]
          %v3941 = vld [vmem:[#allocation2 + $0x20] sm:$0xff]
          %v3942 = vld [vmem:[#allocation2 + $0x28] sm:$0xff]
          %v3943 = vld [vmem:[#allocation2 + $0x30] sm:$0xff]
          %v3944 = vld [vmem:[#allocation2 + $0x38] sm:$0xff]
          %v3945 = vld [vmem:[#allocation2 + $0x40] sm:$0xff]
          %v3946 = vld [vmem:[#allocation2 + $0x48] sm:$0xff]
          %v3947 = vld [vmem:[#allocation2 + $0x50] sm:$0xff]
          %v3948 = vld [vmem:[#allocation2 + $0x58] sm:$0xff]
          %v3949 = vld [vmem:[#allocation2 + $0x60] sm:$0xff]
          %v3950 = vld [vmem:[#allocation2 + $0x68] sm:$0xff]
          %v3951 = vld [vmem:[#allocation2 + $0x70] sm:$0xff]
          %v3952 = vld [vmem:[#allocation2 + $0x78] sm:$0xff]
          %v3953 = vld [vmem:[#allocation2 + $0x80] sm:$0xff]
          %v3954 = vld [vmem:[#allocation2 + $0x88] sm:$0xff]
          %v3955 = vld [vmem:[#allocation2 + $0x90] sm:$0xff]
          %v3956 = vld [vmem:[#allocation2 + $0x98] sm:$0xff]
          %v3957 = vld [vmem:[#allocation2 + $0xa0] sm:$0xff]
          %v3958 = vld [vmem:[#allocation2 + $0xa8] sm:$0xff]
          %v3959 = vld [vmem:[#allocation2 + $0xb0] sm:$0xff]
          %v3960 = vld [vmem:[#allocation2 + $0xb8] sm:$0xff]
          %v3961 = vld [vmem:[#allocation2 + $0xc0] sm:$0xff]
          %v3962 = vld [vmem:[#allocation2 + $0xc8] sm:$0xff]
          %v3963 = vld [vmem:[#allocation2 + $0xd0] sm:$0xff]
          %v3964 = vld [vmem:[#allocation2 + $0xd8] sm:$0xff]
          %v3965 = vld [vmem:[#allocation2 + $0xe0] sm:$0xff]
          %v3966 = vld [vmem:[#allocation2 + $0xe8] sm:$0xff]
          %v3967 = vld [vmem:[#allocation2 + $0xf0] sm:$0xff]
          %v3968 = vld [vmem:[#allocation2 + $0xf8] sm:$0xff]
          %v3969 = vld [vmem:[#allocation2 + $0x100] sm:$0xff]
          %v3970 = vld [vmem:[#allocation2 + $0x108] sm:$0xff]
          %v3971 = vld [vmem:[#allocation2 + $0x110] sm:$0xff]
          %v3972 = vld [vmem:[#allocation2 + $0x118] sm:$0xff]
          %v3973 = vld [vmem:[#allocation2 + $0x120] sm:$0xff]
          %v3974 = vld [vmem:[#allocation2 + $0x128] sm:$0xff]
          %v3975 = vld [vmem:[#allocation2 + $0x130] sm:$0xff]
          %v3976 = vld [vmem:[#allocation2 + $0x138] sm:$0xff]
          %v3977 = vld [vmem:[#allocation2 + $0x140] sm:$0xff]
          %v3978 = vld [vmem:[#allocation2 + $0x148] sm:$0xff]
          %v3979 = vld [vmem:[#allocation2 + $0x150] sm:$0xff]
          %v3980 = vld [vmem:[#allocation2 + $0x158] sm:$0xff]
          %v3981 = vld [vmem:[#allocation2 + $0x160] sm:$0xff]
          %v3982 = vld [vmem:[#allocation2 + $0x168] sm:$0xff]
          %v3983 = vld [vmem:[#allocation2 + $0x170] sm:$0xff]
          %v3984 = vld [vmem:[#allocation2 + $0x178] sm:$0xff]
          %v3985 = vld [vmem:[#allocation2 + $0x180] sm:$0xff]
          %v3986 = vld [vmem:[#allocation2 + $0x188] sm:$0xff]
          %v3987 = vld [vmem:[#allocation2 + $0x190] sm:$0xff]
          %v3988 = vld [vmem:[#allocation2 + $0x198] sm:$0xff]
          %v3989 = vld [vmem:[#allocation2 + $0x1a0] sm:$0xff]
          %v3990 = vld [vmem:[#allocation2 + $0x1a8] sm:$0xff]
          %v3991 = vld [vmem:[#allocation2 + $0x1b0] sm:$0xff]
          %v3992 = vld [vmem:[#allocation2 + $0x1b8] sm:$0xff]
          %v3993 = vld [vmem:[#allocation2 + $0x1c0] sm:$0xff]
          %v3994 = vld [vmem:[#allocation2 + $0x1c8] sm:$0xff]
          %v3995 = vld [vmem:[#allocation2 + $0x1d0] sm:$0xff]
          %v3996 = vld [vmem:[#allocation2 + $0x1d8] sm:$0xff]
          %v3997 = vld [vmem:[#allocation2 + $0x1e0] sm:$0xff]
          %v3998 = vld [vmem:[#allocation2 + $0x1e8] sm:$0xff]
          %v3999 = vld [vmem:[#allocation2 + $0x1f0] sm:$0xff]
          %v4000 = vld [vmem:[#allocation2 + $0x1f8] sm:$0xff]
          %v4001 = vadd.f32 %v3937, %v3705
          %v4002 = vadd.f32 %v3938, %v3707
          %v4003 = vadd.f32 %v3939, %v3709
          %v4004 = vadd.f32 %v3940, %v3711
          %v4005 = vadd.f32 %v3941, %v3715
          %v4006 = vadd.f32 %v3942, %v3717
          %v4007 = vadd.f32 %v3943, %v3719
          %v4008 = vadd.f32 %v3944, %v3721
          %v4009 = vadd.f32 %v3945, %v3725
          %v4010 = vadd.f32 %v3946, %v3727
          %v4011 = vadd.f32 %v3947, %v3729
          %v4012 = vadd.f32 %v3948, %v3731
          %v4013 = vadd.f32 %v3949, %v3735
          %v4014 = vadd.f32 %v3950, %v3737
          %v4015 = vadd.f32 %v3951, %v3739
          %v4016 = vadd.f32 %v3952, %v3741
          %v4017 = vadd.f32 %v3953, %v3745
          %v4018 = vadd.f32 %v3954, %v3747
          %v4019 = vadd.f32 %v3955, %v3749
          %v4020 = vadd.f32 %v3956, %v3751
          %v4021 = vadd.f32 %v3957, %v3755
          %v4022 = vadd.f32 %v3958, %v3757
          %v4023 = vadd.f32 %v3959, %v3759
          %v4024 = vadd.f32 %v3960, %v3761
          %v4025 = vadd.f32 %v3961, %v3765
          %v4026 = vadd.f32 %v3962, %v3767
          %v4027 = vadd.f32 %v3963, %v3769
          %v4028 = vadd.f32 %v3964, %v3771
          %v4029 = vadd.f32 %v3965, %v3775
          %v4030 = vadd.f32 %v3966, %v3777
          %v4031 = vadd.f32 %v3967, %v3779
          %v4032 = vadd.f32 %v3968, %v3781
          %v4033 = vadd.f32 %v3969, %v3785
          %v4034 = vadd.f32 %v3970, %v3787
          %v4035 = vadd.f32 %v3971, %v3789
          %v4036 = vadd.f32 %v3972, %v3791
          %v4037 = vadd.f32 %v3973, %v3795
          %v4038 = vadd.f32 %v3974, %v3797
          %v4039 = vadd.f32 %v3975, %v3799
          %v4040 = vadd.f32 %v3976, %v3801
          %v4041 = vadd.f32 %v3977, %v3805
          %v4042 = vadd.f32 %v3978, %v3807
          %v4043 = vadd.f32 %v3979, %v3809
          %v4044 = vadd.f32 %v3980, %v3811
          %v4045 = vadd.f32 %v3981, %v3815
          %v4046 = vadd.f32 %v3982, %v3817
          %v4047 = vadd.f32 %v3983, %v3819
          %v4048 = vadd.f32 %v3984, %v3821
          %v4049 = vadd.f32 %v3985, %v3825
          %v4050 = vadd.f32 %v3986, %v3827
          %v4051 = vadd.f32 %v3987, %v3829
          %v4052 = vadd.f32 %v3988, %v3831
          %v4053 = vadd.f32 %v3989, %v3835
          %v4054 = vadd.f32 %v3990, %v3837
          %v4055 = vadd.f32 %v3991, %v3839
          %v4056 = vadd.f32 %v3992, %v3841
          %v4057 = vadd.f32 %v3993, %v3845
          %v4058 = vadd.f32 %v3994, %v3847
          %v4059 = vadd.f32 %v3995, %v3849
          %v4060 = vadd.f32 %v3996, %v3851
          %v4061 = vadd.f32 %v3997, %v3855
          %v4062 = vadd.f32 %v3998, %v3857
          %v4063 = vadd.f32 %v3999, %v3859
          %v4064 = vadd.f32 %v4000, %v3861
          %4065 = vst [vmem:[#allocation2] sm:$0xff] %v4001
          %4066 = vst [vmem:[#allocation2 + $0x8] sm:$0xff] %v4002
          %4067 = vst [vmem:[#allocation2 + $0x10] sm:$0xff] %v4003
          %4068 = vst [vmem:[#allocation2 + $0x18] sm:$0xff] %v4004
          %4069 = vst [vmem:[#allocation2 + $0x20] sm:$0xff] %v4005
          %4070 = vst [vmem:[#allocation2 + $0x28] sm:$0xff] %v4006
          %4071 = vst [vmem:[#allocation2 + $0x30] sm:$0xff] %v4007
          %4072 = vst [vmem:[#allocation2 + $0x38] sm:$0xff] %v4008
          %4073 = vst [vmem:[#allocation2 + $0x40] sm:$0xff] %v4009
          %4074 = vst [vmem:[#allocation2 + $0x48] sm:$0xff] %v4010
          %4075 = vst [vmem:[#allocation2 + $0x50] sm:$0xff] %v4011
          %4076 = vst [vmem:[#allocation2 + $0x58] sm:$0xff] %v4012
          %4077 = vst [vmem:[#allocation2 + $0x60] sm:$0xff] %v4013
          %4078 = vst [vmem:[#allocation2 + $0x68] sm:$0xff] %v4014
          %4079 = vst [vmem:[#allocation2 + $0x70] sm:$0xff] %v4015
          %4080 = vst [vmem:[#allocation2 + $0x78] sm:$0xff] %v4016
          %4081 = vst [vmem:[#allocation2 + $0x80] sm:$0xff] %v4017
          %4082 = vst [vmem:[#allocation2 + $0x88] sm:$0xff] %v4018
          %4083 = vst [vmem:[#allocation2 + $0x90] sm:$0xff] %v4019
          %4084 = vst [vmem:[#allocation2 + $0x98] sm:$0xff] %v4020
          %4085 = vst [vmem:[#allocation2 + $0xa0] sm:$0xff] %v4021
          %4086 = vst [vmem:[#allocation2 + $0xa8] sm:$0xff] %v4022
          %4087 = vst [vmem:[#allocation2 + $0xb0] sm:$0xff] %v4023
          %4088 = vst [vmem:[#allocation2 + $0xb8] sm:$0xff] %v4024
          %4089 = vst [vmem:[#allocation2 + $0xc0] sm:$0xff] %v4025
          %4090 = vst [vmem:[#allocation2 + $0xc8] sm:$0xff] %v4026
          %4091 = vst [vmem:[#allocation2 + $0xd0] sm:$0xff] %v4027
          %4092 = vst [vmem:[#allocation2 + $0xd8] sm:$0xff] %v4028
          %4093 = vst [vmem:[#allocation2 + $0xe0] sm:$0xff] %v4029
          %4094 = vst [vmem:[#allocation2 + $0xe8] sm:$0xff] %v4030
          %4095 = vst [vmem:[#allocation2 + $0xf0] sm:$0xff] %v4031
          %4096 = vst [vmem:[#allocation2 + $0xf8] sm:$0xff] %v4032
          %4097 = vst [vmem:[#allocation2 + $0x100] sm:$0xff] %v4033
          %4098 = vst [vmem:[#allocation2 + $0x108] sm:$0xff] %v4034
          %4099 = vst [vmem:[#allocation2 + $0x110] sm:$0xff] %v4035
          %4100 = vst [vmem:[#allocation2 + $0x118] sm:$0xff] %v4036
          %4101 = vst [vmem:[#allocation2 + $0x120] sm:$0xff] %v4037
          %4102 = vst [vmem:[#allocation2 + $0x128] sm:$0xff] %v4038
          %4103 = vst [vmem:[#allocation2 + $0x130] sm:$0xff] %v4039
          %4104 = vst [vmem:[#allocation2 + $0x138] sm:$0xff] %v4040
          %4105 = vst [vmem:[#allocation2 + $0x140] sm:$0xff] %v4041
          %4106 = vst [vmem:[#allocation2 + $0x148] sm:$0xff] %v4042
          %4107 = vst [vmem:[#allocation2 + $0x150] sm:$0xff] %v4043
          %4108 = vst [vmem:[#allocation2 + $0x158] sm:$0xff] %v4044
          %4109 = vst [vmem:[#allocation2 + $0x160] sm:$0xff] %v4045
          %4110 = vst [vmem:[#allocation2 + $0x168] sm:$0xff] %v4046
          %4111 = vst [vmem:[#allocation2 + $0x170] sm:$0xff] %v4047
          %4112 = vst [vmem:[#allocation2 + $0x178] sm:$0xff] %v4048
          %4113 = vst [vmem:[#allocation2 + $0x180] sm:$0xff] %v4049
          %4114 = vst [vmem:[#allocation2 + $0x188] sm:$0xff] %v4050
          %4115 = vst [vmem:[#allocation2 + $0x190] sm:$0xff] %v4051
          %4116 = vst [vmem:[#allocation2 + $0x198] sm:$0xff] %v4052
          %4117 = vst [vmem:[#allocation2 + $0x1a0] sm:$0xff] %v4053
          %4118 = vst [vmem:[#allocation2 + $0x1a8] sm:$0xff] %v4054
          %4119 = vst [vmem:[#allocation2 + $0x1b0] sm:$0xff] %v4055
          %4120 = vst [vmem:[#allocation2 + $0x1b8] sm:$0xff] %v4056
          %4121 = vst [vmem:[#allocation2 + $0x1c0] sm:$0xff] %v4057
          %4122 = vst [vmem:[#allocation2 + $0x1c8] sm:$0xff] %v4058
          %4123 = vst [vmem:[#allocation2 + $0x1d0] sm:$0xff] %v4059
          %4124 = vst [vmem:[#allocation2 + $0x1d8] sm:$0xff] %v4060
          %4125 = vst [vmem:[#allocation2 + $0x1e0] sm:$0xff] %v4061
          %4126 = vst [vmem:[#allocation2 + $0x1e8] sm:$0xff] %v4062
          %4127 = vst [vmem:[#allocation2 + $0x1f0] sm:$0xff] %v4063
          %4128 = vst [vmem:[#allocation2 + $0x1f8] sm:$0xff] %v4064
        $region48: #{qwen2_mlp.1} parent=31 // pred_fallthru
          _
        %p4129 = scmp.eq.s32.totalorder %s25, 1
        // Predicated region
        $region49: #{qwen2_mlp.1} parent=31 // pred_check
          %p4130 = pneg %p4129
        $region50: #{qwen2_mlp.1} parent=31 // pred_check_branch
          %4132 = sbr.rel (%p4130) target = $region52
        $region51: #{qwen2_mlp.1} parent=31 // pred_region
          %v4133 = vld [vmem:[#allocation2] sm:$0xff]
          %v4134 = vld [vmem:[#allocation2 + $0x8] sm:$0xff]
          %v4135 = vld [vmem:[#allocation2 + $0x10] sm:$0xff]
          %v4136 = vld [vmem:[#allocation2 + $0x18] sm:$0xff]
          %v4137 = vld [vmem:[#allocation2 + $0x20] sm:$0xff]
          %v4138 = vld [vmem:[#allocation2 + $0x28] sm:$0xff]
          %v4139 = vld [vmem:[#allocation2 + $0x30] sm:$0xff]
          %v4140 = vld [vmem:[#allocation2 + $0x38] sm:$0xff]
          %v4141 = vld [vmem:[#allocation2 + $0x40] sm:$0xff]
          %v4142 = vld [vmem:[#allocation2 + $0x48] sm:$0xff]
          %v4143 = vld [vmem:[#allocation2 + $0x50] sm:$0xff]
          %v4144 = vld [vmem:[#allocation2 + $0x58] sm:$0xff]
          %v4145 = vld [vmem:[#allocation2 + $0x60] sm:$0xff]
          %v4146 = vld [vmem:[#allocation2 + $0x68] sm:$0xff]
          %v4147 = vld [vmem:[#allocation2 + $0x70] sm:$0xff]
          %v4148 = vld [vmem:[#allocation2 + $0x78] sm:$0xff]
          %v4149 = vld [vmem:[#allocation2 + $0x80] sm:$0xff]
          %v4150 = vld [vmem:[#allocation2 + $0x88] sm:$0xff]
          %v4151 = vld [vmem:[#allocation2 + $0x90] sm:$0xff]
          %v4152 = vld [vmem:[#allocation2 + $0x98] sm:$0xff]
          %v4153 = vld [vmem:[#allocation2 + $0xa0] sm:$0xff]
          %v4154 = vld [vmem:[#allocation2 + $0xa8] sm:$0xff]
          %v4155 = vld [vmem:[#allocation2 + $0xb0] sm:$0xff]
          %v4156 = vld [vmem:[#allocation2 + $0xb8] sm:$0xff]
          %v4157 = vld [vmem:[#allocation2 + $0xc0] sm:$0xff]
          %v4158 = vld [vmem:[#allocation2 + $0xc8] sm:$0xff]
          %v4159 = vld [vmem:[#allocation2 + $0xd0] sm:$0xff]
          %v4160 = vld [vmem:[#allocation2 + $0xd8] sm:$0xff]
          %v4161 = vld [vmem:[#allocation2 + $0xe0] sm:$0xff]
          %v4162 = vld [vmem:[#allocation2 + $0xe8] sm:$0xff]
          %v4163 = vld [vmem:[#allocation2 + $0xf0] sm:$0xff]
          %v4164 = vld [vmem:[#allocation2 + $0xf8] sm:$0xff]
          %v4165 = vld [vmem:[#allocation2 + $0x100] sm:$0xff]
          %v4166 = vld [vmem:[#allocation2 + $0x108] sm:$0xff]
          %v4167 = vld [vmem:[#allocation2 + $0x110] sm:$0xff]
          %v4168 = vld [vmem:[#allocation2 + $0x118] sm:$0xff]
          %v4169 = vld [vmem:[#allocation2 + $0x120] sm:$0xff]
          %v4170 = vld [vmem:[#allocation2 + $0x128] sm:$0xff]
          %v4171 = vld [vmem:[#allocation2 + $0x130] sm:$0xff]
          %v4172 = vld [vmem:[#allocation2 + $0x138] sm:$0xff]
          %v4173 = vld [vmem:[#allocation2 + $0x140] sm:$0xff]
          %v4174 = vld [vmem:[#allocation2 + $0x148] sm:$0xff]
          %v4175 = vld [vmem:[#allocation2 + $0x150] sm:$0xff]
          %v4176 = vld [vmem:[#allocation2 + $0x158] sm:$0xff]
          %v4177 = vld [vmem:[#allocation2 + $0x160] sm:$0xff]
          %v4178 = vld [vmem:[#allocation2 + $0x168] sm:$0xff]
          %v4179 = vld [vmem:[#allocation2 + $0x170] sm:$0xff]
          %v4180 = vld [vmem:[#allocation2 + $0x178] sm:$0xff]
          %v4181 = vld [vmem:[#allocation2 + $0x180] sm:$0xff]
          %v4182 = vld [vmem:[#allocation2 + $0x188] sm:$0xff]
          %v4183 = vld [vmem:[#allocation2 + $0x190] sm:$0xff]
          %v4184 = vld [vmem:[#allocation2 + $0x198] sm:$0xff]
          %v4185 = vld [vmem:[#allocation2 + $0x1a0] sm:$0xff]
          %v4186 = vld [vmem:[#allocation2 + $0x1a8] sm:$0xff]
          %v4187 = vld [vmem:[#allocation2 + $0x1b0] sm:$0xff]
          %v4188 = vld [vmem:[#allocation2 + $0x1b8] sm:$0xff]
          %v4189 = vld [vmem:[#allocation2 + $0x1c0] sm:$0xff]
          %v4190 = vld [vmem:[#allocation2 + $0x1c8] sm:$0xff]
          %v4191 = vld [vmem:[#allocation2 + $0x1d0] sm:$0xff]
          %v4192 = vld [vmem:[#allocation2 + $0x1d8] sm:$0xff]
          %v4193 = vld [vmem:[#allocation2 + $0x1e0] sm:$0xff]
          %v4194 = vld [vmem:[#allocation2 + $0x1e8] sm:$0xff]
          %v4195 = vld [vmem:[#allocation2 + $0x1f0] sm:$0xff]
          %v4196 = vld [vmem:[#allocation2 + $0x1f8] sm:$0xff]
          %v4197 = vadd.f32 %v4133, %v3705
          %v4198 = vadd.f32 %v4134, %v3707
          %v4199 = vadd.f32 %v4135, %v3709
          %v4200 = vadd.f32 %v4136, %v3711
          %v4201 = vadd.f32 %v4137, %v3715
          %v4202 = vadd.f32 %v4138, %v3717
          %v4203 = vadd.f32 %v4139, %v3719
          %v4204 = vadd.f32 %v4140, %v3721
          %v4205 = vadd.f32 %v4141, %v3725
          %v4206 = vadd.f32 %v4142, %v3727
          %v4207 = vadd.f32 %v4143, %v3729
          %v4208 = vadd.f32 %v4144, %v3731
          %v4209 = vadd.f32 %v4145, %v3735
          %v4210 = vadd.f32 %v4146, %v3737
          %v4211 = vadd.f32 %v4147, %v3739
          %v4212 = vadd.f32 %v4148, %v3741
          %v4213 = vadd.f32 %v4149, %v3745
          %v4214 = vadd.f32 %v4150, %v3747
          %v4215 = vadd.f32 %v4151, %v3749
          %v4216 = vadd.f32 %v4152, %v3751
          %v4217 = vadd.f32 %v4153, %v3755
          %v4218 = vadd.f32 %v4154, %v3757
          %v4219 = vadd.f32 %v4155, %v3759
          %v4220 = vadd.f32 %v4156, %v3761
          %v4221 = vadd.f32 %v4157, %v3765
          %v4222 = vadd.f32 %v4158, %v3767
          %v4223 = vadd.f32 %v4159, %v3769
          %v4224 = vadd.f32 %v4160, %v3771
          %v4225 = vadd.f32 %v4161, %v3775
          %v4226 = vadd.f32 %v4162, %v3777
          %v4227 = vadd.f32 %v4163, %v3779
          %v4228 = vadd.f32 %v4164, %v3781
          %v4229 = vadd.f32 %v4165, %v3785
          %v4230 = vadd.f32 %v4166, %v3787
          %v4231 = vadd.f32 %v4167, %v3789
          %v4232 = vadd.f32 %v4168, %v3791
          %v4233 = vadd.f32 %v4169, %v3795
          %v4234 = vadd.f32 %v4170, %v3797
          %v4235 = vadd.f32 %v4171, %v3799
          %v4236 = vadd.f32 %v4172, %v3801
          %v4237 = vadd.f32 %v4173, %v3805
          %v4238 = vadd.f32 %v4174, %v3807
          %v4239 = vadd.f32 %v4175, %v3809
          %v4240 = vadd.f32 %v4176, %v3811
          %v4241 = vadd.f32 %v4177, %v3815
          %v4242 = vadd.f32 %v4178, %v3817
          %v4243 = vadd.f32 %v4179, %v3819
          %v4244 = vadd.f32 %v4180, %v3821
          %v4245 = vadd.f32 %v4181, %v3825
          %v4246 = vadd.f32 %v4182, %v3827
          %v4247 = vadd.f32 %v4183, %v3829
          %v4248 = vadd.f32 %v4184, %v3831
          %v4249 = vadd.f32 %v4185, %v3835
          %v4250 = vadd.f32 %v4186, %v3837
          %v4251 = vadd.f32 %v4187, %v3839
          %v4252 = vadd.f32 %v4188, %v3841
          %v4253 = vadd.f32 %v4189, %v3845
          %v4254 = vadd.f32 %v4190, %v3847
          %v4255 = vadd.f32 %v4191, %v3849
          %v4256 = vadd.f32 %v4192, %v3851
          %v4257 = vadd.f32 %v4193, %v3855
          %v4258 = vadd.f32 %v4194, %v3857
          %v4259 = vadd.f32 %v4195, %v3859
          %v4260 = vadd.f32 %v4196, %v3861
          %v4261 = vpack.c.bf16 %v4199, %v4197
          %v4262 = vpack.c.bf16 %v4200, %v4198
          %v4263 = vpack.c.bf16 %v4203, %v4201
          %v4264 = vpack.c.bf16 %v4204, %v4202
          %v4265 = vpack.c.bf16 %v4207, %v4205
          %v4266 = vpack.c.bf16 %v4208, %v4206
          %v4267 = vpack.c.bf16 %v4211, %v4209
          %v4268 = vpack.c.bf16 %v4212, %v4210
          %v4269 = vpack.c.bf16 %v4215, %v4213
          %v4270 = vpack.c.bf16 %v4216, %v4214
          %v4271 = vpack.c.bf16 %v4219, %v4217
          %v4272 = vpack.c.bf16 %v4220, %v4218
          %v4273 = vpack.c.bf16 %v4223, %v4221
          %v4274 = vpack.c.bf16 %v4224, %v4222
          %v4275 = vpack.c.bf16 %v4227, %v4225
          %v4276 = vpack.c.bf16 %v4228, %v4226
          %v4277 = vpack.c.bf16 %v4231, %v4229
          %v4278 = vpack.c.bf16 %v4232, %v4230
          %v4279 = vpack.c.bf16 %v4235, %v4233
          %v4280 = vpack.c.bf16 %v4236, %v4234
          %v4281 = vpack.c.bf16 %v4239, %v4237
          %v4282 = vpack.c.bf16 %v4240, %v4238
          %v4283 = vpack.c.bf16 %v4243, %v4241
          %v4284 = vpack.c.bf16 %v4244, %v4242
          %v4285 = vpack.c.bf16 %v4247, %v4245
          %v4286 = vpack.c.bf16 %v4248, %v4246
          %v4287 = vpack.c.bf16 %v4251, %v4249
          %v4288 = vpack.c.bf16 %v4252, %v4250
          %v4289 = vpack.c.bf16 %v4255, %v4253
          %v4290 = vpack.c.bf16 %v4256, %v4254
          %v4291 = vpack.c.bf16 %v4259, %v4257
          %v4292 = vpack.c.bf16 %v4260, %v4258
          %v4325 = vunpack.c.l.b16 %v4261
          %v4326 = vunpack.c.l.b16 %v4262
          %v4327 = vunpack.c.h.b16 %v4261
          %v4328 = vunpack.c.h.b16 %v4262
          %v4329 = vunpack.c.l.b16 %v4263
          %v4330 = vunpack.c.l.b16 %v4264
          %v4331 = vunpack.c.h.b16 %v4263
          %v4332 = vunpack.c.h.b16 %v4264
          %v4333 = vunpack.c.l.b16 %v4265
          %v4334 = vunpack.c.l.b16 %v4266
          %v4335 = vunpack.c.h.b16 %v4265
          %v4336 = vunpack.c.h.b16 %v4266
          %v4337 = vunpack.c.l.b16 %v4267
          %v4338 = vunpack.c.l.b16 %v4268
          %v4339 = vunpack.c.h.b16 %v4267
          %v4340 = vunpack.c.h.b16 %v4268
          %v4341 = vunpack.c.l.b16 %v4269
          %v4342 = vunpack.c.l.b16 %v4270
          %v4343 = vunpack.c.h.b16 %v4269
          %v4344 = vunpack.c.h.b16 %v4270
          %v4345 = vunpack.c.l.b16 %v4271
          %v4346 = vunpack.c.l.b16 %v4272
          %v4347 = vunpack.c.h.b16 %v4271
          %v4348 = vunpack.c.h.b16 %v4272
          %v4349 = vunpack.c.l.b16 %v4273
          %v4350 = vunpack.c.l.b16 %v4274
          %v4351 = vunpack.c.h.b16 %v4273
          %v4352 = vunpack.c.h.b16 %v4274
          %v4353 = vunpack.c.l.b16 %v4275
          %v4354 = vunpack.c.l.b16 %v4276
          %v4355 = vunpack.c.h.b16 %v4275
          %v4356 = vunpack.c.h.b16 %v4276
          %v4357 = vunpack.c.l.b16 %v4277
          %v4358 = vunpack.c.l.b16 %v4278
          %v4359 = vunpack.c.h.b16 %v4277
          %v4360 = vunpack.c.h.b16 %v4278
          %v4361 = vunpack.c.l.b16 %v4279
          %v4362 = vunpack.c.l.b16 %v4280
          %v4363 = vunpack.c.h.b16 %v4279
          %v4364 = vunpack.c.h.b16 %v4280
          %v4365 = vunpack.c.l.b16 %v4281
          %v4366 = vunpack.c.l.b16 %v4282
          %v4367 = vunpack.c.h.b16 %v4281
          %v4368 = vunpack.c.h.b16 %v4282
          %v4369 = vunpack.c.l.b16 %v4283
          %v4370 = vunpack.c.l.b16 %v4284
          %v4371 = vunpack.c.h.b16 %v4283
          %v4372 = vunpack.c.h.b16 %v4284
          %v4373 = vunpack.c.l.b16 %v4285
          %v4374 = vunpack.c.l.b16 %v4286
          %v4375 = vunpack.c.h.b16 %v4285
          %v4376 = vunpack.c.h.b16 %v4286
          %v4377 = vunpack.c.l.b16 %v4287
          %v4378 = vunpack.c.l.b16 %v4288
          %v4379 = vunpack.c.h.b16 %v4287
          %v4380 = vunpack.c.h.b16 %v4288
          %v4381 = vunpack.c.l.b16 %v4289
          %v4382 = vunpack.c.l.b16 %v4290
          %v4383 = vunpack.c.h.b16 %v4289
          %v4384 = vunpack.c.h.b16 %v4290
          %v4385 = vunpack.c.l.b16 %v4291
          %v4386 = vunpack.c.l.b16 %v4292
          %v4387 = vunpack.c.h.b16 %v4291
          %v4388 = vunpack.c.h.b16 %v4292
          %v4389 = vpack.c.b16 %v4326, %v4325
          %v4390 = vpack.c.b16 %v4328, %v4327
          %v4391 = vpack.c.b16 %v4330, %v4329
          %v4392 = vpack.c.b16 %v4332, %v4331
          %v4393 = vpack.c.b16 %v4334, %v4333
          %v4394 = vpack.c.b16 %v4336, %v4335
          %v4395 = vpack.c.b16 %v4338, %v4337
          %v4396 = vpack.c.b16 %v4340, %v4339
          %v4397 = vpack.c.b16 %v4342, %v4341
          %v4398 = vpack.c.b16 %v4344, %v4343
          %v4399 = vpack.c.b16 %v4346, %v4345
          %v4400 = vpack.c.b16 %v4348, %v4347
          %v4401 = vpack.c.b16 %v4350, %v4349
          %v4402 = vpack.c.b16 %v4352, %v4351
          %v4403 = vpack.c.b16 %v4354, %v4353
          %v4404 = vpack.c.b16 %v4356, %v4355
          %v4405 = vpack.c.b16 %v4358, %v4357
          %v4406 = vpack.c.b16 %v4360, %v4359
          %v4407 = vpack.c.b16 %v4362, %v4361
          %v4408 = vpack.c.b16 %v4364, %v4363
          %v4409 = vpack.c.b16 %v4366, %v4365
          %v4410 = vpack.c.b16 %v4368, %v4367
          %v4411 = vpack.c.b16 %v4370, %v4369
          %v4412 = vpack.c.b16 %v4372, %v4371
          %v4413 = vpack.c.b16 %v4374, %v4373
          %v4414 = vpack.c.b16 %v4376, %v4375
          %v4415 = vpack.c.b16 %v4378, %v4377
          %v4416 = vpack.c.b16 %v4380, %v4379
          %v4417 = vpack.c.b16 %v4382, %v4381
          %v4418 = vpack.c.b16 %v4384, %v4383
          %v4419 = vpack.c.b16 %v4386, %v4385
          %v4420 = vpack.c.b16 %v4388, %v4387
          %4453 = vst [vmem:[%s271] sm:$0xff] %v4389
          %4454 = vst [vmem:[%s271 + $0x8] sm:$0xff] %v4390
          %4455 = vst [vmem:[%s271 + $0x10] sm:$0xff] %v4391
          %4456 = vst [vmem:[%s271 + $0x18] sm:$0xff] %v4392
          %4457 = vst [vmem:[%s271 + $0x20] sm:$0xff] %v4393
          %4458 = vst [vmem:[%s271 + $0x28] sm:$0xff] %v4394
          %4459 = vst [vmem:[%s271 + $0x30] sm:$0xff] %v4395
          %4460 = vst [vmem:[%s271 + $0x38] sm:$0xff] %v4396
          %4461 = vst [vmem:[%s271 + $0x40] sm:$0xff] %v4397
          %4462 = vst [vmem:[%s271 + $0x48] sm:$0xff] %v4398
          %4463 = vst [vmem:[%s271 + $0x50] sm:$0xff] %v4399
          %4464 = vst [vmem:[%s271 + $0x58] sm:$0xff] %v4400
          %4465 = vst [vmem:[%s271 + $0x60] sm:$0xff] %v4401
          %4466 = vst [vmem:[%s271 + $0x68] sm:$0xff] %v4402
          %4467 = vst [vmem:[%s271 + $0x70] sm:$0xff] %v4403
          %4468 = vst [vmem:[%s271 + $0x78] sm:$0xff] %v4404
          %4469 = vst [vmem:[%s271 + $0x80] sm:$0xff] %v4405
          %4470 = vst [vmem:[%s271 + $0x88] sm:$0xff] %v4406
          %4471 = vst [vmem:[%s271 + $0x90] sm:$0xff] %v4407
          %4472 = vst [vmem:[%s271 + $0x98] sm:$0xff] %v4408
          %4473 = vst [vmem:[%s271 + $0xa0] sm:$0xff] %v4409
          %4474 = vst [vmem:[%s271 + $0xa8] sm:$0xff] %v4410
          %4475 = vst [vmem:[%s271 + $0xb0] sm:$0xff] %v4411
          %4476 = vst [vmem:[%s271 + $0xb8] sm:$0xff] %v4412
          %4477 = vst [vmem:[%s271 + $0xc0] sm:$0xff] %v4413
          %4478 = vst [vmem:[%s271 + $0xc8] sm:$0xff] %v4414
          %4479 = vst [vmem:[%s271 + $0xd0] sm:$0xff] %v4415
          %4480 = vst [vmem:[%s271 + $0xd8] sm:$0xff] %v4416
          %4481 = vst [vmem:[%s271 + $0xe0] sm:$0xff] %v4417
          %4482 = vst [vmem:[%s271 + $0xe8] sm:$0xff] %v4418
          %4483 = vst [vmem:[%s271 + $0xf0] sm:$0xff] %v4419
          %4484 = vst [vmem:[%s271 + $0xf8] sm:$0xff] %v4420
        $region52: #{qwen2_mlp.1} parent=31 // pred_fallthru
          _
        %s4485 = smul.u32 32, %s24
        %p4486 = scmp.lt.s32.totalorder %s4485, 31
        %s4487 = scalar_select %p4486, %s4485, 31
        %s4488 = smul.addr %s4487, 2
        %s4489 = smul.addr %s4488, 4
        %s4490 = scalar_lea.vmem %s3, %s4489
        // Predicated region
        $region53: #{qwen2_mlp.1} parent=31 // pred_check
          %p4491 = pneg %p128
        $region54: #{qwen2_mlp.1} parent=31 // pred_check_branch
          %4493 = sbr.rel (%p4491) target = $region56
        $region55: #{qwen2_mlp.1} parent=31 // pred_region
          %s4494 = smul.u32 32, %s24
        $region56: #{qwen2_mlp.1} parent=31 // pred_fallthru
          _
        // Predicated region
        $region57: #{qwen2_mlp.1} parent=31 // pred_check
          %p4495 = pneg %p128
        $region58: #{qwen2_mlp.1} parent=31 // pred_check_branch
          %4497 = sbr.rel (%p4495) target = $region60
        $region59: #{qwen2_mlp.1} parent=31 // pred_region
          %s4498 = smul.u32 32, %s24
          %p4499 = scmp.lt.s32.totalorder %s4498, 31
          %s4500 = scalar_select %p4499, %s4498, 31
          %s4501 = smul.addr %s4500, 2
          %s4502 = smul.addr %s4501, 4
          %s4503 = scalar_lea.vmem %s3, %s4502
        $region60: #{qwen2_mlp.1} parent=31 // pred_fallthru
          _
      $region32: #{qwen2_mlp.1} parent=5 // pred_fallthru
        _
      %p4504 = scmp.le.s32.totalorder 2, %s15
      // Predicated region
      $region61: #{qwen2_mlp.1} parent=5 // pred_check
        %p4505 = pneg %p4504
      $region62: #{qwen2_mlp.1} parent=5 // pred_check_branch
        %4507 = sbr.rel (%p4505) target = $region64
      $region63: #{qwen2_mlp.1} parent=5 // pred_region
        %s4508 = ssub.s32 %s15, 2
      $region64: #{qwen2_mlp.1} parent=5 // pred_fallthru
        _
    $region6: #{qwen2_mlp.1} parent=1 // loop_footer
      %s19 = sadd.s32 1, %s15
    $region7: #{qwen2_mlp.1} parent=1 // loop_footer_branch
      %14 = sbr.rel target = $region3
    $region8: #{qwen2_mlp.1} parent=1 // loop_exit
      _
    %4509 = vsyncpa [#allocation4], 1
    %s4510 = scalar_lea.sflag [#allocation4], 1
    %4511 = vsyncpa %s4510, 1
    %4512 = vsyncpa [#allocation6], 1
    %s4513 = scalar_lea.sflag [#allocation6], 1
    %4514 = vsyncpa %s4513, 1

</llo_original>
